<compile_context>
chip_gen: v5e
topology: v5e:2x2
jax: 0.10.0
libtpu: 0.0.40
codegen_flags: <defaults>
</compile_context>

<pallas_src>
import functools

import jax
import jax.numpy as jnp
from jax.experimental import pallas as pl
from jax.experimental.pallas import tpu as pltpu

LRELU_SLOPE = 0.2
BN_EPS = 1e-5


# ----------------------------------------------------------------------------
# Small helpers
# ----------------------------------------------------------------------------
def _round_up(x, m):
    return ((x + m - 1) // m) * m


def _pick_m_tile(m):
    """Largest M tile (<=512) keeping >=2 grid steps when M is big enough.

    Always a multiple of 16 so bf16 output tiles stay sublane-pack aligned.
    """
    if m >= 1024:
        return 512
    if m >= 512:
        return 256
    return _round_up(m, 16)         # single tile, bf16-sublane aligned


def _pick_k_tile(kp, cap=2048):
    """Largest multiple of 128 <= cap that divides Kp (Kp is always 128-aligned)."""
    if kp <= cap:
        return kp
    tk = cap - (cap % 128)
    while tk >= 128:
        if kp % tk == 0:
            return tk
        tk -= 128
    return 128


# ----------------------------------------------------------------------------
# Pallas kernels
# ----------------------------------------------------------------------------
def _conv_kernel(p_ref, w_ref, *rest, emit_stats):
    """One (M-tile, K-tile) step of patches @ weight with f32 accumulation.

    Epilogue at the last K step:
      emit_stats=False : fused LeakyReLU, write bf16 activation tile.
      emit_stats=True  : write bf16 activation tile + per-tile per-channel
                         (sum, sum_sq) partial BatchNorm statistics (from the
                         f32 accumulator, so stats keep full precision).
    """
    if emit_stats:
        y_ref, stats_ref, acc_ref = rest
    else:
        y_ref, acc_ref = rest

    @pl.when(pl.program_id(1) == 0)
    def _():
        acc_ref[...] = jnp.zeros_like(acc_ref)

    acc_ref[...] += jnp.dot(p_ref[...], w_ref[...],
                            preferred_element_type=jnp.float32)

    @pl.when(pl.program_id(1) == pl.num_programs(1) - 1)
    def _():
        y = acc_ref[...]
        if emit_stats:
            y_ref[...] = y.astype(y_ref.dtype)
            s = jnp.sum(y, axis=0, keepdims=True)
            sq = jnp.sum(y * y, axis=0, keepdims=True)
            stats_ref[...] = jnp.concatenate([s, sq], axis=0)[None, :, :]
        else:
            y = jnp.where(y >= 0.0, y, LRELU_SLOPE * y)
            y_ref[...] = y.astype(y_ref.dtype)


def _bn_lrelu_kernel(y_ref, s_ref, b_ref, o_ref):
    """Elementwise y * scale + shift (folded BatchNorm) + LeakyReLU, bf16 out."""
    yn = y_ref[...].astype(jnp.float32) * s_ref[...] + b_ref[...]
    o_ref[...] = jnp.where(yn >= 0.0, yn, LRELU_SLOPE * yn).astype(o_ref.dtype)


def _final_conv_kernel(p_ref, w_ref, b_ref, o_ref):
    """Final Cout=1 conv as a VPU reduction: sum(p * w_row, axis=-1) + bias."""
    p = p_ref[...].astype(jnp.float32)
    o_ref[...] = jnp.sum(p * w_ref[...], axis=-1, keepdims=True) + b_ref[...]


# ----------------------------------------------------------------------------
# pallas_call wrappers
# ----------------------------------------------------------------------------
def conv_block(p, w_pad, *, emit_stats):
    """p: (M, K) float; w_pad: (Kp, Cp) bf16 with Kp, Cp multiples of 128.

    Returns (y_pad, partial_stats_or_None, tm).
      y_pad : (Mp, Cp) bf16 (LeakyReLU fused when emit_stats=False)
      partial_stats : (Mp//tm, 2, Cp) f32 per-M-tile (sum, sum_sq) per channel
    """
    M, K = p.shape
    Kp, Cp = w_pad.shape
    if Kp != K:
        p = jnp.pad(p, ((0, 0), (0, Kp - K)))
    tm = _pick_m_tile(M)
    Mp = _round_up(M, tm)
    if Mp != M:
        p = jnp.pad(p, ((0, Mp - M), (0, 0)))
    p = p.astype(jnp.bfloat16)

    tk = _pick_k_tile(Kp)
    n_m, n_k = Mp // tm, Kp // tk

    out_shape = [jax.ShapeDtypeStruct((Mp, Cp), jnp.bfloat16)]
    out_specs = [pl.BlockSpec((tm, Cp), lambda i, k: (i, 0))]
    if emit_stats:
        out_shape.append(jax.ShapeDtypeStruct((n_m, 2, Cp), jnp.float32))
        out_specs.append(pl.BlockSpec((1, 2, Cp), lambda i, k: (i, 0, 0)))

    kernel = functools.partial(_conv_kernel, emit_stats=emit_stats)
    res = pl.pallas_call(
        kernel,
        grid=(n_m, n_k),
        in_specs=[pl.BlockSpec((tm, tk), lambda i, k: (i, k)),
                  pl.BlockSpec((tk, Cp), lambda i, k: (k, 0))],
        out_specs=out_specs if emit_stats else out_specs[0],
        out_shape=out_shape if emit_stats else out_shape[0],
        scratch_shapes=[pltpu.VMEM((tm, Cp), jnp.float32)],
        compiler_params=pltpu.CompilerParams(
            dimension_semantics=("parallel", "arbitrary")),
    )(p, w_pad)

    if emit_stats:
        y_pad, stats = res
        return y_pad, stats, tm
    return res, None, tm


def bn_lrelu_apply(y_pad, scale, shift, tm, out_dtype=jnp.bfloat16):
    """y_pad: (Mp, Cp) bf16; scale/shift: (Cp,) f32 folded BN params."""
    Mp, Cp = y_pad.shape
    return pl.pallas_call(
        _bn_lrelu_kernel,
        grid=(Mp // tm,),
        in_specs=[pl.BlockSpec((tm, Cp), lambda i: (i, 0)),
                  pl.BlockSpec((1, Cp), lambda i: (0, 0)),
                  pl.BlockSpec((1, Cp), lambda i: (0, 0))],
        out_specs=pl.BlockSpec((tm, Cp), lambda i: (i, 0)),
        out_shape=jax.ShapeDtypeStruct((Mp, Cp), out_dtype),
        compiler_params=pltpu.CompilerParams(dimension_semantics=("parallel",)),
    )(y_pad, scale.reshape(1, Cp), shift.reshape(1, Cp))


def final_conv(p, w_row, bias):
    """p: (N, Kp) bf16; w_row: (1, Kp) f32; bias: (1, 1) f32 -> (N, 1) f32."""
    N = p.shape[0]
    # Tiny problem (one patch per image); single program is fine.
    return pl.pallas_call(
        _final_conv_kernel,
        out_shape=jax.ShapeDtypeStruct((N, 1), jnp.float32),
    )(p, w_row, bias)


# ----------------------------------------------------------------------------
# Glue: channels-last im2col (contiguous strided slices, stays in plain JAX)
# ----------------------------------------------------------------------------
def im2col_nhwc(x, k, stride, pad):
    """x: (N, H, W, C) -> patches (N*Ho*Wo, k*k*C), feature order (kh, kw, C)."""
    N, H, W, C = x.shape
    xp = jnp.pad(x, ((0, 0), (pad, pad), (pad, pad), (0, 0)))
    Ho = (H + 2 * pad - k) // stride + 1
    Wo = (W + 2 * pad - k) // stride + 1
    cols = []
    for di in range(k):
        for dj in range(k):
            cols.append(jax.lax.slice(
                xp,
                (0, di, dj, 0),
                (N, di + (Ho - 1) * stride + 1, dj + (Wo - 1) * stride + 1, C),
                (1, stride, stride, 1)))
    patches = jnp.stack(cols, axis=3)                 # (N, Ho, Wo, k*k, C)
    return patches.reshape(N * Ho * Wo, k * k * C), Ho, Wo


def _torch_conv_w_to_padded_mat(w):
    """(Cout, Cin, kh, kw) -> (Kp, Cp) bf16 in (kh, kw, Cin) feature order."""
    cout, cin, kh, kw = w.shape
    wm = jnp.transpose(w, (2, 3, 1, 0)).reshape(kh * kw * cin, cout)
    kp = _round_up(kh * kw * cin, 128)
    cp = _round_up(cout, 128)
    wm = jnp.pad(wm, ((0, kp - wm.shape[0]), (0, cp - cout)))
    return wm.astype(jnp.bfloat16)


# ----------------------------------------------------------------------------
# Full forward pass of Discriminator_1
# ----------------------------------------------------------------------------
def discriminator_forward(x, params, *, ndf):
    """x: (N, nc, 64, 64) f32 NCHW -> (N,) f32  (matches .view(-1,1).squeeze(1))."""
    N = x.shape[0]
    h = jnp.transpose(x, (0, 2, 3, 1))                 # NCHW -> NHWC, once
    couts = (ndf, ndf * 2, ndf * 4, ndf * 8)

    # --- conv1 (no bias) + LeakyReLU, fused in the matmul epilogue ----------
    p, Ho, Wo = im2col_nhwc(h, 4, 2, 1)
    M = N * Ho * Wo
    y_pad, _, _ = conv_block(p, params["w1"], emit_stats=False)
    h = y_pad[:M, :couts[0]].reshape(N, Ho, Wo, couts[0])

    # --- conv2..4 (no bias) + BatchNorm(batch stats) + LeakyReLU ------------
    for li, i in enumerate((2, 3, 4)):
        cout = couts[li + 1]
        p, Ho, Wo = im2col_nhwc(h, 4, 2, 1)
        M = N * Ho * Wo
        y_pad, partial_stats, tm = conv_block(p, params[f"w{i}"], emit_stats=True)
        Cp = y_pad.shape[1]

        # Tiny per-channel reduction + BN fold (O(C) work, plain JAX glue).
        stats = jnp.sum(partial_stats, axis=0)         # (2, Cp)
        mean = stats[0] / M                            # padded rows are zero
        var = stats[1] / M - mean * mean               # biased, like torch BN
        inv = jax.lax.rsqrt(var + BN_EPS)
        g = jnp.pad(params[f"g{i}"], (0, Cp - cout), constant_values=1.0)
        b = jnp.pad(params[f"b{i}"], (0, Cp - cout))
        scale = g * inv
        shift = b - mean * scale

        o_pad = bn_lrelu_apply(y_pad, scale, shift, tm)
        h = o_pad[:M, :cout].reshape(N, Ho, Wo, cout)

    # --- conv5 (ndf*8 -> 1, k4 s1 p0, with bias) ----------------------------
    p, Ho, Wo = im2col_nhwc(h, 4, 1, 0)                # (N, 16*ndf*8)
    Kp5 = params["w5"].shape[1]
    if Kp5 != p.shape[1]:
        p = jnp.pad(p, ((0, 0), (0, Kp5 - p.shape[1])))
    y = final_conv(p.astype(jnp.bfloat16), params["w5"], params["bias5"])
    return y.reshape(-1)                               # view(-1,1).squeeze(1)


# ----------------------------------------------------------------------------
# Pure-JAX f32 reference (same math, no Pallas) for a loose sanity check
# ----------------------------------------------------------------------------
def reference_forward(x, params, *, ndf):
    N = x.shape[0]
    h = jnp.transpose(x, (0, 2, 3, 1)).astype(jnp.float32)
    couts = (ndf, ndf * 2, ndf * 4, ndf * 8)

    p, Ho, Wo = im2col_nhwc(h, 4, 2, 1)
    w = params["w1"].astype(jnp.float32)
    y = jnp.pad(p, ((0, 0), (0, w.shape[0] - p.shape[1]))) @ w
    y = jnp.where(y >= 0, y, LRELU_SLOPE * y)
    h = y[:, :couts[0]].reshape(N, Ho, Wo, couts[0])

    for li, i in enumerate((2, 3, 4)):
        cout = couts[li + 1]
        p, Ho, Wo = im2col_nhwc(h, 4, 2, 1)
        w = params[f"w{i}"].astype(jnp.float32)
        y = (jnp.pad(p, ((0, 0), (0, w.shape[0] - p.shape[1]))) @ w)[:, :cout]
        mean = jnp.mean(y, axis=0)
        var = jnp.mean((y - mean) ** 2, axis=0)
        yn = (y - mean) * jax.lax.rsqrt(var + BN_EPS) * params[f"g{i}"] + params[f"b{i}"]
        yn = jnp.where(yn >= 0, yn, LRELU_SLOPE * yn)
        h = yn.reshape(N, Ho, Wo, cout)

    p, Ho, Wo = im2col_nhwc(h, 4, 1, 0)
    w5 = params["w5"].astype(jnp.float32)
    p = jnp.pad(p, ((0, 0), (0, w5.shape[1] - p.shape[1])))
    return (p @ w5.T + params["bias5"]).reshape(-1)


# ----------------------------------------------------------------------------
# Param init (DCGAN-style N(0, 0.02) conv weights, default-init BatchNorm)
# ----------------------------------------------------------------------------
def init_params(key, nc, ndf):
    ks = jax.random.split(key, 6)
    shapes = [("w1", (ndf, nc, 4, 4)),
              ("w2", (ndf * 2, ndf, 4, 4)),
              ("w3", (ndf * 4, ndf * 2, 4, 4)),
              ("w4", (ndf * 8, ndf * 4, 4, 4))]
    params = {}
    for idx, (name, shp) in enumerate(shapes):
        w = 0.02 * jax.random.normal(ks[idx], shp, dtype=jnp.float32)
        params[name] = _torch_conv_w_to_padded_mat(w)
    # conv5 weight stored as a (1, Kp) f32 row for the VPU-reduction kernel.
    w5 = 0.02 * jax.random.normal(ks[4], (1, ndf * 8, 4, 4), dtype=jnp.float32)
    w5m = jnp.transpose(w5, (2, 3, 1, 0)).reshape(16 * ndf * 8, 1)
    kp5 = _round_up(w5m.shape[0], 128)
    w5m = jnp.pad(w5m, ((0, kp5 - w5m.shape[0]), (0, 0)))
    params["w5"] = jnp.transpose(w5m, (1, 0))
    params["bias5"] = (0.02 * jax.random.normal(ks[5], (1,),
                                                dtype=jnp.float32)).reshape(1, 1)
    # BatchNorm2d affine params (PyTorch default: weight=1, bias=0)
    for i, c in ((2, ndf * 2), (3, ndf * 4), (4, ndf * 8)):
        params[f"g{i}"] = jnp.ones((c,), jnp.float32)
        params[f"b{i}"] = jnp.zeros((c,), jnp.float32)
    return params


if __name__ == "__main__":
    # Spatial must be 64 so the final k=4/s=1/p=0 conv reduces 4x4 -> 1x1,
    # exactly as in the original module.  Small channel counts for the test.
    N, NC, NDF = 2, 3, 8
    key = jax.random.PRNGKey(0)
    kx, kp = jax.random.split(key)
    x = jax.random.normal(kx, (N, NC, 64, 64), dtype=jnp.float32)
    params = init_params(kp, NC, NDF)

    fwd = jax.jit(functools.partial(discriminator_forward, ndf=NDF))
    out = jax.block_until_ready(fwd(x, params))

    assert out.shape == (N,), out.shape
    assert bool(jnp.all(jnp.isfinite(out)))

    # Loose sanity check vs. a plain-f32 JAX reference (kernel path uses bf16
    # matmul inputs/activations, so tolerance is intentionally generous).
    ref = jax.block_until_ready(
        jax.jit(functools.partial(reference_forward, ndf=NDF))(x, params))
    max_err = float(jnp.max(jnp.abs(out - ref)))
    assert max_err < 0.25, f"max abs err vs reference: {max_err}"

    print("KERNEL_OK")
</pallas_src>

<mosaic_0001>
module attributes {stable_mosaic.version = 11 : i64} {
  func.func @_conv_kernel(%arg0: i32, %arg1: i32, %arg2: memref<512x128xbf16, #tpu.memory_space<vmem>>, %arg3: memref<128x128xbf16, #tpu.memory_space<vmem>>, %arg4: memref<512x128xbf16, #tpu.memory_space<vmem>>, %arg5: memref<512x128xf32, #tpu.memory_space<vmem>>) attributes {dimension_semantics = [#tpu.dimension_semantics<parallel>, #tpu.dimension_semantics<arbitrary>], iteration_bounds = array<i64: 4, 1>, scalar_prefetch = 0 : i64, scratch_operands = 1 : i64, tpu.core_type = #tpu.core_type<tc>, window_params = [{transform_indices = @transform_0, window_bounds = array<i64: 512, 128>}, {transform_indices = @transform_1, window_bounds = array<i64: 128, 128>}, {transform_indices = @transform_2, window_bounds = array<i64: 512, 128>}]} {
    %c0_i32 = arith.constant 0 : i32
    %0 = arith.cmpi eq, %arg1, %c0_i32 : i32
    %1 = arith.extui %0 : i1 to i32
    %c0_i32_0 = arith.constant 0 : i32
    %2 = arith.cmpi ne, %1, %c0_i32_0 : i32
    scf.if %2 {
      %cst_10 = arith.constant 0.000000e+00 : f32
      %12 = vector.broadcast %cst_10 : f32 to vector<512x128xf32>
      %c0_11 = arith.constant 0 : index
      %c0_12 = arith.constant 0 : index
      %13 = vector.load %arg5[%c0_11, %c0_12] : memref<512x128xf32, #tpu.memory_space<vmem>>, vector<512x128xf32>
      tpu.vector_store %arg5[%c0_11, %c0_12], %12 {strides = array<i32>} : memref<512x128xf32, #tpu.memory_space<vmem>>, vector<512x128xf32>,
    } else {
    }
    %c0 = arith.constant 0 : index
    %c0_1 = arith.constant 0 : index
    %3 = vector.load %arg5[%c0, %c0_1] : memref<512x128xf32, #tpu.memory_space<vmem>>, vector<512x128xf32>
    %c0_2 = arith.constant 0 : index
    %c0_3 = arith.constant 0 : index
    %4 = vector.load %arg2[%c0_2, %c0_3] : memref<512x128xbf16, #tpu.memory_space<vmem>>, vector<512x128xbf16>
    %c0_4 = arith.constant 0 : index
    %c0_5 = arith.constant 0 : index
    %5 = vector.load %arg3[%c0_4, %c0_5] : memref<128x128xbf16, #tpu.memory_space<vmem>>, vector<128x128xbf16>
    %cst = arith.constant dense<0.000000e+00> : vector<512x128xf32>
    %6 = tpu.matmul %4, %5, %cst {dimension_numbers = #tpu.dot_dimension_numbers<[1], [0], [0], [1], [0, 0, 1, 1], [], []>} : vector<512x128xbf16>, vector<128x128xbf16>, vector<512x128xf32> -> vector<512x128xf32>
    %7 = arith.addf %3, %6 : vector<512x128xf32>
    %c0_6 = arith.constant 0 : index
    %c0_7 = arith.constant 0 : index
    %8 = vector.load %arg5[%c0_6, %c0_7] : memref<512x128xf32, #tpu.memory_space<vmem>>, vector<512x128xf32>
    tpu.vector_store %arg5[%c0_6, %c0_7], %7 {strides = array<i32>} : memref<512x128xf32, #tpu.memory_space<vmem>>, vector<512x128xf32>,
    %c0_i32_8 = arith.constant 0 : i32
    %9 = arith.cmpi eq, %arg1, %c0_i32_8 : i32
    %10 = arith.extui %9 : i1 to i32
    %c0_i32_9 = arith.constant 0 : i32
    %11 = arith.cmpi ne, %10, %c0_i32_9 : i32
    scf.if %11 {
      %c0_10 = arith.constant 0 : index
      %c0_11 = arith.constant 0 : index
      %12 = vector.load %arg5[%c0_10, %c0_11] : memref<512x128xf32, #tpu.memory_space<vmem>>, vector<512x128xf32>
      %cst_12 = arith.constant 0.000000e+00 : f32
      %13 = vector.broadcast %cst_12 : f32 to vector<512x128xf32>
      %14 = arith.cmpf oge, %12, %13 : vector<512x128xf32>
      %cst_13 = arith.constant 2.000000e-01 : f32
      %15 = vector.broadcast %cst_13 : f32 to vector<512x128xf32>
      %16 = arith.mulf %15, %12 : vector<512x128xf32>
      %17 = arith.select %14, %12, %16 : vector<512x128xi1>, vector<512x128xf32>
      %18 = arith.truncf %17 : vector<512x128xf32> to vector<512x128xbf16>
      %c0_14 = arith.constant 0 : index
      %c0_15 = arith.constant 0 : index
      %19 = vector.load %arg4[%c0_14, %c0_15] : memref<512x128xbf16, #tpu.memory_space<vmem>>, vector<512x128xbf16>
      tpu.vector_store %arg4[%c0_14, %c0_15], %18 {strides = array<i32>} : memref<512x128xbf16, #tpu.memory_space<vmem>>, vector<512x128xbf16>,
    } else {
    }
    return
  }
  func.func @transform_0(%arg0: i32, %arg1: i32) -> (i32, i32) {
    %c0_i32 = arith.constant 0 : i32
    return %arg0, %arg1 : i32, i32
  }
  func.func @transform_1(%arg0: i32, %arg1: i32) -> (i32, i32) {
    %c0_i32 = arith.constant 0 : i32
    %c0_i32_0 = arith.constant 0 : i32
    return %arg1, %c0_i32 : i32, i32
  }
  func.func @transform_2(%arg0: i32, %arg1: i32) -> (i32, i32) {
    %c0_i32 = arith.constant 0 : i32
    %c0_i32_0 = arith.constant 0 : i32
    return %arg0, %c0_i32 : i32, i32
  }
}

module attributes {stable_mosaic.version = 11 : i64} {
  func.func @_conv_kernel(%arg0: i32, %arg1: i32, %arg2: memref<256x128xbf16, #tpu.memory_space<vmem>>, %arg3: memref<128x128xbf16, #tpu.memory_space<vmem>>, %arg4: memref<256x128xbf16, #tpu.memory_space<vmem>>, %arg5: memref<1x2x128xf32, #tpu.memory_space<vmem>>, %arg6: memref<256x128xf32, #tpu.memory_space<vmem>>) attributes {dimension_semantics = [#tpu.dimension_semantics<parallel>, #tpu.dimension_semantics<arbitrary>], iteration_bounds = array<i64: 2, 1>, scalar_prefetch = 0 : i64, scratch_operands = 1 : i64, tpu.core_type = #tpu.core_type<tc>, window_params = [{transform_indices = @transform_0, window_bounds = array<i64: 256, 128>}, {transform_indices = @transform_1, window_bounds = array<i64: 128, 128>}, {transform_indices = @transform_2, window_bounds = array<i64: 256, 128>}, {transform_indices = @transform_3, window_bounds = array<i64: 1, 2, 128>}]} {
    %c0_i32 = arith.constant 0 : i32
    %0 = arith.cmpi eq, %arg1, %c0_i32 : i32
    %1 = arith.extui %0 : i1 to i32
    %c0_i32_0 = arith.constant 0 : i32
    %2 = arith.cmpi ne, %1, %c0_i32_0 : i32
    scf.if %2 {
      %cst_10 = arith.constant 0.000000e+00 : f32
      %12 = vector.broadcast %cst_10 : f32 to vector<256x128xf32>
      %c0_11 = arith.constant 0 : index
      %c0_12 = arith.constant 0 : index
      %13 = vector.load %arg6[%c0_11, %c0_12] : memref<256x128xf32, #tpu.memory_space<vmem>>, vector<256x128xf32>
      tpu.vector_store %arg6[%c0_11, %c0_12], %12 {strides = array<i32>} : memref<256x128xf32, #tpu.memory_space<vmem>>, vector<256x128xf32>,
    } else {
    }
    %c0 = arith.constant 0 : index
    %c0_1 = arith.constant 0 : index
    %3 = vector.load %arg6[%c0, %c0_1] : memref<256x128xf32, #tpu.memory_space<vmem>>, vector<256x128xf32>
    %c0_2 = arith.constant 0 : index
    %c0_3 = arith.constant 0 : index
    %4 = vector.load %arg2[%c0_2, %c0_3] : memref<256x128xbf16, #tpu.memory_space<vmem>>, vector<256x128xbf16>
    %c0_4 = arith.constant 0 : index
    %c0_5 = arith.constant 0 : index
    %5 = vector.load %arg3[%c0_4, %c0_5] : memref<128x128xbf16, #tpu.memory_space<vmem>>, vector<128x128xbf16>
    %cst = arith.constant dense<0.000000e+00> : vector<256x128xf32>
    %6 = tpu.matmul %4, %5, %cst {dimension_numbers = #tpu.dot_dimension_numbers<[1], [0], [0], [1], [0, 0, 1, 1], [], []>} : vector<256x128xbf16>, vector<128x128xbf16>, vector<256x128xf32> -> vector<256x128xf32>
    %7 = arith.addf %3, %6 : vector<256x128xf32>
    %c0_6 = arith.constant 0 : index
    %c0_7 = arith.constant 0 : index
    %8 = vector.load %arg6[%c0_6, %c0_7] : memref<256x128xf32, #tpu.memory_space<vmem>>, vector<256x128xf32>
    tpu.vector_store %arg6[%c0_6, %c0_7], %7 {strides = array<i32>} : memref<256x128xf32, #tpu.memory_space<vmem>>, vector<256x128xf32>,
    %c0_i32_8 = arith.constant 0 : i32
    %9 = arith.cmpi eq, %arg1, %c0_i32_8 : i32
    %10 = arith.extui %9 : i1 to i32
    %c0_i32_9 = arith.constant 0 : i32
    %11 = arith.cmpi ne, %10, %c0_i32_9 : i32
    scf.if %11 {
      %c0_10 = arith.constant 0 : index
      %c0_11 = arith.constant 0 : index
      %12 = vector.load %arg6[%c0_10, %c0_11] : memref<256x128xf32, #tpu.memory_space<vmem>>, vector<256x128xf32>
      %13 = arith.truncf %12 : vector<256x128xf32> to vector<256x128xbf16>
      %c0_12 = arith.constant 0 : index
      %c0_13 = arith.constant 0 : index
      %14 = vector.load %arg4[%c0_12, %c0_13] : memref<256x128xbf16, #tpu.memory_space<vmem>>, vector<256x128xbf16>
      tpu.vector_store %arg4[%c0_12, %c0_13], %13 {strides = array<i32>} : memref<256x128xbf16, #tpu.memory_space<vmem>>, vector<256x128xbf16>,
      %cst_14 = arith.constant dense<0.000000e+00> : vector<128xf32>
      %15 = vector.multi_reduction <add>, %12, %cst_14 [0] : vector<256x128xf32> to vector<128xf32>
      %16 = vector.shape_cast %15 : vector<128xf32> to vector<1x128xf32>
      %17 = arith.mulf %12, %12 : vector<256x128xf32>
      %cst_15 = arith.constant dense<0.000000e+00> : vector<128xf32>
      %18 = vector.multi_reduction <add>, %17, %cst_15 [0] : vector<256x128xf32> to vector<128xf32>
      %19 = vector.shape_cast %18 : vector<128xf32> to vector<1x128xf32>
      %20 = tpu.concatenate %16, %19 in 0 : vector<1x128xf32>, vector<1x128xf32> -> vector<2x128xf32>
      %21 = vector.shape_cast %20 : vector<2x128xf32> to vector<1x2x128xf32>
      %c0_16 = arith.constant 0 : index
      %c0_17 = arith.constant 0 : index
      %c0_18 = arith.constant 0 : index
      %22 = vector.load %arg5[%c0_16, %c0_17, %c0_18] : memref<1x2x128xf32, #tpu.memory_space<vmem>>, vector<1x2x128xf32>
      tpu.vector_store %arg5[%c0_16, %c0_17, %c0_18], %21 {strides = array<i32>} : memref<1x2x128xf32, #tpu.memory_space<vmem>>, vector<1x2x128xf32>,
    } else {
    }
    return
  }
  func.func @transform_0(%arg0: i32, %arg1: i32) -> (i32, i32) {
    %c0_i32 = arith.constant 0 : i32
    return %arg0, %arg1 : i32, i32
  }
  func.func @transform_1(%arg0: i32, %arg1: i32) -> (i32, i32) {
    %c0_i32 = arith.constant 0 : i32
    %c0_i32_0 = arith.constant 0 : i32
    return %arg1, %c0_i32 : i32, i32
  }
  func.func @transform_2(%arg0: i32, %arg1: i32) -> (i32, i32) {
    %c0_i32 = arith.constant 0 : i32
    %c0_i32_0 = arith.constant 0 : i32
    return %arg0, %c0_i32 : i32, i32
  }
  func.func @transform_3(%arg0: i32, %arg1: i32) -> (i32, i32, i32) {
    %c0_i32 = arith.constant 0 : i32
    %c0_i32_0 = arith.constant 0 : i32
    %c0_i32_1 = arith.constant 0 : i32
    return %arg0, %c0_i32, %c0_i32_0 : i32, i32, i32
  }
}

module attributes {stable_mosaic.version = 11 : i64} {
  func.func @_bn_lrelu_kernel(%arg0: i32, %arg1: memref<256x128xbf16, #tpu.memory_space<vmem>>, %arg2: memref<1x128xf32, #tpu.memory_space<vmem>>, %arg3: memref<1x128xf32, #tpu.memory_space<vmem>>, %arg4: memref<256x128xbf16, #tpu.memory_space<vmem>>) attributes {dimension_semantics = [#tpu.dimension_semantics<parallel>], iteration_bounds = array<i64: 2>, scalar_prefetch = 0 : i64, scratch_operands = 0 : i64, tpu.core_type = #tpu.core_type<tc>, window_params = [{transform_indices = @transform_0, window_bounds = array<i64: 256, 128>}, {pipeline_mode = #tpu.pipeline_mode<synchronous>, transform_indices = @transform_1, window_bounds = array<i64: 1, 128>}, {pipeline_mode = #tpu.pipeline_mode<synchronous>, transform_indices = @transform_2, window_bounds = array<i64: 1, 128>}, {transform_indices = @transform_3, window_bounds = array<i64: 256, 128>}]} {
    %c0 = arith.constant 0 : index
    %c0_0 = arith.constant 0 : index
    %0 = vector.load %arg1[%c0, %c0_0] : memref<256x128xbf16, #tpu.memory_space<vmem>>, vector<256x128xbf16>
    %1 = arith.extf %0 : vector<256x128xbf16> to vector<256x128xf32>
    %c0_1 = arith.constant 0 : index
    %c0_2 = arith.constant 0 : index
    %2 = vector.load %arg2[%c0_1, %c0_2] : memref<1x128xf32, #tpu.memory_space<vmem>>, vector<1x128xf32>
    %3 = vector.broadcast %2 : vector<1x128xf32> to vector<256x128xf32>
    %4 = arith.mulf %1, %3 : vector<256x128xf32>
    %c0_3 = arith.constant 0 : index
    %c0_4 = arith.constant 0 : index
    %5 = vector.load %arg3[%c0_3, %c0_4] : memref<1x128xf32, #tpu.memory_space<vmem>>, vector<1x128xf32>
    %6 = vector.broadcast %5 : vector<1x128xf32> to vector<256x128xf32>
    %7 = arith.addf %4, %6 : vector<256x128xf32>
    %cst = arith.constant 0.000000e+00 : f32
    %8 = vector.broadcast %cst : f32 to vector<256x128xf32>
    %9 = arith.cmpf oge, %7, %8 : vector<256x128xf32>
    %cst_5 = arith.constant 2.000000e-01 : f32
    %10 = vector.broadcast %cst_5 : f32 to vector<256x128xf32>
    %11 = arith.mulf %10, %7 : vector<256x128xf32>
    %12 = arith.select %9, %7, %11 : vector<256x128xi1>, vector<256x128xf32>
    %13 = arith.truncf %12 : vector<256x128xf32> to vector<256x128xbf16>
    %c0_6 = arith.constant 0 : index
    %c0_7 = arith.constant 0 : index
    %14 = vector.load %arg4[%c0_6, %c0_7] : memref<256x128xbf16, #tpu.memory_space<vmem>>, vector<256x128xbf16>
    tpu.vector_store %arg4[%c0_6, %c0_7], %13 {strides = array<i32>} : memref<256x128xbf16, #tpu.memory_space<vmem>>, vector<256x128xbf16>,
    return
  }
  func.func @transform_0(%arg0: i32) -> (i32, i32) {
    %c0_i32 = arith.constant 0 : i32
    %c0_i32_0 = arith.constant 0 : i32
    return %arg0, %c0_i32 : i32, i32
  }
  func.func @transform_1(%arg0: i32) -> (i32, i32) {
    %c0_i32 = arith.constant 0 : i32
    %c0_i32_0 = arith.constant 0 : i32
    %c0_i32_1 = arith.constant 0 : i32
    return %c0_i32, %c0_i32_0 : i32, i32
  }
  func.func @transform_2(%arg0: i32) -> (i32, i32) {
    %c0_i32 = arith.constant 0 : i32
    %c0_i32_0 = arith.constant 0 : i32
    %c0_i32_1 = arith.constant 0 : i32
    return %c0_i32, %c0_i32_0 : i32, i32
  }
  func.func @transform_3(%arg0: i32) -> (i32, i32) {
    %c0_i32 = arith.constant 0 : i32
    %c0_i32_0 = arith.constant 0 : i32
    return %arg0, %c0_i32 : i32, i32
  }
}

module attributes {stable_mosaic.version = 11 : i64} {
  func.func @_conv_kernel(%arg0: i32, %arg1: i32, %arg2: memref<128x256xbf16, #tpu.memory_space<vmem>>, %arg3: memref<256x128xbf16, #tpu.memory_space<vmem>>, %arg4: memref<128x128xbf16, #tpu.memory_space<vmem>>, %arg5: memref<1x2x128xf32, #tpu.memory_space<vmem>>, %arg6: memref<128x128xf32, #tpu.memory_space<vmem>>) attributes {dimension_semantics = [#tpu.dimension_semantics<parallel>, #tpu.dimension_semantics<arbitrary>], iteration_bounds = array<i64: 1, 1>, scalar_prefetch = 0 : i64, scratch_operands = 1 : i64, tpu.core_type = #tpu.core_type<tc>, window_params = [{transform_indices = @transform_0, window_bounds = array<i64: 128, 256>}, {transform_indices = @transform_1, window_bounds = array<i64: 256, 128>}, {transform_indices = @transform_2, window_bounds = array<i64: 128, 128>}, {transform_indices = @transform_3, window_bounds = array<i64: 1, 2, 128>}]} {
    %c0_i32 = arith.constant 0 : i32
    %0 = arith.cmpi eq, %arg1, %c0_i32 : i32
    %1 = arith.extui %0 : i1 to i32
    %c0_i32_0 = arith.constant 0 : i32
    %2 = arith.cmpi ne, %1, %c0_i32_0 : i32
    scf.if %2 {
      %cst_10 = arith.constant 0.000000e+00 : f32
      %12 = vector.broadcast %cst_10 : f32 to vector<128x128xf32>
      %c0_11 = arith.constant 0 : index
      %c0_12 = arith.constant 0 : index
      %13 = vector.load %arg6[%c0_11, %c0_12] : memref<128x128xf32, #tpu.memory_space<vmem>>, vector<128x128xf32>
      tpu.vector_store %arg6[%c0_11, %c0_12], %12 {strides = array<i32>} : memref<128x128xf32, #tpu.memory_space<vmem>>, vector<128x128xf32>,
    } else {
    }
    %c0 = arith.constant 0 : index
    %c0_1 = arith.constant 0 : index
    %3 = vector.load %arg6[%c0, %c0_1] : memref<128x128xf32, #tpu.memory_space<vmem>>, vector<128x128xf32>
    %c0_2 = arith.constant 0 : index
    %c0_3 = arith.constant 0 : index
    %4 = vector.load %arg2[%c0_2, %c0_3] : memref<128x256xbf16, #tpu.memory_space<vmem>>, vector<128x256xbf16>
    %c0_4 = arith.constant 0 : index
    %c0_5 = arith.constant 0 : index
    %5 = vector.load %arg3[%c0_4, %c0_5] : memref<256x128xbf16, #tpu.memory_space<vmem>>, vector<256x128xbf16>
    %cst = arith.constant dense<0.000000e+00> : vector<128x128xf32>
    %6 = tpu.matmul %4, %5, %cst {dimension_numbers = #tpu.dot_dimension_numbers<[1], [0], [0], [1], [0, 0, 1, 1], [], []>} : vector<128x256xbf16>, vector<256x128xbf16>, vector<128x128xf32> -> vector<128x128xf32>
    %7 = arith.addf %3, %6 : vector<128x128xf32>
    %c0_6 = arith.constant 0 : index
    %c0_7 = arith.constant 0 : index
    %8 = vector.load %arg6[%c0_6, %c0_7] : memref<128x128xf32, #tpu.memory_space<vmem>>, vector<128x128xf32>
    tpu.vector_store %arg6[%c0_6, %c0_7], %7 {strides = array<i32>} : memref<128x128xf32, #tpu.memory_space<vmem>>, vector<128x128xf32>,
    %c0_i32_8 = arith.constant 0 : i32
    %9 = arith.cmpi eq, %arg1, %c0_i32_8 : i32
    %10 = arith.extui %9 : i1 to i32
    %c0_i32_9 = arith.constant 0 : i32
    %11 = arith.cmpi ne, %10, %c0_i32_9 : i32
    scf.if %11 {
      %c0_10 = arith.constant 0 : index
      %c0_11 = arith.constant 0 : index
      %12 = vector.load %arg6[%c0_10, %c0_11] : memref<128x128xf32, #tpu.memory_space<vmem>>, vector<128x128xf32>
      %13 = arith.truncf %12 : vector<128x128xf32> to vector<128x128xbf16>
      %c0_12 = arith.constant 0 : index
      %c0_13 = arith.constant 0 : index
      %14 = vector.load %arg4[%c0_12, %c0_13] : memref<128x128xbf16, #tpu.memory_space<vmem>>, vector<128x128xbf16>
      tpu.vector_store %arg4[%c0_12, %c0_13], %13 {strides = array<i32>} : memref<128x128xbf16, #tpu.memory_space<vmem>>, vector<128x128xbf16>,
      %cst_14 = arith.constant dense<0.000000e+00> : vector<128xf32>
      %15 = vector.multi_reduction <add>, %12, %cst_14 [0] : vector<128x128xf32> to vector<128xf32>
      %16 = vector.shape_cast %15 : vector<128xf32> to vector<1x128xf32>
      %17 = arith.mulf %12, %12 : vector<128x128xf32>
      %cst_15 = arith.constant dense<0.000000e+00> : vector<128xf32>
      %18 = vector.multi_reduction <add>, %17, %cst_15 [0] : vector<128x128xf32> to vector<128xf32>
      %19 = vector.shape_cast %18 : vector<128xf32> to vector<1x128xf32>
      %20 = tpu.concatenate %16, %19 in 0 : vector<1x128xf32>, vector<1x128xf32> -> vector<2x128xf32>
      %21 = vector.shape_cast %20 : vector<2x128xf32> to vector<1x2x128xf32>
      %c0_16 = arith.constant 0 : index
      %c0_17 = arith.constant 0 : index
      %c0_18 = arith.constant 0 : index
      %22 = vector.load %arg5[%c0_16, %c0_17, %c0_18] : memref<1x2x128xf32, #tpu.memory_space<vmem>>, vector<1x2x128xf32>
      tpu.vector_store %arg5[%c0_16, %c0_17, %c0_18], %21 {strides = array<i32>} : memref<1x2x128xf32, #tpu.memory_space<vmem>>, vector<1x2x128xf32>,
    } else {
    }
    return
  }
  func.func @transform_0(%arg0: i32, %arg1: i32) -> (i32, i32) {
    %c0_i32 = arith.constant 0 : i32
    return %arg0, %arg1 : i32, i32
  }
  func.func @transform_1(%arg0: i32, %arg1: i32) -> (i32, i32) {
    %c0_i32 = arith.constant 0 : i32
    %c0_i32_0 = arith.constant 0 : i32
    return %arg1, %c0_i32 : i32, i32
  }
  func.func @transform_2(%arg0: i32, %arg1: i32) -> (i32, i32) {
    %c0_i32 = arith.constant 0 : i32
    %c0_i32_0 = arith.constant 0 : i32
    return %arg0, %c0_i32 : i32, i32
  }
  func.func @transform_3(%arg0: i32, %arg1: i32) -> (i32, i32, i32) {
    %c0_i32 = arith.constant 0 : i32
    %c0_i32_0 = arith.constant 0 : i32
    %c0_i32_1 = arith.constant 0 : i32
    return %arg0, %c0_i32, %c0_i32_0 : i32, i32, i32
  }
}

module attributes {stable_mosaic.version = 11 : i64} {
  func.func @_bn_lrelu_kernel(%arg0: i32, %arg1: memref<128x128xbf16, #tpu.memory_space<vmem>>, %arg2: memref<1x128xf32, #tpu.memory_space<vmem>>, %arg3: memref<1x128xf32, #tpu.memory_space<vmem>>, %arg4: memref<128x128xbf16, #tpu.memory_space<vmem>>) attributes {dimension_semantics = [#tpu.dimension_semantics<parallel>], iteration_bounds = array<i64: 1>, scalar_prefetch = 0 : i64, scratch_operands = 0 : i64, tpu.core_type = #tpu.core_type<tc>, window_params = [{transform_indices = @transform_0, window_bounds = array<i64: 128, 128>}, {pipeline_mode = #tpu.pipeline_mode<synchronous>, transform_indices = @transform_1, window_bounds = array<i64: 1, 128>}, {pipeline_mode = #tpu.pipeline_mode<synchronous>, transform_indices = @transform_2, window_bounds = array<i64: 1, 128>}, {transform_indices = @transform_3, window_bounds = array<i64: 128, 128>}]} {
    %c0 = arith.constant 0 : index
    %c0_0 = arith.constant 0 : index
    %0 = vector.load %arg1[%c0, %c0_0] : memref<128x128xbf16, #tpu.memory_space<vmem>>, vector<128x128xbf16>
    %1 = arith.extf %0 : vector<128x128xbf16> to vector<128x128xf32>
    %c0_1 = arith.constant 0 : index
    %c0_2 = arith.constant 0 : index
    %2 = vector.load %arg2[%c0_1, %c0_2] : memref<1x128xf32, #tpu.memory_space<vmem>>, vector<1x128xf32>
    %3 = vector.broadcast %2 : vector<1x128xf32> to vector<128x128xf32>
    %4 = arith.mulf %1, %3 : vector<128x128xf32>
    %c0_3 = arith.constant 0 : index
    %c0_4 = arith.constant 0 : index
    %5 = vector.load %arg3[%c0_3, %c0_4] : memref<1x128xf32, #tpu.memory_space<vmem>>, vector<1x128xf32>
    %6 = vector.broadcast %5 : vector<1x128xf32> to vector<128x128xf32>
    %7 = arith.addf %4, %6 : vector<128x128xf32>
    %cst = arith.constant 0.000000e+00 : f32
    %8 = vector.broadcast %cst : f32 to vector<128x128xf32>
    %9 = arith.cmpf oge, %7, %8 : vector<128x128xf32>
    %cst_5 = arith.constant 2.000000e-01 : f32
    %10 = vector.broadcast %cst_5 : f32 to vector<128x128xf32>
    %11 = arith.mulf %10, %7 : vector<128x128xf32>
    %12 = arith.select %9, %7, %11 : vector<128x128xi1>, vector<128x128xf32>
    %13 = arith.truncf %12 : vector<128x128xf32> to vector<128x128xbf16>
    %c0_6 = arith.constant 0 : index
    %c0_7 = arith.constant 0 : index
    %14 = vector.load %arg4[%c0_6, %c0_7] : memref<128x128xbf16, #tpu.memory_space<vmem>>, vector<128x128xbf16>
    tpu.vector_store %arg4[%c0_6, %c0_7], %13 {strides = array<i32>} : memref<128x128xbf16, #tpu.memory_space<vmem>>, vector<128x128xbf16>,
    return
  }
  func.func @transform_0(%arg0: i32) -> (i32, i32) {
    %c0_i32 = arith.constant 0 : i32
    %c0_i32_0 = arith.constant 0 : i32
    return %arg0, %c0_i32 : i32, i32
  }
  func.func @transform_1(%arg0: i32) -> (i32, i32) {
    %c0_i32 = arith.constant 0 : i32
    %c0_i32_0 = arith.constant 0 : i32
    %c0_i32_1 = arith.constant 0 : i32
    return %c0_i32, %c0_i32_0 : i32, i32
  }
  func.func @transform_2(%arg0: i32) -> (i32, i32) {
    %c0_i32 = arith.constant 0 : i32
    %c0_i32_0 = arith.constant 0 : i32
    %c0_i32_1 = arith.constant 0 : i32
    return %c0_i32, %c0_i32_0 : i32, i32
  }
  func.func @transform_3(%arg0: i32) -> (i32, i32) {
    %c0_i32 = arith.constant 0 : i32
    %c0_i32_0 = arith.constant 0 : i32
    return %arg0, %c0_i32 : i32, i32
  }
}

module attributes {stable_mosaic.version = 11 : i64} {
  func.func @_conv_kernel(%arg0: i32, %arg1: i32, %arg2: memref<32x512xbf16, #tpu.memory_space<vmem>>, %arg3: memref<512x128xbf16, #tpu.memory_space<vmem>>, %arg4: memref<32x128xbf16, #tpu.memory_space<vmem>>, %arg5: memref<1x2x128xf32, #tpu.memory_space<vmem>>, %arg6: memref<32x128xf32, #tpu.memory_space<vmem>>) attributes {dimension_semantics = [#tpu.dimension_semantics<parallel>, #tpu.dimension_semantics<arbitrary>], iteration_bounds = array<i64: 1, 1>, scalar_prefetch = 0 : i64, scratch_operands = 1 : i64, tpu.core_type = #tpu.core_type<tc>, window_params = [{transform_indices = @transform_0, window_bounds = array<i64: 32, 512>}, {transform_indices = @transform_1, window_bounds = array<i64: 512, 128>}, {transform_indices = @transform_2, window_bounds = array<i64: 32, 128>}, {transform_indices = @transform_3, window_bounds = array<i64: 1, 2, 128>}]} {
    %c0_i32 = arith.constant 0 : i32
    %0 = arith.cmpi eq, %arg1, %c0_i32 : i32
    %1 = arith.extui %0 : i1 to i32
    %c0_i32_0 = arith.constant 0 : i32
    %2 = arith.cmpi ne, %1, %c0_i32_0 : i32
    scf.if %2 {
      %cst_10 = arith.constant 0.000000e+00 : f32
      %12 = vector.broadcast %cst_10 : f32 to vector<32x128xf32>
      %c0_11 = arith.constant 0 : index
      %c0_12 = arith.constant 0 : index
      %13 = vector.load %arg6[%c0_11, %c0_12] : memref<32x128xf32, #tpu.memory_space<vmem>>, vector<32x128xf32>
      tpu.vector_store %arg6[%c0_11, %c0_12], %12 {strides = array<i32>} : memref<32x128xf32, #tpu.memory_space<vmem>>, vector<32x128xf32>,
    } else {
    }
    %c0 = arith.constant 0 : index
    %c0_1 = arith.constant 0 : index
    %3 = vector.load %arg6[%c0, %c0_1] : memref<32x128xf32, #tpu.memory_space<vmem>>, vector<32x128xf32>
    %c0_2 = arith.constant 0 : index
    %c0_3 = arith.constant 0 : index
    %4 = vector.load %arg2[%c0_2, %c0_3] : memref<32x512xbf16, #tpu.memory_space<vmem>>, vector<32x512xbf16>
    %c0_4 = arith.constant 0 : index
    %c0_5 = arith.constant 0 : index
    %5 = vector.load %arg3[%c0_4, %c0_5] : memref<512x128xbf16, #tpu.memory_space<vmem>>, vector<512x128xbf16>
    %cst = arith.constant dense<0.000000e+00> : vector<32x128xf32>
    %6 = tpu.matmul %4, %5, %cst {dimension_numbers = #tpu.dot_dimension_numbers<[1], [0], [0], [1], [0, 0, 1, 1], [], []>} : vector<32x512xbf16>, vector<512x128xbf16>, vector<32x128xf32> -> vector<32x128xf32>
    %7 = arith.addf %3, %6 : vector<32x128xf32>
    %c0_6 = arith.constant 0 : index
    %c0_7 = arith.constant 0 : index
    %8 = vector.load %arg6[%c0_6, %c0_7] : memref<32x128xf32, #tpu.memory_space<vmem>>, vector<32x128xf32>
    tpu.vector_store %arg6[%c0_6, %c0_7], %7 {strides = array<i32>} : memref<32x128xf32, #tpu.memory_space<vmem>>, vector<32x128xf32>,
    %c0_i32_8 = arith.constant 0 : i32
    %9 = arith.cmpi eq, %arg1, %c0_i32_8 : i32
    %10 = arith.extui %9 : i1 to i32
    %c0_i32_9 = arith.constant 0 : i32
    %11 = arith.cmpi ne, %10, %c0_i32_9 : i32
    scf.if %11 {
      %c0_10 = arith.constant 0 : index
      %c0_11 = arith.constant 0 : index
      %12 = vector.load %arg6[%c0_10, %c0_11] : memref<32x128xf32, #tpu.memory_space<vmem>>, vector<32x128xf32>
      %13 = arith.truncf %12 : vector<32x128xf32> to vector<32x128xbf16>
      %c0_12 = arith.constant 0 : index
      %c0_13 = arith.constant 0 : index
      %14 = vector.load %arg4[%c0_12, %c0_13] : memref<32x128xbf16, #tpu.memory_space<vmem>>, vector<32x128xbf16>
      tpu.vector_store %arg4[%c0_12, %c0_13], %13 {strides = array<i32>} : memref<32x128xbf16, #tpu.memory_space<vmem>>, vector<32x128xbf16>,
      %cst_14 = arith.constant dense<0.000000e+00> : vector<128xf32>
      %15 = vector.multi_reduction <add>, %12, %cst_14 [0] : vector<32x128xf32> to vector<128xf32>
      %16 = vector.shape_cast %15 : vector<128xf32> to vector<1x128xf32>
      %17 = arith.mulf %12, %12 : vector<32x128xf32>
      %cst_15 = arith.constant dense<0.000000e+00> : vector<128xf32>
      %18 = vector.multi_reduction <add>, %17, %cst_15 [0] : vector<32x128xf32> to vector<128xf32>
      %19 = vector.shape_cast %18 : vector<128xf32> to vector<1x128xf32>
      %20 = tpu.concatenate %16, %19 in 0 : vector<1x128xf32>, vector<1x128xf32> -> vector<2x128xf32>
      %21 = vector.shape_cast %20 : vector<2x128xf32> to vector<1x2x128xf32>
      %c0_16 = arith.constant 0 : index
      %c0_17 = arith.constant 0 : index
      %c0_18 = arith.constant 0 : index
      %22 = vector.load %arg5[%c0_16, %c0_17, %c0_18] : memref<1x2x128xf32, #tpu.memory_space<vmem>>, vector<1x2x128xf32>
      tpu.vector_store %arg5[%c0_16, %c0_17, %c0_18], %21 {strides = array<i32>} : memref<1x2x128xf32, #tpu.memory_space<vmem>>, vector<1x2x128xf32>,
    } else {
    }
    return
  }
  func.func @transform_0(%arg0: i32, %arg1: i32) -> (i32, i32) {
    %c0_i32 = arith.constant 0 : i32
    return %arg0, %arg1 : i32, i32
  }
  func.func @transform_1(%arg0: i32, %arg1: i32) -> (i32, i32) {
    %c0_i32 = arith.constant 0 : i32
    %c0_i32_0 = arith.constant 0 : i32
    return %arg1, %c0_i32 : i32, i32
  }
  func.func @transform_2(%arg0: i32, %arg1: i32) -> (i32, i32) {
    %c0_i32 = arith.constant 0 : i32
    %c0_i32_0 = arith.constant 0 : i32
    return %arg0, %c0_i32 : i32, i32
  }
  func.func @transform_3(%arg0: i32, %arg1: i32) -> (i32, i32, i32) {
    %c0_i32 = arith.constant 0 : i32
    %c0_i32_0 = arith.constant 0 : i32
    %c0_i32_1 = arith.constant 0 : i32
    return %arg0, %c0_i32, %c0_i32_0 : i32, i32, i32
  }
}

module attributes {stable_mosaic.version = 11 : i64} {
  func.func @_bn_lrelu_kernel(%arg0: i32, %arg1: memref<32x128xbf16, #tpu.memory_space<vmem>>, %arg2: memref<1x128xf32, #tpu.memory_space<vmem>>, %arg3: memref<1x128xf32, #tpu.memory_space<vmem>>, %arg4: memref<32x128xbf16, #tpu.memory_space<vmem>>) attributes {dimension_semantics = [#tpu.dimension_semantics<parallel>], iteration_bounds = array<i64: 1>, scalar_prefetch = 0 : i64, scratch_operands = 0 : i64, tpu.core_type = #tpu.core_type<tc>, window_params = [{transform_indices = @transform_0, window_bounds = array<i64: 32, 128>}, {pipeline_mode = #tpu.pipeline_mode<synchronous>, transform_indices = @transform_1, window_bounds = array<i64: 1, 128>}, {pipeline_mode = #tpu.pipeline_mode<synchronous>, transform_indices = @transform_2, window_bounds = array<i64: 1, 128>}, {transform_indices = @transform_3, window_bounds = array<i64: 32, 128>}]} {
    %c0 = arith.constant 0 : index
    %c0_0 = arith.constant 0 : index
    %0 = vector.load %arg1[%c0, %c0_0] : memref<32x128xbf16, #tpu.memory_space<vmem>>, vector<32x128xbf16>
    %1 = arith.extf %0 : vector<32x128xbf16> to vector<32x128xf32>
    %c0_1 = arith.constant 0 : index
    %c0_2 = arith.constant 0 : index
    %2 = vector.load %arg2[%c0_1, %c0_2] : memref<1x128xf32, #tpu.memory_space<vmem>>, vector<1x128xf32>
    %3 = vector.broadcast %2 : vector<1x128xf32> to vector<32x128xf32>
    %4 = arith.mulf %1, %3 : vector<32x128xf32>
    %c0_3 = arith.constant 0 : index
    %c0_4 = arith.constant 0 : index
    %5 = vector.load %arg3[%c0_3, %c0_4] : memref<1x128xf32, #tpu.memory_space<vmem>>, vector<1x128xf32>
    %6 = vector.broadcast %5 : vector<1x128xf32> to vector<32x128xf32>
    %7 = arith.addf %4, %6 : vector<32x128xf32>
    %cst = arith.constant 0.000000e+00 : f32
    %8 = vector.broadcast %cst : f32 to vector<32x128xf32>
    %9 = arith.cmpf oge, %7, %8 : vector<32x128xf32>
    %cst_5 = arith.constant 2.000000e-01 : f32
    %10 = vector.broadcast %cst_5 : f32 to vector<32x128xf32>
    %11 = arith.mulf %10, %7 : vector<32x128xf32>
    %12 = arith.select %9, %7, %11 : vector<32x128xi1>, vector<32x128xf32>
    %13 = arith.truncf %12 : vector<32x128xf32> to vector<32x128xbf16>
    %c0_6 = arith.constant 0 : index
    %c0_7 = arith.constant 0 : index
    %14 = vector.load %arg4[%c0_6, %c0_7] : memref<32x128xbf16, #tpu.memory_space<vmem>>, vector<32x128xbf16>
    tpu.vector_store %arg4[%c0_6, %c0_7], %13 {strides = array<i32>} : memref<32x128xbf16, #tpu.memory_space<vmem>>, vector<32x128xbf16>,
    return
  }
  func.func @transform_0(%arg0: i32) -> (i32, i32) {
    %c0_i32 = arith.constant 0 : i32
    %c0_i32_0 = arith.constant 0 : i32
    return %arg0, %c0_i32 : i32, i32
  }
  func.func @transform_1(%arg0: i32) -> (i32, i32) {
    %c0_i32 = arith.constant 0 : i32
    %c0_i32_0 = arith.constant 0 : i32
    %c0_i32_1 = arith.constant 0 : i32
    return %c0_i32, %c0_i32_0 : i32, i32
  }
  func.func @transform_2(%arg0: i32) -> (i32, i32) {
    %c0_i32 = arith.constant 0 : i32
    %c0_i32_0 = arith.constant 0 : i32
    %c0_i32_1 = arith.constant 0 : i32
    return %c0_i32, %c0_i32_0 : i32, i32
  }
  func.func @transform_3(%arg0: i32) -> (i32, i32) {
    %c0_i32 = arith.constant 0 : i32
    %c0_i32_0 = arith.constant 0 : i32
    return %arg0, %c0_i32 : i32, i32
  }
}

module attributes {stable_mosaic.version = 11 : i64} {
  func.func @_final_conv_kernel(%arg0: memref<2x1024xbf16, #tpu.memory_space<vmem>>, %arg1: memref<1x1024xf32, #tpu.memory_space<vmem>>, %arg2: memref<1x1xf32, #tpu.memory_space<vmem>>, %arg3: memref<2x1xf32, #tpu.memory_space<vmem>>) attributes {dimension_semantics = [], scalar_prefetch = 0 : i64, scratch_operands = 0 : i64, tpu.core_type = #tpu.core_type<tc>} {
    %c0 = arith.constant 0 : index
    %c0_0 = arith.constant 0 : index
    %0 = vector.load %arg0[%c0, %c0_0] : memref<2x1024xbf16, #tpu.memory_space<vmem>>, vector<2x1024xbf16>
    %1 = arith.extf %0 : vector<2x1024xbf16> to vector<2x1024xf32>
    %c0_1 = arith.constant 0 : index
    %c0_2 = arith.constant 0 : index
    %2 = vector.load %arg1[%c0_1, %c0_2] : memref<1x1024xf32, #tpu.memory_space<vmem>>, vector<1x1024xf32>
    %3 = vector.broadcast %2 : vector<1x1024xf32> to vector<2x1024xf32>
    %4 = arith.mulf %1, %3 : vector<2x1024xf32>
    %cst = arith.constant dense<0.000000e+00> : vector<2xf32>
    %5 = vector.multi_reduction <add>, %4, %cst [1] : vector<2x1024xf32> to vector<2xf32>
    %6 = vector.shape_cast %5 : vector<2xf32> to vector<2x1xf32>
    %c0_3 = arith.constant 0 : index
    %c0_4 = arith.constant 0 : index
    %7 = vector.load %arg2[%c0_3, %c0_4] : memref<1x1xf32, #tpu.memory_space<vmem>>, vector<1x1xf32>
    %8 = vector.broadcast %7 : vector<1x1xf32> to vector<2x1xf32>
    %9 = arith.addf %6, %8 : vector<2x1xf32>
    %c0_5 = arith.constant 0 : index
    %c0_6 = arith.constant 0 : index
    %10 = vector.load %arg3[%c0_5, %c0_6] : memref<2x1xf32, #tpu.memory_space<vmem>>, vector<2x1xf32>
    tpu.vector_store %arg3[%c0_5, %c0_6], %9 {strides = array<i32>} : memref<2x1xf32, #tpu.memory_space<vmem>>, vector<2x1xf32>,
    return
  }
}

</mosaic_0001>

<llo_original>
// kernel: discriminator_forward.8
$region0: #{discriminator_forward.8}
  #allocation0 [shape = 'u32[]', space=smem, size = 0x4, offset = 0x4, fixed_abs, tag = 'smem constant byte address 0x4 - core index']
  #allocation1 [shape = 'u32[72,128]{1,0:T(1,128)}', space=vmem, size = 0x9000, scoped, tag = 'internal scratch']
  #allocation2 [shape = 'f32[512,128]{1,0:T(8,128)}', space=vmem, size = 0x40000, scoped, tag = 'scratch operand']
  %s0 = inlined_call_operand.vmem [shape: bf16[2048,128], index: 0, kind: input, shape index: {}]
  %s1 = inlined_call_operand.vmem [shape: bf16[128,128], index: 1, kind: input, shape index: {}]
  %s2 = inlined_call_operand.vmem [shape: bf16[2048,128], index: 2, kind: output, shape index: {}]
  %s3 = sld [smem:[#allocation0]]
  $region49: #{discriminator_forward.8} parent=0
    _
  %s5 = ssub.s32 1, %s3
  %s6 = scalar_select 0, %s5, %s3
  loop: start=0, step=1, limit=6
  $region2: #{discriminator_forward.8} parent=0 // loop_pre_header
    _
  $region3: #{discriminator_forward.8} parent=0 // loop_header
    %s8 = sphi 0, %s12
    %p9 = scmp.ge.s32.totalorder %s8, 6
    %s15 = sphi 0, %s27
    %s16 = sphi 0, %s23
    %s17 = sphi 0, %s15
    %s18 = sphi 0, %s16
    %s19 = sphi 0, %s17
    %s20 = sphi 0, %s18
    %s32 = sphi 0, %s34
    %s35 = sphi 0, %s32
    %s36 = sphi 0, %s35
    %s52 = sphi 0, %s36
    %s58 = sphi 0, %s60
    %s61 = sphi 0, %s58
    %s62 = sphi 0, %s61
    %s78 = sphi 0, %s62
    %s84 = sphi 0, %s86
    %s87 = sphi 0, %s84
    %s88 = sphi 0, %s87
    %s104 = sphi 0, %s88
  $region4: #{discriminator_forward.8} parent=0 // loop_header_branch
    %11 = sbr.rel (%p9) target = $region8
  $region5: #{discriminator_forward.8} parent=0 // loop_body
    %s13 = ssub.s32 %s8, 1
    %s14 = ssub.s32 %s8, 2
    %s21 = sadd.s32 1, %s16
    %p22 = scmp.ge.s32.totalorder %s21, 1
    %s23 = scalar_select %p22, 0, %s21
    %s24 = sadd.s32 1, %s15
    %s25 = scalar_select %p22, %s24, %s15
    %p26 = scmp.ge.s32.totalorder %s25, 4
    %s27 = scalar_select %p26, 0, %s25
    %s28 = ssub.s32 %s15, %s27
    %s29 = ssub.s32 %s16, %s23
    %s30 = sor.u32 %s28, %s29
    %p31 = scmp.eq.s32.totalorder %s30, 0
    %s33 = sadd.s32 %s32, 1
    %s34 = scalar_select %p31, %s32, %s33
    %p37 = pneg %p31
    %p38 = scmp.eq.s32.totalorder %s8, 3
    %p39 = por %p37, %p38
    %p40 = scmp.ne.s32.totalorder %s32, %s35
    %p41 = scmp.eq.s32.totalorder %s8, 0
    %p42 = por %p40, %p41
    %p43 = scmp.ne.s32.totalorder %s32, %s35
    %p44 = scmp.eq.s32.totalorder %s13, 3
    %p45 = por %p43, %p44
    %p46 = scmp.ne.s32.totalorder %s35, %s36
    %p47 = scmp.eq.s32.totalorder %s13, 0
    %p48 = por %p46, %p47
    %p49 = scmp.ne.s32.totalorder %s35, %s36
    %p50 = scmp.eq.s32.totalorder %s14, 3
    %p51 = por %p49, %p50
    %p53 = scmp.ne.s32.totalorder %s36, %s52
    %p54 = scmp.eq.s32.totalorder %s14, 0
    %p55 = por %p53, %p54
    %s56 = ssub.s32 %s16, %s23
    %p57 = scmp.eq.s32.totalorder %s56, 0
    %s59 = sadd.s32 %s58, 1
    %s60 = scalar_select %p57, %s58, %s59
    %p63 = pneg %p57
    %p64 = scmp.eq.s32.totalorder %s8, 3
    %p65 = por %p63, %p64
    %p66 = scmp.ne.s32.totalorder %s58, %s61
    %p67 = scmp.eq.s32.totalorder %s8, 0
    %p68 = por %p66, %p67
    %p69 = scmp.ne.s32.totalorder %s58, %s61
    %p70 = scmp.eq.s32.totalorder %s13, 3
    %p71 = por %p69, %p70
    %p72 = scmp.ne.s32.totalorder %s61, %s62
    %p73 = scmp.eq.s32.totalorder %s13, 0
    %p74 = por %p72, %p73
    %p75 = scmp.ne.s32.totalorder %s61, %s62
    %p76 = scmp.eq.s32.totalorder %s14, 3
    %p77 = por %p75, %p76
    %p79 = scmp.ne.s32.totalorder %s62, %s78
    %p80 = scmp.eq.s32.totalorder %s14, 0
    %p81 = por %p79, %p80
    %s82 = ssub.s32 %s15, %s27
    %p83 = scmp.eq.s32.totalorder %s82, 0
    %s85 = sadd.s32 %s84, 1
    %s86 = scalar_select %p83, %s84, %s85
    %p89 = pneg %p83
    %p90 = scmp.eq.s32.totalorder %s8, 3
    %p91 = por %p89, %p90
    %p92 = scmp.ne.s32.totalorder %s84, %s87
    %p93 = scmp.eq.s32.totalorder %s8, 0
    %p94 = por %p92, %p93
    %p95 = scmp.ne.s32.totalorder %s84, %s87
    %p96 = scmp.eq.s32.totalorder %s13, 3
    %p97 = por %p95, %p96
    %p98 = scmp.ne.s32.totalorder %s87, %s88
    %p99 = scmp.eq.s32.totalorder %s13, 0
    %p100 = por %p98, %p99
    %p101 = scmp.ne.s32.totalorder %s87, %s88
    %p102 = scmp.eq.s32.totalorder %s14, 3
    %p103 = por %p101, %p102
    %p105 = scmp.ne.s32.totalorder %s88, %s104
    %p106 = scmp.eq.s32.totalorder %s14, 0
    %p107 = por %p105, %p106
    %p108 = scmp.le.s32.totalorder 1, %s8
    %p109 = scmp.lt.s32.totalorder %s8, 5
    %p110 = pnand %p108, %p109
    %p111 = pneg %p110
    // Predicated region
    $region9: #{discriminator_forward.8} parent=5 // pred_check
      _
    $region10: #{discriminator_forward.8} parent=5 // pred_check_branch
      %113 = sbr.rel (%p110) target = $region12
    $region11: #{discriminator_forward.8} parent=5 // pred_region
      %s114 = ssub.s32 %s8, 1
      // Predicated region
      $region13: #{discriminator_forward.8} parent=11 // pred_check
        %p115 = pneg %p74
      $region14: #{discriminator_forward.8} parent=11 // pred_check_branch
        %117 = sbr.rel (%p115) target = $region16
      $region15: #{discriminator_forward.8} parent=11 // pred_region
        %s118 = smul.u32 16, %s18
        %p119 = scmp.lt.s32.totalorder %s118, 15
        %s120 = scalar_select %p119, %s118, 15
        %s121 = smul.addr %s120, 4
        %s122 = scalar_lea.vmem %s1, %s121
        %s123 = smul.u32 16, %s18
      $region16: #{discriminator_forward.8} parent=11 // pred_fallthru
        _
    $region12: #{discriminator_forward.8} parent=5 // pred_fallthru
      _
    %p124 = scmp.lt.s32.totalorder %s8, 4
    // Predicated region
    $region17: #{discriminator_forward.8} parent=5 // pred_check
      %p125 = pneg %p124
    $region18: #{discriminator_forward.8} parent=5 // pred_check_branch
      %127 = sbr.rel (%p125) target = $region20
    $region19: #{discriminator_forward.8} parent=5 // pred_region
      // Predicated region
      $region21: #{discriminator_forward.8} parent=19 // pred_check
        %p128 = pneg %p42
      $region22: #{discriminator_forward.8} parent=19 // pred_check_branch
        %130 = sbr.rel (%p128) target = $region24
      $region23: #{discriminator_forward.8} parent=19 // pred_region
        %s131 = smul.u32 64, %s15
        %p132 = scmp.lt.s32.totalorder %s131, 255
        %s133 = scalar_select %p132, %s131, 255
        %p134 = scmp.lt.s32.totalorder %s16, 0
        %s135 = scalar_select %p134, %s16, 0
        %s136 = sadd.s32 %s135, %s133
        %s137 = smul.addr %s136, 4
        %s138 = scalar_lea.vmem %s0, %s137
        %s139 = smul.u32 64, %s15
      $region24: #{discriminator_forward.8} parent=19 // pred_fallthru
        _
    $region20: #{discriminator_forward.8} parent=5 // pred_fallthru
      _
    %p140 = scmp.le.s32.totalorder 1, %s8
    %p141 = scmp.lt.s32.totalorder %s8, 5
    %p142 = pnand %p140, %p141
    %p143 = pneg %p142
    // Predicated region
    $region25: #{discriminator_forward.8} parent=5 // pred_check
      _
    $region26: #{discriminator_forward.8} parent=5 // pred_check_branch
      %145 = sbr.rel (%p142) target = $region28
    $region27: #{discriminator_forward.8} parent=5 // pred_region
      %s146 = ssub.s32 %s8, 1
      %s147 = smul.u32 64, %s17
      %p148 = scmp.lt.s32.totalorder %s147, 255
      %s149 = scalar_select %p148, %s147, 255
      %p150 = scmp.lt.s32.totalorder %s18, 0
      %s151 = scalar_select %p150, %s18, 0
      %s152 = sadd.s32 %s151, %s149
      %s153 = smul.addr %s152, 4
      %s154 = scalar_lea.vmem %s0, %s153
      %p155 = pneg %p48
      %p156 = pneg %p45
      %s157 = smul.u32 16, %s18
      %p158 = scmp.lt.s32.totalorder %s157, 15
      %s159 = scalar_select %p158, %s157, 15
      %s160 = smul.addr %s159, 4
      %s161 = scalar_lea.vmem %s1, %s160
      %p162 = pneg %p74
      %p163 = pneg %p71
      %p164 = pneg %p100
      %p165 = pneg %p97
      %s166 = smul.u32 64, %s17
      %p167 = scmp.lt.s32.totalorder %s166, 255
      %s168 = scalar_select %p167, %s166, 255
      %s169 = smul.addr %s168, 4
      %s170 = scalar_lea.vmem %s2, %s169
      %s171 = smul.u32 64, %s17
      %p172 = scmp.lt.s32.totalorder %s171, 255
      %s173 = scalar_select %p172, %s171, 255
      %p174 = scmp.lt.s32.totalorder %s18, 0
      %s175 = scalar_select %p174, %s18, 0
      %s176 = sadd.s32 %s175, %s173
      %s177 = smul.addr %s176, 4
      %s178 = scalar_lea.vmem %s0, %s177
      %s179 = smul.u32 64, %s17
      %s180 = smul.u32 16, %s18
      %p181 = scmp.lt.s32.totalorder %s180, 15
      %s182 = scalar_select %p181, %s180, 15
      %s183 = smul.addr %s182, 4
      %s184 = scalar_lea.vmem %s1, %s183
      %s185 = smul.u32 16, %s18
      %s186 = smul.u32 64, %s17
      %p187 = scmp.lt.s32.totalorder %s186, 255
      %s188 = scalar_select %p187, %s186, 255
      %s189 = smul.addr %s188, 4
      %s190 = scalar_lea.vmem %s2, %s189
      %s191 = smul.u32 64, %s17
      %p192 = scmp.eq.s32.totalorder %s18, 0
      // Predicated region
      $region29: #{discriminator_forward.8} parent=27 // pred_check
        %p193 = pneg %p192
      $region30: #{discriminator_forward.8} parent=27 // pred_check_branch
        %195 = sbr.rel (%p193) target = $region32
      $region31: #{discriminator_forward.8} parent=27 // pred_region
        %196 = vst [vmem:[#allocation2] sm:$0xff] 0.0
        %197 = vst [vmem:[#allocation2 + $0x8] sm:$0xff] 0.0
        %198 = vst [vmem:[#allocation2 + $0x10] sm:$0xff] 0.0
        %199 = vst [vmem:[#allocation2 + $0x18] sm:$0xff] 0.0
        %200 = vst [vmem:[#allocation2 + $0x20] sm:$0xff] 0.0
        %201 = vst [vmem:[#allocation2 + $0x28] sm:$0xff] 0.0
        %202 = vst [vmem:[#allocation2 + $0x30] sm:$0xff] 0.0
        %203 = vst [vmem:[#allocation2 + $0x38] sm:$0xff] 0.0
        %204 = vst [vmem:[#allocation2 + $0x40] sm:$0xff] 0.0
        %205 = vst [vmem:[#allocation2 + $0x48] sm:$0xff] 0.0
        %206 = vst [vmem:[#allocation2 + $0x50] sm:$0xff] 0.0
        %207 = vst [vmem:[#allocation2 + $0x58] sm:$0xff] 0.0
        %208 = vst [vmem:[#allocation2 + $0x60] sm:$0xff] 0.0
        %209 = vst [vmem:[#allocation2 + $0x68] sm:$0xff] 0.0
        %210 = vst [vmem:[#allocation2 + $0x70] sm:$0xff] 0.0
        %211 = vst [vmem:[#allocation2 + $0x78] sm:$0xff] 0.0
        %212 = vst [vmem:[#allocation2 + $0x80] sm:$0xff] 0.0
        %213 = vst [vmem:[#allocation2 + $0x88] sm:$0xff] 0.0
        %214 = vst [vmem:[#allocation2 + $0x90] sm:$0xff] 0.0
        %215 = vst [vmem:[#allocation2 + $0x98] sm:$0xff] 0.0
        %216 = vst [vmem:[#allocation2 + $0xa0] sm:$0xff] 0.0
        %217 = vst [vmem:[#allocation2 + $0xa8] sm:$0xff] 0.0
        %218 = vst [vmem:[#allocation2 + $0xb0] sm:$0xff] 0.0
        %219 = vst [vmem:[#allocation2 + $0xb8] sm:$0xff] 0.0
        %220 = vst [vmem:[#allocation2 + $0xc0] sm:$0xff] 0.0
        %221 = vst [vmem:[#allocation2 + $0xc8] sm:$0xff] 0.0
        %222 = vst [vmem:[#allocation2 + $0xd0] sm:$0xff] 0.0
        %223 = vst [vmem:[#allocation2 + $0xd8] sm:$0xff] 0.0
        %224 = vst [vmem:[#allocation2 + $0xe0] sm:$0xff] 0.0
        %225 = vst [vmem:[#allocation2 + $0xe8] sm:$0xff] 0.0
        %226 = vst [vmem:[#allocation2 + $0xf0] sm:$0xff] 0.0
        %227 = vst [vmem:[#allocation2 + $0xf8] sm:$0xff] 0.0
        %228 = vst [vmem:[#allocation2 + $0x100] sm:$0xff] 0.0
        %229 = vst [vmem:[#allocation2 + $0x108] sm:$0xff] 0.0
        %230 = vst [vmem:[#allocation2 + $0x110] sm:$0xff] 0.0
        %231 = vst [vmem:[#allocation2 + $0x118] sm:$0xff] 0.0
        %232 = vst [vmem:[#allocation2 + $0x120] sm:$0xff] 0.0
        %233 = vst [vmem:[#allocation2 + $0x128] sm:$0xff] 0.0
        %234 = vst [vmem:[#allocation2 + $0x130] sm:$0xff] 0.0
        %235 = vst [vmem:[#allocation2 + $0x138] sm:$0xff] 0.0
        %236 = vst [vmem:[#allocation2 + $0x140] sm:$0xff] 0.0
        %237 = vst [vmem:[#allocation2 + $0x148] sm:$0xff] 0.0
        %238 = vst [vmem:[#allocation2 + $0x150] sm:$0xff] 0.0
        %239 = vst [vmem:[#allocation2 + $0x158] sm:$0xff] 0.0
        %240 = vst [vmem:[#allocation2 + $0x160] sm:$0xff] 0.0
        %241 = vst [vmem:[#allocation2 + $0x168] sm:$0xff] 0.0
        %242 = vst [vmem:[#allocation2 + $0x170] sm:$0xff] 0.0
        %243 = vst [vmem:[#allocation2 + $0x178] sm:$0xff] 0.0
        %244 = vst [vmem:[#allocation2 + $0x180] sm:$0xff] 0.0
        %245 = vst [vmem:[#allocation2 + $0x188] sm:$0xff] 0.0
        %246 = vst [vmem:[#allocation2 + $0x190] sm:$0xff] 0.0
        %247 = vst [vmem:[#allocation2 + $0x198] sm:$0xff] 0.0
        %248 = vst [vmem:[#allocation2 + $0x1a0] sm:$0xff] 0.0
        %249 = vst [vmem:[#allocation2 + $0x1a8] sm:$0xff] 0.0
        %250 = vst [vmem:[#allocation2 + $0x1b0] sm:$0xff] 0.0
        %251 = vst [vmem:[#allocation2 + $0x1b8] sm:$0xff] 0.0
        %252 = vst [vmem:[#allocation2 + $0x1c0] sm:$0xff] 0.0
        %253 = vst [vmem:[#allocation2 + $0x1c8] sm:$0xff] 0.0
        %254 = vst [vmem:[#allocation2 + $0x1d0] sm:$0xff] 0.0
        %255 = vst [vmem:[#allocation2 + $0x1d8] sm:$0xff] 0.0
        %256 = vst [vmem:[#allocation2 + $0x1e0] sm:$0xff] 0.0
        %257 = vst [vmem:[#allocation2 + $0x1e8] sm:$0xff] 0.0
        %258 = vst [vmem:[#allocation2 + $0x1f0] sm:$0xff] 0.0
        %259 = vst [vmem:[#allocation2 + $0x1f8] sm:$0xff] 0.0
      $region32: #{discriminator_forward.8} parent=27 // pred_fallthru
        _
      %v260 = vld [vmem:[#allocation2] sm:$0xff]
      %v261 = vld [vmem:[#allocation2 + $0x8] sm:$0xff]
      %v262 = vld [vmem:[#allocation2 + $0x10] sm:$0xff]
      %v263 = vld [vmem:[#allocation2 + $0x18] sm:$0xff]
      %v264 = vld [vmem:[#allocation2 + $0x20] sm:$0xff]
      %v265 = vld [vmem:[#allocation2 + $0x28] sm:$0xff]
      %v266 = vld [vmem:[#allocation2 + $0x30] sm:$0xff]
      %v267 = vld [vmem:[#allocation2 + $0x38] sm:$0xff]
      %v268 = vld [vmem:[#allocation2 + $0x40] sm:$0xff]
      %v269 = vld [vmem:[#allocation2 + $0x48] sm:$0xff]
      %v270 = vld [vmem:[#allocation2 + $0x50] sm:$0xff]
      %v271 = vld [vmem:[#allocation2 + $0x58] sm:$0xff]
      %v272 = vld [vmem:[#allocation2 + $0x60] sm:$0xff]
      %v273 = vld [vmem:[#allocation2 + $0x68] sm:$0xff]
      %v274 = vld [vmem:[#allocation2 + $0x70] sm:$0xff]
      %v275 = vld [vmem:[#allocation2 + $0x78] sm:$0xff]
      %v276 = vld [vmem:[#allocation2 + $0x80] sm:$0xff]
      %v277 = vld [vmem:[#allocation2 + $0x88] sm:$0xff]
      %v278 = vld [vmem:[#allocation2 + $0x90] sm:$0xff]
      %v279 = vld [vmem:[#allocation2 + $0x98] sm:$0xff]
      %v280 = vld [vmem:[#allocation2 + $0xa0] sm:$0xff]
      %v281 = vld [vmem:[#allocation2 + $0xa8] sm:$0xff]
      %v282 = vld [vmem:[#allocation2 + $0xb0] sm:$0xff]
      %v283 = vld [vmem:[#allocation2 + $0xb8] sm:$0xff]
      %v284 = vld [vmem:[#allocation2 + $0xc0] sm:$0xff]
      %v285 = vld [vmem:[#allocation2 + $0xc8] sm:$0xff]
      %v286 = vld [vmem:[#allocation2 + $0xd0] sm:$0xff]
      %v287 = vld [vmem:[#allocation2 + $0xd8] sm:$0xff]
      %v288 = vld [vmem:[#allocation2 + $0xe0] sm:$0xff]
      %v289 = vld [vmem:[#allocation2 + $0xe8] sm:$0xff]
      %v290 = vld [vmem:[#allocation2 + $0xf0] sm:$0xff]
      %v291 = vld [vmem:[#allocation2 + $0xf8] sm:$0xff]
      %v292 = vld [vmem:[#allocation2 + $0x100] sm:$0xff]
      %v293 = vld [vmem:[#allocation2 + $0x108] sm:$0xff]
      %v294 = vld [vmem:[#allocation2 + $0x110] sm:$0xff]
      %v295 = vld [vmem:[#allocation2 + $0x118] sm:$0xff]
      %v296 = vld [vmem:[#allocation2 + $0x120] sm:$0xff]
      %v297 = vld [vmem:[#allocation2 + $0x128] sm:$0xff]
      %v298 = vld [vmem:[#allocation2 + $0x130] sm:$0xff]
      %v299 = vld [vmem:[#allocation2 + $0x138] sm:$0xff]
      %v300 = vld [vmem:[#allocation2 + $0x140] sm:$0xff]
      %v301 = vld [vmem:[#allocation2 + $0x148] sm:$0xff]
      %v302 = vld [vmem:[#allocation2 + $0x150] sm:$0xff]
      %v303 = vld [vmem:[#allocation2 + $0x158] sm:$0xff]
      %v304 = vld [vmem:[#allocation2 + $0x160] sm:$0xff]
      %v305 = vld [vmem:[#allocation2 + $0x168] sm:$0xff]
      %v306 = vld [vmem:[#allocation2 + $0x170] sm:$0xff]
      %v307 = vld [vmem:[#allocation2 + $0x178] sm:$0xff]
      %v308 = vld [vmem:[#allocation2 + $0x180] sm:$0xff]
      %v309 = vld [vmem:[#allocation2 + $0x188] sm:$0xff]
      %v310 = vld [vmem:[#allocation2 + $0x190] sm:$0xff]
      %v311 = vld [vmem:[#allocation2 + $0x198] sm:$0xff]
      %v312 = vld [vmem:[#allocation2 + $0x1a0] sm:$0xff]
      %v313 = vld [vmem:[#allocation2 + $0x1a8] sm:$0xff]
      %v314 = vld [vmem:[#allocation2 + $0x1b0] sm:$0xff]
      %v315 = vld [vmem:[#allocation2 + $0x1b8] sm:$0xff]
      %v316 = vld [vmem:[#allocation2 + $0x1c0] sm:$0xff]
      %v317 = vld [vmem:[#allocation2 + $0x1c8] sm:$0xff]
      %v318 = vld [vmem:[#allocation2 + $0x1d0] sm:$0xff]
      %v319 = vld [vmem:[#allocation2 + $0x1d8] sm:$0xff]
      %v320 = vld [vmem:[#allocation2 + $0x1e0] sm:$0xff]
      %v321 = vld [vmem:[#allocation2 + $0x1e8] sm:$0xff]
      %v322 = vld [vmem:[#allocation2 + $0x1f0] sm:$0xff]
      %v323 = vld [vmem:[#allocation2 + $0x1f8] sm:$0xff]
      %v324 = vld [vmem:[%s178] sm:$0xf]
      %v325 = vld [vmem:[%s178 + $0x4] sm:$0xf]
      %v326 = vld [vmem:[%s178 + $0x8] sm:$0xf]
      %v327 = vld [vmem:[%s178 + $0xc] sm:$0xf]
      %v328 = vld [vmem:[%s178 + $0x10] sm:$0xf]
      %v329 = vld [vmem:[%s178 + $0x14] sm:$0xf]
      %v330 = vld [vmem:[%s178 + $0x18] sm:$0xf]
      %v331 = vld [vmem:[%s178 + $0x1c] sm:$0xf]
      %v332 = vld [vmem:[%s178 + $0x20] sm:$0xf]
      %v333 = vld [vmem:[%s178 + $0x24] sm:$0xf]
      %v334 = vld [vmem:[%s178 + $0x28] sm:$0xf]
      %v335 = vld [vmem:[%s178 + $0x2c] sm:$0xf]
      %v336 = vld [vmem:[%s178 + $0x30] sm:$0xf]
      %v337 = vld [vmem:[%s178 + $0x34] sm:$0xf]
      %v338 = vld [vmem:[%s178 + $0x38] sm:$0xf]
      %v339 = vld [vmem:[%s178 + $0x3c] sm:$0xf]
      %v340 = vld [vmem:[%s178 + $0x40] sm:$0xf]
      %v341 = vld [vmem:[%s178 + $0x44] sm:$0xf]
      %v342 = vld [vmem:[%s178 + $0x48] sm:$0xf]
      %v343 = vld [vmem:[%s178 + $0x4c] sm:$0xf]
      %v344 = vld [vmem:[%s178 + $0x50] sm:$0xf]
      %v345 = vld [vmem:[%s178 + $0x54] sm:$0xf]
      %v346 = vld [vmem:[%s178 + $0x58] sm:$0xf]
      %v347 = vld [vmem:[%s178 + $0x5c] sm:$0xf]
      %v348 = vld [vmem:[%s178 + $0x60] sm:$0xf]
      %v349 = vld [vmem:[%s178 + $0x64] sm:$0xf]
      %v350 = vld [vmem:[%s178 + $0x68] sm:$0xf]
      %v351 = vld [vmem:[%s178 + $0x6c] sm:$0xf]
      %v352 = vld [vmem:[%s178 + $0x70] sm:$0xf]
      %v353 = vld [vmem:[%s178 + $0x74] sm:$0xf]
      %v354 = vld [vmem:[%s178 + $0x78] sm:$0xf]
      %v355 = vld [vmem:[%s178 + $0x7c] sm:$0xf]
      %v356 = vld [vmem:[%s178 + $0x80] sm:$0xf]
      %v357 = vld [vmem:[%s178 + $0x84] sm:$0xf]
      %v358 = vld [vmem:[%s178 + $0x88] sm:$0xf]
      %v359 = vld [vmem:[%s178 + $0x8c] sm:$0xf]
      %v360 = vld [vmem:[%s178 + $0x90] sm:$0xf]
      %v361 = vld [vmem:[%s178 + $0x94] sm:$0xf]
      %v362 = vld [vmem:[%s178 + $0x98] sm:$0xf]
      %v363 = vld [vmem:[%s178 + $0x9c] sm:$0xf]
      %v364 = vld [vmem:[%s178 + $0xa0] sm:$0xf]
      %v365 = vld [vmem:[%s178 + $0xa4] sm:$0xf]
      %v366 = vld [vmem:[%s178 + $0xa8] sm:$0xf]
      %v367 = vld [vmem:[%s178 + $0xac] sm:$0xf]
      %v368 = vld [vmem:[%s178 + $0xb0] sm:$0xf]
      %v369 = vld [vmem:[%s178 + $0xb4] sm:$0xf]
      %v370 = vld [vmem:[%s178 + $0xb8] sm:$0xf]
      %v371 = vld [vmem:[%s178 + $0xbc] sm:$0xf]
      %v372 = vld [vmem:[%s178 + $0xc0] sm:$0xf]
      %v373 = vld [vmem:[%s178 + $0xc4] sm:$0xf]
      %v374 = vld [vmem:[%s178 + $0xc8] sm:$0xf]
      %v375 = vld [vmem:[%s178 + $0xcc] sm:$0xf]
      %v376 = vld [vmem:[%s178 + $0xd0] sm:$0xf]
      %v377 = vld [vmem:[%s178 + $0xd4] sm:$0xf]
      %v378 = vld [vmem:[%s178 + $0xd8] sm:$0xf]
      %v379 = vld [vmem:[%s178 + $0xdc] sm:$0xf]
      %v380 = vld [vmem:[%s178 + $0xe0] sm:$0xf]
      %v381 = vld [vmem:[%s178 + $0xe4] sm:$0xf]
      %v382 = vld [vmem:[%s178 + $0xe8] sm:$0xf]
      %v383 = vld [vmem:[%s178 + $0xec] sm:$0xf]
      %v384 = vld [vmem:[%s178 + $0xf0] sm:$0xf]
      %v385 = vld [vmem:[%s178 + $0xf4] sm:$0xf]
      %v386 = vld [vmem:[%s178 + $0xf8] sm:$0xf]
      %v387 = vld [vmem:[%s178 + $0xfc] sm:$0xf]
      %v388 = vld [vmem:[%s184] sm:$0xf]
      %v389 = vld [vmem:[%s184 + $0x4] sm:$0xf]
      %v390 = vld [vmem:[%s184 + $0x8] sm:$0xf]
      %v391 = vld [vmem:[%s184 + $0xc] sm:$0xf]
      %v392 = vld [vmem:[%s184 + $0x10] sm:$0xf]
      %v393 = vld [vmem:[%s184 + $0x14] sm:$0xf]
      %v394 = vld [vmem:[%s184 + $0x18] sm:$0xf]
      %v395 = vld [vmem:[%s184 + $0x1c] sm:$0xf]
      %v396 = vld [vmem:[%s184 + $0x20] sm:$0xf]
      %v397 = vld [vmem:[%s184 + $0x24] sm:$0xf]
      %v398 = vld [vmem:[%s184 + $0x28] sm:$0xf]
      %v399 = vld [vmem:[%s184 + $0x2c] sm:$0xf]
      %v400 = vld [vmem:[%s184 + $0x30] sm:$0xf]
      %v401 = vld [vmem:[%s184 + $0x34] sm:$0xf]
      %v402 = vld [vmem:[%s184 + $0x38] sm:$0xf]
      %v403 = vld [vmem:[%s184 + $0x3c] sm:$0xf]
      %v468 = vunpack.c.l.b16 %v324
      %v469 = vunpack.c.l.b16 %v325
      %v470 = vunpack.c.l.b16 %v326
      %v471 = vunpack.c.l.b16 %v327
      %v472 = vunpack.c.l.b16 %v328
      %v473 = vunpack.c.l.b16 %v329
      %v474 = vunpack.c.l.b16 %v330
      %v475 = vunpack.c.l.b16 %v331
      %v476 = vunpack.c.l.b16 %v332
      %v477 = vunpack.c.l.b16 %v333
      %v478 = vunpack.c.l.b16 %v334
      %v479 = vunpack.c.l.b16 %v335
      %v480 = vunpack.c.l.b16 %v336
      %v481 = vunpack.c.l.b16 %v337
      %v482 = vunpack.c.l.b16 %v338
      %v483 = vunpack.c.l.b16 %v339
      %v484 = vunpack.c.l.b16 %v340
      %v485 = vunpack.c.l.b16 %v341
      %v486 = vunpack.c.l.b16 %v342
      %v487 = vunpack.c.l.b16 %v343
      %v488 = vunpack.c.l.b16 %v344
      %v489 = vunpack.c.l.b16 %v345
      %v490 = vunpack.c.l.b16 %v346
      %v491 = vunpack.c.l.b16 %v347
      %v492 = vunpack.c.l.b16 %v348
      %v493 = vunpack.c.l.b16 %v349
      %v494 = vunpack.c.l.b16 %v350
      %v495 = vunpack.c.l.b16 %v351
      %v496 = vunpack.c.l.b16 %v352
      %v497 = vunpack.c.l.b16 %v353
      %v498 = vunpack.c.l.b16 %v354
      %v499 = vunpack.c.l.b16 %v355
      %v500 = vunpack.c.l.b16 %v356
      %v501 = vunpack.c.l.b16 %v357
      %v502 = vunpack.c.l.b16 %v358
      %v503 = vunpack.c.l.b16 %v359
      %v504 = vunpack.c.l.b16 %v360
      %v505 = vunpack.c.l.b16 %v361
      %v506 = vunpack.c.l.b16 %v362
      %v507 = vunpack.c.l.b16 %v363
      %v508 = vunpack.c.l.b16 %v364
      %v509 = vunpack.c.l.b16 %v365
      %v510 = vunpack.c.l.b16 %v366
      %v511 = vunpack.c.l.b16 %v367
      %v512 = vunpack.c.l.b16 %v368
      %v513 = vunpack.c.l.b16 %v369
      %v514 = vunpack.c.l.b16 %v370
      %v515 = vunpack.c.l.b16 %v371
      %v516 = vunpack.c.l.b16 %v372
      %v517 = vunpack.c.l.b16 %v373
      %v518 = vunpack.c.l.b16 %v374
      %v519 = vunpack.c.l.b16 %v375
      %v520 = vunpack.c.l.b16 %v376
      %v521 = vunpack.c.l.b16 %v377
      %v522 = vunpack.c.l.b16 %v378
      %v523 = vunpack.c.l.b16 %v379
      %v524 = vunpack.c.l.b16 %v380
      %v525 = vunpack.c.l.b16 %v381
      %v526 = vunpack.c.l.b16 %v382
      %v527 = vunpack.c.l.b16 %v383
      %v528 = vunpack.c.l.b16 %v384
      %v529 = vunpack.c.l.b16 %v385
      %v530 = vunpack.c.l.b16 %v386
      %v531 = vunpack.c.l.b16 %v387
      %v532 = vpack.c.b16 %v469, %v468
      %v533 = vpack.c.b16 %v471, %v470
      %v534 = vpack.c.b16 %v473, %v472
      %v535 = vpack.c.b16 %v475, %v474
      %v536 = vpack.c.b16 %v477, %v476
      %v537 = vpack.c.b16 %v479, %v478
      %v538 = vpack.c.b16 %v481, %v480
      %v539 = vpack.c.b16 %v483, %v482
      %v540 = vpack.c.b16 %v485, %v484
      %v541 = vpack.c.b16 %v487, %v486
      %v542 = vpack.c.b16 %v489, %v488
      %v543 = vpack.c.b16 %v491, %v490
      %v544 = vpack.c.b16 %v493, %v492
      %v545 = vpack.c.b16 %v495, %v494
      %v546 = vpack.c.b16 %v497, %v496
      %v547 = vpack.c.b16 %v499, %v498
      %v548 = vpack.c.b16 %v501, %v500
      %v549 = vpack.c.b16 %v503, %v502
      %v550 = vpack.c.b16 %v505, %v504
      %v551 = vpack.c.b16 %v507, %v506
      %v552 = vpack.c.b16 %v509, %v508
      %v553 = vpack.c.b16 %v511, %v510
      %v554 = vpack.c.b16 %v513, %v512
      %v555 = vpack.c.b16 %v515, %v514
      %v556 = vpack.c.b16 %v517, %v516
      %v557 = vpack.c.b16 %v519, %v518
      %v558 = vpack.c.b16 %v521, %v520
      %v559 = vpack.c.b16 %v523, %v522
      %v560 = vpack.c.b16 %v525, %v524
      %v561 = vpack.c.b16 %v527, %v526
      %v562 = vpack.c.b16 %v529, %v528
      %v563 = vpack.c.b16 %v531, %v530
      %v612 = vunpack.c.l.b16 %v388
      %v613 = vunpack.c.l.b16 %v389
      %v614 = vunpack.c.l.b16 %v390
      %v615 = vunpack.c.l.b16 %v391
      %v616 = vunpack.c.l.b16 %v392
      %v617 = vunpack.c.l.b16 %v393
      %v618 = vunpack.c.l.b16 %v394
      %v619 = vunpack.c.l.b16 %v395
      %v620 = vunpack.c.l.b16 %v396
      %v621 = vunpack.c.l.b16 %v397
      %v622 = vunpack.c.l.b16 %v398
      %v623 = vunpack.c.l.b16 %v399
      %v624 = vunpack.c.l.b16 %v400
      %v625 = vunpack.c.l.b16 %v401
      %v626 = vunpack.c.l.b16 %v402
      %v627 = vunpack.c.l.b16 %v403
      %v628 = vpack.c.b16 %v613, %v612
      %v629 = vpack.c.b16 %v615, %v614
      %v630 = vpack.c.b16 %v617, %v616
      %v631 = vpack.c.b16 %v619, %v618
      %v632 = vpack.c.b16 %v621, %v620
      %v633 = vpack.c.b16 %v623, %v622
      %v634 = vpack.c.b16 %v625, %v624
      %v635 = vpack.c.b16 %v627, %v626
      %644 = vmatpush.bf16.msra.mxu0 %v635
      %645 = vmatpush.bf16.msra.mxu0 %v634
      %646 = vmatpush.bf16.msra.mxu0 %v633
      %647 = vmatpush.bf16.msra.mxu0 %v632
      %648 = vmatpush.bf16.msra.mxu0 %v631
      %649 = vmatpush.bf16.msra.mxu0 %v630
      %650 = vmatpush.bf16.msra.mxu0 %v629
      %651 = vmatpush.bf16.msra.mxu0 %v628
      %652 = vmatmul.bf16.gmra.mxu0 %v532
      %v653 = vpop.f32.mrf.mxu0
      %v654 = vadd.f32 0.0, %v653
      %v655 = vpop.f32.mrf.mxu0
      %v656 = vadd.f32 0.0, %v655
      %657 = vmatmul.bf16.gmra.mxu0 %v533
      %v658 = vpop.f32.mrf.mxu0
      %v659 = vadd.f32 0.0, %v658
      %v660 = vpop.f32.mrf.mxu0
      %v661 = vadd.f32 0.0, %v660
      %662 = vmatmul.bf16.gmra.mxu0 %v534
      %v663 = vpop.f32.mrf.mxu0
      %v664 = vadd.f32 0.0, %v663
      %v665 = vpop.f32.mrf.mxu0
      %v666 = vadd.f32 0.0, %v665
      %667 = vmatmul.bf16.gmra.mxu0 %v535
      %v668 = vpop.f32.mrf.mxu0
      %v669 = vadd.f32 0.0, %v668
      %v670 = vpop.f32.mrf.mxu0
      %v671 = vadd.f32 0.0, %v670
      %672 = vmatmul.bf16.gmra.mxu0 %v536
      %v673 = vpop.f32.mrf.mxu0
      %v674 = vadd.f32 0.0, %v673
      %v675 = vpop.f32.mrf.mxu0
      %v676 = vadd.f32 0.0, %v675
      %677 = vmatmul.bf16.gmra.mxu0 %v537
      %v678 = vpop.f32.mrf.mxu0
      %v679 = vadd.f32 0.0, %v678
      %v680 = vpop.f32.mrf.mxu0
      %v681 = vadd.f32 0.0, %v680
      %682 = vmatmul.bf16.gmra.mxu0 %v538
      %v683 = vpop.f32.mrf.mxu0
      %v684 = vadd.f32 0.0, %v683
      %v685 = vpop.f32.mrf.mxu0
      %v686 = vadd.f32 0.0, %v685
      %687 = vmatmul.bf16.gmra.mxu0 %v539
      %v688 = vpop.f32.mrf.mxu0
      %v689 = vadd.f32 0.0, %v688
      %v690 = vpop.f32.mrf.mxu0
      %v691 = vadd.f32 0.0, %v690
      %692 = vmatmul.bf16.gmra.mxu0 %v540
      %v693 = vpop.f32.mrf.mxu0
      %v694 = vadd.f32 0.0, %v693
      %v695 = vpop.f32.mrf.mxu0
      %v696 = vadd.f32 0.0, %v695
      %697 = vmatmul.bf16.gmra.mxu0 %v541
      %v698 = vpop.f32.mrf.mxu0
      %v699 = vadd.f32 0.0, %v698
      %v700 = vpop.f32.mrf.mxu0
      %v701 = vadd.f32 0.0, %v700
      %702 = vmatmul.bf16.gmra.mxu0 %v542
      %v703 = vpop.f32.mrf.mxu0
      %v704 = vadd.f32 0.0, %v703
      %v705 = vpop.f32.mrf.mxu0
      %v706 = vadd.f32 0.0, %v705
      %707 = vmatmul.bf16.gmra.mxu0 %v543
      %v708 = vpop.f32.mrf.mxu0
      %v709 = vadd.f32 0.0, %v708
      %v710 = vpop.f32.mrf.mxu0
      %v711 = vadd.f32 0.0, %v710
      %712 = vmatmul.bf16.gmra.mxu0 %v544
      %v713 = vpop.f32.mrf.mxu0
      %v714 = vadd.f32 0.0, %v713
      %v715 = vpop.f32.mrf.mxu0
      %v716 = vadd.f32 0.0, %v715
      %717 = vmatmul.bf16.gmra.mxu0 %v545
      %v718 = vpop.f32.mrf.mxu0
      %v719 = vadd.f32 0.0, %v718
      %v720 = vpop.f32.mrf.mxu0
      %v721 = vadd.f32 0.0, %v720
      %722 = vmatmul.bf16.gmra.mxu0 %v546
      %v723 = vpop.f32.mrf.mxu0
      %v724 = vadd.f32 0.0, %v723
      %v725 = vpop.f32.mrf.mxu0
      %v726 = vadd.f32 0.0, %v725
      %727 = vmatmul.bf16.gmra.mxu0 %v547
      %v728 = vpop.f32.mrf.mxu0
      %v729 = vadd.f32 0.0, %v728
      %v730 = vpop.f32.mrf.mxu0
      %v731 = vadd.f32 0.0, %v730
      %732 = vmatmul.bf16.gmra.mxu0 %v548
      %v733 = vpop.f32.mrf.mxu0
      %v734 = vadd.f32 0.0, %v733
      %v735 = vpop.f32.mrf.mxu0
      %v736 = vadd.f32 0.0, %v735
      %737 = vmatmul.bf16.gmra.mxu0 %v549
      %v738 = vpop.f32.mrf.mxu0
      %v739 = vadd.f32 0.0, %v738
      %v740 = vpop.f32.mrf.mxu0
      %v741 = vadd.f32 0.0, %v740
      %742 = vmatmul.bf16.gmra.mxu0 %v550
      %v743 = vpop.f32.mrf.mxu0
      %v744 = vadd.f32 0.0, %v743
      %v745 = vpop.f32.mrf.mxu0
      %v746 = vadd.f32 0.0, %v745
      %747 = vmatmul.bf16.gmra.mxu0 %v551
      %v748 = vpop.f32.mrf.mxu0
      %v749 = vadd.f32 0.0, %v748
      %v750 = vpop.f32.mrf.mxu0
      %v751 = vadd.f32 0.0, %v750
      %752 = vmatmul.bf16.gmra.mxu0 %v552
      %v753 = vpop.f32.mrf.mxu0
      %v754 = vadd.f32 0.0, %v753
      %v755 = vpop.f32.mrf.mxu0
      %v756 = vadd.f32 0.0, %v755
      %757 = vmatmul.bf16.gmra.mxu0 %v553
      %v758 = vpop.f32.mrf.mxu0
      %v759 = vadd.f32 0.0, %v758
      %v760 = vpop.f32.mrf.mxu0
      %v761 = vadd.f32 0.0, %v760
      %762 = vmatmul.bf16.gmra.mxu0 %v554
      %v763 = vpop.f32.mrf.mxu0
      %v764 = vadd.f32 0.0, %v763
      %v765 = vpop.f32.mrf.mxu0
      %v766 = vadd.f32 0.0, %v765
      %767 = vmatmul.bf16.gmra.mxu0 %v555
      %v768 = vpop.f32.mrf.mxu0
      %v769 = vadd.f32 0.0, %v768
      %v770 = vpop.f32.mrf.mxu0
      %v771 = vadd.f32 0.0, %v770
      %772 = vmatmul.bf16.gmra.mxu0 %v556
      %v773 = vpop.f32.mrf.mxu0
      %v774 = vadd.f32 0.0, %v773
      %v775 = vpop.f32.mrf.mxu0
      %v776 = vadd.f32 0.0, %v775
      %777 = vmatmul.bf16.gmra.mxu0 %v557
      %v778 = vpop.f32.mrf.mxu0
      %v779 = vadd.f32 0.0, %v778
      %v780 = vpop.f32.mrf.mxu0
      %v781 = vadd.f32 0.0, %v780
      %782 = vmatmul.bf16.gmra.mxu0 %v558
      %v783 = vpop.f32.mrf.mxu0
      %v784 = vadd.f32 0.0, %v783
      %v785 = vpop.f32.mrf.mxu0
      %v786 = vadd.f32 0.0, %v785
      %787 = vmatmul.bf16.gmra.mxu0 %v559
      %v788 = vpop.f32.mrf.mxu0
      %v789 = vadd.f32 0.0, %v788
      %v790 = vpop.f32.mrf.mxu0
      %v791 = vadd.f32 0.0, %v790
      %792 = vmatmul.bf16.gmra.mxu0 %v560
      %v793 = vpop.f32.mrf.mxu0
      %v794 = vadd.f32 0.0, %v793
      %v795 = vpop.f32.mrf.mxu0
      %v796 = vadd.f32 0.0, %v795
      %797 = vmatmul.bf16.gmra.mxu0 %v561
      %v798 = vpop.f32.mrf.mxu0
      %v799 = vadd.f32 0.0, %v798
      %v800 = vpop.f32.mrf.mxu0
      %v801 = vadd.f32 0.0, %v800
      %802 = vmatmul.bf16.gmra.mxu0 %v562
      %v803 = vpop.f32.mrf.mxu0
      %v804 = vadd.f32 0.0, %v803
      %v805 = vpop.f32.mrf.mxu0
      %v806 = vadd.f32 0.0, %v805
      %807 = vmatmul.bf16.gmra.mxu0 %v563
      %v808 = vpop.f32.mrf.mxu0
      %v809 = vadd.f32 0.0, %v808
      %v810 = vpop.f32.mrf.mxu0
      %v811 = vadd.f32 0.0, %v810
      %812 = vdwg.mxu0
      %v813 = vadd.f32 %v260, %v654
      %v814 = vadd.f32 %v261, %v656
      %v815 = vadd.f32 %v262, %v659
      %v816 = vadd.f32 %v263, %v661
      %v817 = vadd.f32 %v264, %v664
      %v818 = vadd.f32 %v265, %v666
      %v819 = vadd.f32 %v266, %v669
      %v820 = vadd.f32 %v267, %v671
      %v821 = vadd.f32 %v268, %v674
      %v822 = vadd.f32 %v269, %v676
      %v823 = vadd.f32 %v270, %v679
      %v824 = vadd.f32 %v271, %v681
      %v825 = vadd.f32 %v272, %v684
      %v826 = vadd.f32 %v273, %v686
      %v827 = vadd.f32 %v274, %v689
      %v828 = vadd.f32 %v275, %v691
      %v829 = vadd.f32 %v276, %v694
      %v830 = vadd.f32 %v277, %v696
      %v831 = vadd.f32 %v278, %v699
      %v832 = vadd.f32 %v279, %v701
      %v833 = vadd.f32 %v280, %v704
      %v834 = vadd.f32 %v281, %v706
      %v835 = vadd.f32 %v282, %v709
      %v836 = vadd.f32 %v283, %v711
      %v837 = vadd.f32 %v284, %v714
      %v838 = vadd.f32 %v285, %v716
      %v839 = vadd.f32 %v286, %v719
      %v840 = vadd.f32 %v287, %v721
      %v841 = vadd.f32 %v288, %v724
      %v842 = vadd.f32 %v289, %v726
      %v843 = vadd.f32 %v290, %v729
      %v844 = vadd.f32 %v291, %v731
      %v845 = vadd.f32 %v292, %v734
      %v846 = vadd.f32 %v293, %v736
      %v847 = vadd.f32 %v294, %v739
      %v848 = vadd.f32 %v295, %v741
      %v849 = vadd.f32 %v296, %v744
      %v850 = vadd.f32 %v297, %v746
      %v851 = vadd.f32 %v298, %v749
      %v852 = vadd.f32 %v299, %v751
      %v853 = vadd.f32 %v300, %v754
      %v854 = vadd.f32 %v301, %v756
      %v855 = vadd.f32 %v302, %v759
      %v856 = vadd.f32 %v303, %v761
      %v857 = vadd.f32 %v304, %v764
      %v858 = vadd.f32 %v305, %v766
      %v859 = vadd.f32 %v306, %v769
      %v860 = vadd.f32 %v307, %v771
      %v861 = vadd.f32 %v308, %v774
      %v862 = vadd.f32 %v309, %v776
      %v863 = vadd.f32 %v310, %v779
      %v864 = vadd.f32 %v311, %v781
      %v865 = vadd.f32 %v312, %v784
      %v866 = vadd.f32 %v313, %v786
      %v867 = vadd.f32 %v314, %v789
      %v868 = vadd.f32 %v315, %v791
      %v869 = vadd.f32 %v316, %v794
      %v870 = vadd.f32 %v317, %v796
      %v871 = vadd.f32 %v318, %v799
      %v872 = vadd.f32 %v319, %v801
      %v873 = vadd.f32 %v320, %v804
      %v874 = vadd.f32 %v321, %v806
      %v875 = vadd.f32 %v322, %v809
      %v876 = vadd.f32 %v323, %v811
      %877 = vst [vmem:[#allocation2] sm:$0xff] %v813
      %878 = vst [vmem:[#allocation2 + $0x8] sm:$0xff] %v814
      %879 = vst [vmem:[#allocation2 + $0x10] sm:$0xff] %v815
      %880 = vst [vmem:[#allocation2 + $0x18] sm:$0xff] %v816
      %881 = vst [vmem:[#allocation2 + $0x20] sm:$0xff] %v817
      %882 = vst [vmem:[#allocation2 + $0x28] sm:$0xff] %v818
      %883 = vst [vmem:[#allocation2 + $0x30] sm:$0xff] %v819
      %884 = vst [vmem:[#allocation2 + $0x38] sm:$0xff] %v820
      %885 = vst [vmem:[#allocation2 + $0x40] sm:$0xff] %v821
      %886 = vst [vmem:[#allocation2 + $0x48] sm:$0xff] %v822
      %887 = vst [vmem:[#allocation2 + $0x50] sm:$0xff] %v823
      %888 = vst [vmem:[#allocation2 + $0x58] sm:$0xff] %v824
      %889 = vst [vmem:[#allocation2 + $0x60] sm:$0xff] %v825
      %890 = vst [vmem:[#allocation2 + $0x68] sm:$0xff] %v826
      %891 = vst [vmem:[#allocation2 + $0x70] sm:$0xff] %v827
      %892 = vst [vmem:[#allocation2 + $0x78] sm:$0xff] %v828
      %893 = vst [vmem:[#allocation2 + $0x80] sm:$0xff] %v829
      %894 = vst [vmem:[#allocation2 + $0x88] sm:$0xff] %v830
      %895 = vst [vmem:[#allocation2 + $0x90] sm:$0xff] %v831
      %896 = vst [vmem:[#allocation2 + $0x98] sm:$0xff] %v832
      %897 = vst [vmem:[#allocation2 + $0xa0] sm:$0xff] %v833
      %898 = vst [vmem:[#allocation2 + $0xa8] sm:$0xff] %v834
      %899 = vst [vmem:[#allocation2 + $0xb0] sm:$0xff] %v835
      %900 = vst [vmem:[#allocation2 + $0xb8] sm:$0xff] %v836
      %901 = vst [vmem:[#allocation2 + $0xc0] sm:$0xff] %v837
      %902 = vst [vmem:[#allocation2 + $0xc8] sm:$0xff] %v838
      %903 = vst [vmem:[#allocation2 + $0xd0] sm:$0xff] %v839
      %904 = vst [vmem:[#allocation2 + $0xd8] sm:$0xff] %v840
      %905 = vst [vmem:[#allocation2 + $0xe0] sm:$0xff] %v841
      %906 = vst [vmem:[#allocation2 + $0xe8] sm:$0xff] %v842
      %907 = vst [vmem:[#allocation2 + $0xf0] sm:$0xff] %v843
      %908 = vst [vmem:[#allocation2 + $0xf8] sm:$0xff] %v844
      %909 = vst [vmem:[#allocation2 + $0x100] sm:$0xff] %v845
      %910 = vst [vmem:[#allocation2 + $0x108] sm:$0xff] %v846
      %911 = vst [vmem:[#allocation2 + $0x110] sm:$0xff] %v847
      %912 = vst [vmem:[#allocation2 + $0x118] sm:$0xff] %v848
      %913 = vst [vmem:[#allocation2 + $0x120] sm:$0xff] %v849
      %914 = vst [vmem:[#allocation2 + $0x128] sm:$0xff] %v850
      %915 = vst [vmem:[#allocation2 + $0x130] sm:$0xff] %v851
      %916 = vst [vmem:[#allocation2 + $0x138] sm:$0xff] %v852
      %917 = vst [vmem:[#allocation2 + $0x140] sm:$0xff] %v853
      %918 = vst [vmem:[#allocation2 + $0x148] sm:$0xff] %v854
      %919 = vst [vmem:[#allocation2 + $0x150] sm:$0xff] %v855
      %920 = vst [vmem:[#allocation2 + $0x158] sm:$0xff] %v856
      %921 = vst [vmem:[#allocation2 + $0x160] sm:$0xff] %v857
      %922 = vst [vmem:[#allocation2 + $0x168] sm:$0xff] %v858
      %923 = vst [vmem:[#allocation2 + $0x170] sm:$0xff] %v859
      %924 = vst [vmem:[#allocation2 + $0x178] sm:$0xff] %v860
      %925 = vst [vmem:[#allocation2 + $0x180] sm:$0xff] %v861
      %926 = vst [vmem:[#allocation2 + $0x188] sm:$0xff] %v862
      %927 = vst [vmem:[#allocation2 + $0x190] sm:$0xff] %v863
      %928 = vst [vmem:[#allocation2 + $0x198] sm:$0xff] %v864
      %929 = vst [vmem:[#allocation2 + $0x1a0] sm:$0xff] %v865
      %930 = vst [vmem:[#allocation2 + $0x1a8] sm:$0xff] %v866
      %931 = vst [vmem:[#allocation2 + $0x1b0] sm:$0xff] %v867
      %932 = vst [vmem:[#allocation2 + $0x1b8] sm:$0xff] %v868
      %933 = vst [vmem:[#allocation2 + $0x1c0] sm:$0xff] %v869
      %934 = vst [vmem:[#allocation2 + $0x1c8] sm:$0xff] %v870
      %935 = vst [vmem:[#allocation2 + $0x1d0] sm:$0xff] %v871
      %936 = vst [vmem:[#allocation2 + $0x1d8] sm:$0xff] %v872
      %937 = vst [vmem:[#allocation2 + $0x1e0] sm:$0xff] %v873
      %938 = vst [vmem:[#allocation2 + $0x1e8] sm:$0xff] %v874
      %939 = vst [vmem:[#allocation2 + $0x1f0] sm:$0xff] %v875
      %940 = vst [vmem:[#allocation2 + $0x1f8] sm:$0xff] %v876
      // Predicated region
      $region33: #{discriminator_forward.8} parent=27 // pred_check
        %p941 = pneg %p192
      $region34: #{discriminator_forward.8} parent=27 // pred_check_branch
        %943 = sbr.rel (%p941) target = $region36
      $region35: #{discriminator_forward.8} parent=27 // pred_region
        %v944 = vld [vmem:[#allocation2] sm:$0xff]
        %v945 = vld [vmem:[#allocation2 + $0x8] sm:$0xff]
        %v946 = vld [vmem:[#allocation2 + $0x10] sm:$0xff]
        %v947 = vld [vmem:[#allocation2 + $0x18] sm:$0xff]
        %v948 = vld [vmem:[#allocation2 + $0x20] sm:$0xff]
        %v949 = vld [vmem:[#allocation2 + $0x28] sm:$0xff]
        %v950 = vld [vmem:[#allocation2 + $0x30] sm:$0xff]
        %v951 = vld [vmem:[#allocation2 + $0x38] sm:$0xff]
        %v952 = vld [vmem:[#allocation2 + $0x40] sm:$0xff]
        %v953 = vld [vmem:[#allocation2 + $0x48] sm:$0xff]
        %v954 = vld [vmem:[#allocation2 + $0x50] sm:$0xff]
        %v955 = vld [vmem:[#allocation2 + $0x58] sm:$0xff]
        %v956 = vld [vmem:[#allocation2 + $0x60] sm:$0xff]
        %v957 = vld [vmem:[#allocation2 + $0x68] sm:$0xff]
        %v958 = vld [vmem:[#allocation2 + $0x70] sm:$0xff]
        %v959 = vld [vmem:[#allocation2 + $0x78] sm:$0xff]
        %v960 = vld [vmem:[#allocation2 + $0x80] sm:$0xff]
        %v961 = vld [vmem:[#allocation2 + $0x88] sm:$0xff]
        %v962 = vld [vmem:[#allocation2 + $0x90] sm:$0xff]
        %v963 = vld [vmem:[#allocation2 + $0x98] sm:$0xff]
        %v964 = vld [vmem:[#allocation2 + $0xa0] sm:$0xff]
        %v965 = vld [vmem:[#allocation2 + $0xa8] sm:$0xff]
        %v966 = vld [vmem:[#allocation2 + $0xb0] sm:$0xff]
        %v967 = vld [vmem:[#allocation2 + $0xb8] sm:$0xff]
        %v968 = vld [vmem:[#allocation2 + $0xc0] sm:$0xff]
        %v969 = vld [vmem:[#allocation2 + $0xc8] sm:$0xff]
        %v970 = vld [vmem:[#allocation2 + $0xd0] sm:$0xff]
        %v971 = vld [vmem:[#allocation2 + $0xd8] sm:$0xff]
        %v972 = vld [vmem:[#allocation2 + $0xe0] sm:$0xff]
        %v973 = vld [vmem:[#allocation2 + $0xe8] sm:$0xff]
        %v974 = vld [vmem:[#allocation2 + $0xf0] sm:$0xff]
        %v975 = vld [vmem:[#allocation2 + $0xf8] sm:$0xff]
        %v976 = vld [vmem:[#allocation2 + $0x100] sm:$0xff]
        %v977 = vld [vmem:[#allocation2 + $0x108] sm:$0xff]
        %v978 = vld [vmem:[#allocation2 + $0x110] sm:$0xff]
        %v979 = vld [vmem:[#allocation2 + $0x118] sm:$0xff]
        %v980 = vld [vmem:[#allocation2 + $0x120] sm:$0xff]
        %v981 = vld [vmem:[#allocation2 + $0x128] sm:$0xff]
        %v982 = vld [vmem:[#allocation2 + $0x130] sm:$0xff]
        %v983 = vld [vmem:[#allocation2 + $0x138] sm:$0xff]
        %v984 = vld [vmem:[#allocation2 + $0x140] sm:$0xff]
        %v985 = vld [vmem:[#allocation2 + $0x148] sm:$0xff]
        %v986 = vld [vmem:[#allocation2 + $0x150] sm:$0xff]
        %v987 = vld [vmem:[#allocation2 + $0x158] sm:$0xff]
        %v988 = vld [vmem:[#allocation2 + $0x160] sm:$0xff]
        %v989 = vld [vmem:[#allocation2 + $0x168] sm:$0xff]
        %v990 = vld [vmem:[#allocation2 + $0x170] sm:$0xff]
        %v991 = vld [vmem:[#allocation2 + $0x178] sm:$0xff]
        %v992 = vld [vmem:[#allocation2 + $0x180] sm:$0xff]
        %v993 = vld [vmem:[#allocation2 + $0x188] sm:$0xff]
        %v994 = vld [vmem:[#allocation2 + $0x190] sm:$0xff]
        %v995 = vld [vmem:[#allocation2 + $0x198] sm:$0xff]
        %v996 = vld [vmem:[#allocation2 + $0x1a0] sm:$0xff]
        %v997 = vld [vmem:[#allocation2 + $0x1a8] sm:$0xff]
        %v998 = vld [vmem:[#allocation2 + $0x1b0] sm:$0xff]
        %v999 = vld [vmem:[#allocation2 + $0x1b8] sm:$0xff]
        %v1000 = vld [vmem:[#allocation2 + $0x1c0] sm:$0xff]
        %v1001 = vld [vmem:[#allocation2 + $0x1c8] sm:$0xff]
        %v1002 = vld [vmem:[#allocation2 + $0x1d0] sm:$0xff]
        %v1003 = vld [vmem:[#allocation2 + $0x1d8] sm:$0xff]
        %v1004 = vld [vmem:[#allocation2 + $0x1e0] sm:$0xff]
        %v1005 = vld [vmem:[#allocation2 + $0x1e8] sm:$0xff]
        %v1006 = vld [vmem:[#allocation2 + $0x1f0] sm:$0xff]
        %v1007 = vld [vmem:[#allocation2 + $0x1f8] sm:$0xff]
        %vm1008 = vcmp.ge.f32.partialorder %v944, 0.0
        %vm1009 = vcmp.ge.f32.partialorder %v945, 0.0
        %vm1010 = vcmp.ge.f32.partialorder %v946, 0.0
        %vm1011 = vcmp.ge.f32.partialorder %v947, 0.0
        %vm1012 = vcmp.ge.f32.partialorder %v948, 0.0
        %vm1013 = vcmp.ge.f32.partialorder %v949, 0.0
        %vm1014 = vcmp.ge.f32.partialorder %v950, 0.0
        %vm1015 = vcmp.ge.f32.partialorder %v951, 0.0
        %vm1016 = vcmp.ge.f32.partialorder %v952, 0.0
        %vm1017 = vcmp.ge.f32.partialorder %v953, 0.0
        %vm1018 = vcmp.ge.f32.partialorder %v954, 0.0
        %vm1019 = vcmp.ge.f32.partialorder %v955, 0.0
        %vm1020 = vcmp.ge.f32.partialorder %v956, 0.0
        %vm1021 = vcmp.ge.f32.partialorder %v957, 0.0
        %vm1022 = vcmp.ge.f32.partialorder %v958, 0.0
        %vm1023 = vcmp.ge.f32.partialorder %v959, 0.0
        %vm1024 = vcmp.ge.f32.partialorder %v960, 0.0
        %vm1025 = vcmp.ge.f32.partialorder %v961, 0.0
        %vm1026 = vcmp.ge.f32.partialorder %v962, 0.0
        %vm1027 = vcmp.ge.f32.partialorder %v963, 0.0
        %vm1028 = vcmp.ge.f32.partialorder %v964, 0.0
        %vm1029 = vcmp.ge.f32.partialorder %v965, 0.0
        %vm1030 = vcmp.ge.f32.partialorder %v966, 0.0
        %vm1031 = vcmp.ge.f32.partialorder %v967, 0.0
        %vm1032 = vcmp.ge.f32.partialorder %v968, 0.0
        %vm1033 = vcmp.ge.f32.partialorder %v969, 0.0
        %vm1034 = vcmp.ge.f32.partialorder %v970, 0.0
        %vm1035 = vcmp.ge.f32.partialorder %v971, 0.0
        %vm1036 = vcmp.ge.f32.partialorder %v972, 0.0
        %vm1037 = vcmp.ge.f32.partialorder %v973, 0.0
        %vm1038 = vcmp.ge.f32.partialorder %v974, 0.0
        %vm1039 = vcmp.ge.f32.partialorder %v975, 0.0
        %vm1040 = vcmp.ge.f32.partialorder %v976, 0.0
        %vm1041 = vcmp.ge.f32.partialorder %v977, 0.0
        %vm1042 = vcmp.ge.f32.partialorder %v978, 0.0
        %vm1043 = vcmp.ge.f32.partialorder %v979, 0.0
        %vm1044 = vcmp.ge.f32.partialorder %v980, 0.0
        %vm1045 = vcmp.ge.f32.partialorder %v981, 0.0
        %vm1046 = vcmp.ge.f32.partialorder %v982, 0.0
        %vm1047 = vcmp.ge.f32.partialorder %v983, 0.0
        %vm1048 = vcmp.ge.f32.partialorder %v984, 0.0
        %vm1049 = vcmp.ge.f32.partialorder %v985, 0.0
        %vm1050 = vcmp.ge.f32.partialorder %v986, 0.0
        %vm1051 = vcmp.ge.f32.partialorder %v987, 0.0
        %vm1052 = vcmp.ge.f32.partialorder %v988, 0.0
        %vm1053 = vcmp.ge.f32.partialorder %v989, 0.0
        %vm1054 = vcmp.ge.f32.partialorder %v990, 0.0
        %vm1055 = vcmp.ge.f32.partialorder %v991, 0.0
        %vm1056 = vcmp.ge.f32.partialorder %v992, 0.0
        %vm1057 = vcmp.ge.f32.partialorder %v993, 0.0
        %vm1058 = vcmp.ge.f32.partialorder %v994, 0.0
        %vm1059 = vcmp.ge.f32.partialorder %v995, 0.0
        %vm1060 = vcmp.ge.f32.partialorder %v996, 0.0
        %vm1061 = vcmp.ge.f32.partialorder %v997, 0.0
        %vm1062 = vcmp.ge.f32.partialorder %v998, 0.0
        %vm1063 = vcmp.ge.f32.partialorder %v999, 0.0
        %vm1064 = vcmp.ge.f32.partialorder %v1000, 0.0
        %vm1065 = vcmp.ge.f32.partialorder %v1001, 0.0
        %vm1066 = vcmp.ge.f32.partialorder %v1002, 0.0
        %vm1067 = vcmp.ge.f32.partialorder %v1003, 0.0
        %vm1068 = vcmp.ge.f32.partialorder %v1004, 0.0
        %vm1069 = vcmp.ge.f32.partialorder %v1005, 0.0
        %vm1070 = vcmp.ge.f32.partialorder %v1006, 0.0
        %vm1071 = vcmp.ge.f32.partialorder %v1007, 0.0
        %v1072 = vmul.f32 %v944, 0.2
        %v1073 = vmul.f32 %v945, 0.2
        %v1074 = vmul.f32 %v946, 0.2
        %v1075 = vmul.f32 %v947, 0.2
        %v1076 = vmul.f32 %v948, 0.2
        %v1077 = vmul.f32 %v949, 0.2
        %v1078 = vmul.f32 %v950, 0.2
        %v1079 = vmul.f32 %v951, 0.2
        %v1080 = vmul.f32 %v952, 0.2
        %v1081 = vmul.f32 %v953, 0.2
        %v1082 = vmul.f32 %v954, 0.2
        %v1083 = vmul.f32 %v955, 0.2
        %v1084 = vmul.f32 %v956, 0.2
        %v1085 = vmul.f32 %v957, 0.2
        %v1086 = vmul.f32 %v958, 0.2
        %v1087 = vmul.f32 %v959, 0.2
        %v1088 = vmul.f32 %v960, 0.2
        %v1089 = vmul.f32 %v961, 0.2
        %v1090 = vmul.f32 %v962, 0.2
        %v1091 = vmul.f32 %v963, 0.2
        %v1092 = vmul.f32 %v964, 0.2
        %v1093 = vmul.f32 %v965, 0.2
        %v1094 = vmul.f32 %v966, 0.2
        %v1095 = vmul.f32 %v967, 0.2
        %v1096 = vmul.f32 %v968, 0.2
        %v1097 = vmul.f32 %v969, 0.2
        %v1098 = vmul.f32 %v970, 0.2
        %v1099 = vmul.f32 %v971, 0.2
        %v1100 = vmul.f32 %v972, 0.2
        %v1101 = vmul.f32 %v973, 0.2
        %v1102 = vmul.f32 %v974, 0.2
        %v1103 = vmul.f32 %v975, 0.2
        %v1104 = vmul.f32 %v976, 0.2
        %v1105 = vmul.f32 %v977, 0.2
        %v1106 = vmul.f32 %v978, 0.2
        %v1107 = vmul.f32 %v979, 0.2
        %v1108 = vmul.f32 %v980, 0.2
        %v1109 = vmul.f32 %v981, 0.2
        %v1110 = vmul.f32 %v982, 0.2
        %v1111 = vmul.f32 %v983, 0.2
        %v1112 = vmul.f32 %v984, 0.2
        %v1113 = vmul.f32 %v985, 0.2
        %v1114 = vmul.f32 %v986, 0.2
        %v1115 = vmul.f32 %v987, 0.2
        %v1116 = vmul.f32 %v988, 0.2
        %v1117 = vmul.f32 %v989, 0.2
        %v1118 = vmul.f32 %v990, 0.2
        %v1119 = vmul.f32 %v991, 0.2
        %v1120 = vmul.f32 %v992, 0.2
        %v1121 = vmul.f32 %v993, 0.2
        %v1122 = vmul.f32 %v994, 0.2
        %v1123 = vmul.f32 %v995, 0.2
        %v1124 = vmul.f32 %v996, 0.2
        %v1125 = vmul.f32 %v997, 0.2
        %v1126 = vmul.f32 %v998, 0.2
        %v1127 = vmul.f32 %v999, 0.2
        %v1128 = vmul.f32 %v1000, 0.2
        %v1129 = vmul.f32 %v1001, 0.2
        %v1130 = vmul.f32 %v1002, 0.2
        %v1131 = vmul.f32 %v1003, 0.2
        %v1132 = vmul.f32 %v1004, 0.2
        %v1133 = vmul.f32 %v1005, 0.2
        %v1134 = vmul.f32 %v1006, 0.2
        %v1135 = vmul.f32 %v1007, 0.2
        %v1136 = vsel %vm1008, %v944, %v1072
        %v1137 = vsel %vm1009, %v945, %v1073
        %v1138 = vsel %vm1010, %v946, %v1074
        %v1139 = vsel %vm1011, %v947, %v1075
        %v1140 = vsel %vm1012, %v948, %v1076
        %v1141 = vsel %vm1013, %v949, %v1077
        %v1142 = vsel %vm1014, %v950, %v1078
        %v1143 = vsel %vm1015, %v951, %v1079
        %v1144 = vsel %vm1016, %v952, %v1080
        %v1145 = vsel %vm1017, %v953, %v1081
        %v1146 = vsel %vm1018, %v954, %v1082
        %v1147 = vsel %vm1019, %v955, %v1083
        %v1148 = vsel %vm1020, %v956, %v1084
        %v1149 = vsel %vm1021, %v957, %v1085
        %v1150 = vsel %vm1022, %v958, %v1086
        %v1151 = vsel %vm1023, %v959, %v1087
        %v1152 = vsel %vm1024, %v960, %v1088
        %v1153 = vsel %vm1025, %v961, %v1089
        %v1154 = vsel %vm1026, %v962, %v1090
        %v1155 = vsel %vm1027, %v963, %v1091
        %v1156 = vsel %vm1028, %v964, %v1092
        %v1157 = vsel %vm1029, %v965, %v1093
        %v1158 = vsel %vm1030, %v966, %v1094
        %v1159 = vsel %vm1031, %v967, %v1095
        %v1160 = vsel %vm1032, %v968, %v1096
        %v1161 = vsel %vm1033, %v969, %v1097
        %v1162 = vsel %vm1034, %v970, %v1098
        %v1163 = vsel %vm1035, %v971, %v1099
        %v1164 = vsel %vm1036, %v972, %v1100
        %v1165 = vsel %vm1037, %v973, %v1101
        %v1166 = vsel %vm1038, %v974, %v1102
        %v1167 = vsel %vm1039, %v975, %v1103
        %v1168 = vsel %vm1040, %v976, %v1104
        %v1169 = vsel %vm1041, %v977, %v1105
        %v1170 = vsel %vm1042, %v978, %v1106
        %v1171 = vsel %vm1043, %v979, %v1107
        %v1172 = vsel %vm1044, %v980, %v1108
        %v1173 = vsel %vm1045, %v981, %v1109
        %v1174 = vsel %vm1046, %v982, %v1110
        %v1175 = vsel %vm1047, %v983, %v1111
        %v1176 = vsel %vm1048, %v984, %v1112
        %v1177 = vsel %vm1049, %v985, %v1113
        %v1178 = vsel %vm1050, %v986, %v1114
        %v1179 = vsel %vm1051, %v987, %v1115
        %v1180 = vsel %vm1052, %v988, %v1116
        %v1181 = vsel %vm1053, %v989, %v1117
        %v1182 = vsel %vm1054, %v990, %v1118
        %v1183 = vsel %vm1055, %v991, %v1119
        %v1184 = vsel %vm1056, %v992, %v1120
        %v1185 = vsel %vm1057, %v993, %v1121
        %v1186 = vsel %vm1058, %v994, %v1122
        %v1187 = vsel %vm1059, %v995, %v1123
        %v1188 = vsel %vm1060, %v996, %v1124
        %v1189 = vsel %vm1061, %v997, %v1125
        %v1190 = vsel %vm1062, %v998, %v1126
        %v1191 = vsel %vm1063, %v999, %v1127
        %v1192 = vsel %vm1064, %v1000, %v1128
        %v1193 = vsel %vm1065, %v1001, %v1129
        %v1194 = vsel %vm1066, %v1002, %v1130
        %v1195 = vsel %vm1067, %v1003, %v1131
        %v1196 = vsel %vm1068, %v1004, %v1132
        %v1197 = vsel %vm1069, %v1005, %v1133
        %v1198 = vsel %vm1070, %v1006, %v1134
        %v1199 = vsel %vm1071, %v1007, %v1135
        %v1200 = vpack.c.bf16 %v1136, %v1136
        %v1201 = vpack.c.bf16 %v1137, %v1137
        %v1202 = vpack.c.bf16 %v1138, %v1138
        %v1203 = vpack.c.bf16 %v1139, %v1139
        %v1204 = vpack.c.bf16 %v1140, %v1140
        %v1205 = vpack.c.bf16 %v1141, %v1141
        %v1206 = vpack.c.bf16 %v1142, %v1142
        %v1207 = vpack.c.bf16 %v1143, %v1143
        %v1208 = vpack.c.bf16 %v1144, %v1144
        %v1209 = vpack.c.bf16 %v1145, %v1145
        %v1210 = vpack.c.bf16 %v1146, %v1146
        %v1211 = vpack.c.bf16 %v1147, %v1147
        %v1212 = vpack.c.bf16 %v1148, %v1148
        %v1213 = vpack.c.bf16 %v1149, %v1149
        %v1214 = vpack.c.bf16 %v1150, %v1150
        %v1215 = vpack.c.bf16 %v1151, %v1151
        %v1216 = vpack.c.bf16 %v1152, %v1152
        %v1217 = vpack.c.bf16 %v1153, %v1153
        %v1218 = vpack.c.bf16 %v1154, %v1154
        %v1219 = vpack.c.bf16 %v1155, %v1155
        %v1220 = vpack.c.bf16 %v1156, %v1156
        %v1221 = vpack.c.bf16 %v1157, %v1157
        %v1222 = vpack.c.bf16 %v1158, %v1158
        %v1223 = vpack.c.bf16 %v1159, %v1159
        %v1224 = vpack.c.bf16 %v1160, %v1160
        %v1225 = vpack.c.bf16 %v1161, %v1161
        %v1226 = vpack.c.bf16 %v1162, %v1162
        %v1227 = vpack.c.bf16 %v1163, %v1163
        %v1228 = vpack.c.bf16 %v1164, %v1164
        %v1229 = vpack.c.bf16 %v1165, %v1165
        %v1230 = vpack.c.bf16 %v1166, %v1166
        %v1231 = vpack.c.bf16 %v1167, %v1167
        %v1232 = vpack.c.bf16 %v1168, %v1168
        %v1233 = vpack.c.bf16 %v1169, %v1169
        %v1234 = vpack.c.bf16 %v1170, %v1170
        %v1235 = vpack.c.bf16 %v1171, %v1171
        %v1236 = vpack.c.bf16 %v1172, %v1172
        %v1237 = vpack.c.bf16 %v1173, %v1173
        %v1238 = vpack.c.bf16 %v1174, %v1174
        %v1239 = vpack.c.bf16 %v1175, %v1175
        %v1240 = vpack.c.bf16 %v1176, %v1176
        %v1241 = vpack.c.bf16 %v1177, %v1177
        %v1242 = vpack.c.bf16 %v1178, %v1178
        %v1243 = vpack.c.bf16 %v1179, %v1179
        %v1244 = vpack.c.bf16 %v1180, %v1180
        %v1245 = vpack.c.bf16 %v1181, %v1181
        %v1246 = vpack.c.bf16 %v1182, %v1182
        %v1247 = vpack.c.bf16 %v1183, %v1183
        %v1248 = vpack.c.bf16 %v1184, %v1184
        %v1249 = vpack.c.bf16 %v1185, %v1185
        %v1250 = vpack.c.bf16 %v1186, %v1186
        %v1251 = vpack.c.bf16 %v1187, %v1187
        %v1252 = vpack.c.bf16 %v1188, %v1188
        %v1253 = vpack.c.bf16 %v1189, %v1189
        %v1254 = vpack.c.bf16 %v1190, %v1190
        %v1255 = vpack.c.bf16 %v1191, %v1191
        %v1256 = vpack.c.bf16 %v1192, %v1192
        %v1257 = vpack.c.bf16 %v1193, %v1193
        %v1258 = vpack.c.bf16 %v1194, %v1194
        %v1259 = vpack.c.bf16 %v1195, %v1195
        %v1260 = vpack.c.bf16 %v1196, %v1196
        %v1261 = vpack.c.bf16 %v1197, %v1197
        %v1262 = vpack.c.bf16 %v1198, %v1198
        %v1263 = vpack.c.bf16 %v1199, %v1199
        %1264 = vst [vmem:[%s190] sm:$0xf] %v1200
        %1265 = vst [vmem:[%s190 + $0x4] sm:$0xf] %v1201
        %1266 = vst [vmem:[%s190 + $0x8] sm:$0xf] %v1202
        %1267 = vst [vmem:[%s190 + $0xc] sm:$0xf] %v1203
        %1268 = vst [vmem:[%s190 + $0x10] sm:$0xf] %v1204
        %1269 = vst [vmem:[%s190 + $0x14] sm:$0xf] %v1205
        %1270 = vst [vmem:[%s190 + $0x18] sm:$0xf] %v1206
        %1271 = vst [vmem:[%s190 + $0x1c] sm:$0xf] %v1207
        %1272 = vst [vmem:[%s190 + $0x20] sm:$0xf] %v1208
        %1273 = vst [vmem:[%s190 + $0x24] sm:$0xf] %v1209
        %1274 = vst [vmem:[%s190 + $0x28] sm:$0xf] %v1210
        %1275 = vst [vmem:[%s190 + $0x2c] sm:$0xf] %v1211
        %1276 = vst [vmem:[%s190 + $0x30] sm:$0xf] %v1212
        %1277 = vst [vmem:[%s190 + $0x34] sm:$0xf] %v1213
        %1278 = vst [vmem:[%s190 + $0x38] sm:$0xf] %v1214
        %1279 = vst [vmem:[%s190 + $0x3c] sm:$0xf] %v1215
        %1280 = vst [vmem:[%s190 + $0x40] sm:$0xf] %v1216
        %1281 = vst [vmem:[%s190 + $0x44] sm:$0xf] %v1217
        %1282 = vst [vmem:[%s190 + $0x48] sm:$0xf] %v1218
        %1283 = vst [vmem:[%s190 + $0x4c] sm:$0xf] %v1219
        %1284 = vst [vmem:[%s190 + $0x50] sm:$0xf] %v1220
        %1285 = vst [vmem:[%s190 + $0x54] sm:$0xf] %v1221
        %1286 = vst [vmem:[%s190 + $0x58] sm:$0xf] %v1222
        %1287 = vst [vmem:[%s190 + $0x5c] sm:$0xf] %v1223
        %1288 = vst [vmem:[%s190 + $0x60] sm:$0xf] %v1224
        %1289 = vst [vmem:[%s190 + $0x64] sm:$0xf] %v1225
        %1290 = vst [vmem:[%s190 + $0x68] sm:$0xf] %v1226
        %1291 = vst [vmem:[%s190 + $0x6c] sm:$0xf] %v1227
        %1292 = vst [vmem:[%s190 + $0x70] sm:$0xf] %v1228
        %1293 = vst [vmem:[%s190 + $0x74] sm:$0xf] %v1229
        %1294 = vst [vmem:[%s190 + $0x78] sm:$0xf] %v1230
        %1295 = vst [vmem:[%s190 + $0x7c] sm:$0xf] %v1231
        %1296 = vst [vmem:[%s190 + $0x80] sm:$0xf] %v1232
        %1297 = vst [vmem:[%s190 + $0x84] sm:$0xf] %v1233
        %1298 = vst [vmem:[%s190 + $0x88] sm:$0xf] %v1234
        %1299 = vst [vmem:[%s190 + $0x8c] sm:$0xf] %v1235
        %1300 = vst [vmem:[%s190 + $0x90] sm:$0xf] %v1236
        %1301 = vst [vmem:[%s190 + $0x94] sm:$0xf] %v1237
        %1302 = vst [vmem:[%s190 + $0x98] sm:$0xf] %v1238
        %1303 = vst [vmem:[%s190 + $0x9c] sm:$0xf] %v1239
        %1304 = vst [vmem:[%s190 + $0xa0] sm:$0xf] %v1240
        %1305 = vst [vmem:[%s190 + $0xa4] sm:$0xf] %v1241
        %1306 = vst [vmem:[%s190 + $0xa8] sm:$0xf] %v1242
        %1307 = vst [vmem:[%s190 + $0xac] sm:$0xf] %v1243
        %1308 = vst [vmem:[%s190 + $0xb0] sm:$0xf] %v1244
        %1309 = vst [vmem:[%s190 + $0xb4] sm:$0xf] %v1245
        %1310 = vst [vmem:[%s190 + $0xb8] sm:$0xf] %v1246
        %1311 = vst [vmem:[%s190 + $0xbc] sm:$0xf] %v1247
        %1312 = vst [vmem:[%s190 + $0xc0] sm:$0xf] %v1248
        %1313 = vst [vmem:[%s190 + $0xc4] sm:$0xf] %v1249
        %1314 = vst [vmem:[%s190 + $0xc8] sm:$0xf] %v1250
        %1315 = vst [vmem:[%s190 + $0xcc] sm:$0xf] %v1251
        %1316 = vst [vmem:[%s190 + $0xd0] sm:$0xf] %v1252
        %1317 = vst [vmem:[%s190 + $0xd4] sm:$0xf] %v1253
        %1318 = vst [vmem:[%s190 + $0xd8] sm:$0xf] %v1254
        %1319 = vst [vmem:[%s190 + $0xdc] sm:$0xf] %v1255
        %1320 = vst [vmem:[%s190 + $0xe0] sm:$0xf] %v1256
        %1321 = vst [vmem:[%s190 + $0xe4] sm:$0xf] %v1257
        %1322 = vst [vmem:[%s190 + $0xe8] sm:$0xf] %v1258
        %1323 = vst [vmem:[%s190 + $0xec] sm:$0xf] %v1259
        %1324 = vst [vmem:[%s190 + $0xf0] sm:$0xf] %v1260
        %1325 = vst [vmem:[%s190 + $0xf4] sm:$0xf] %v1261
        %1326 = vst [vmem:[%s190 + $0xf8] sm:$0xf] %v1262
        %1327 = vst [vmem:[%s190 + $0xfc] sm:$0xf] %v1263
      $region36: #{discriminator_forward.8} parent=27 // pred_fallthru
        _
      %s1328 = smul.u32 64, %s17
      %p1329 = scmp.lt.s32.totalorder %s1328, 255
      %s1330 = scalar_select %p1329, %s1328, 255
      %s1331 = smul.addr %s1330, 4
      %s1332 = scalar_lea.vmem %s2, %s1331
      // Predicated region
      $region37: #{discriminator_forward.8} parent=27 // pred_check
        %p1333 = pneg %p97
      $region38: #{discriminator_forward.8} parent=27 // pred_check_branch
        %1335 = sbr.rel (%p1333) target = $region40
      $region39: #{discriminator_forward.8} parent=27 // pred_region
        %s1336 = smul.u32 64, %s17
      $region40: #{discriminator_forward.8} parent=27 // pred_fallthru
        _
    $region28: #{discriminator_forward.8} parent=5 // pred_fallthru
      _
    %p1337 = scmp.le.s32.totalorder 2, %s8
    // Predicated region
    $region41: #{discriminator_forward.8} parent=5 // pred_check
      %p1338 = pneg %p1337
    $region42: #{discriminator_forward.8} parent=5 // pred_check_branch
      %1340 = sbr.rel (%p1338) target = $region44
    $region43: #{discriminator_forward.8} parent=5 // pred_region
      %s1341 = ssub.s32 %s8, 2
      // Predicated region
      $region45: #{discriminator_forward.8} parent=43 // pred_check
        %p1342 = pneg %p103
      $region46: #{discriminator_forward.8} parent=43 // pred_check_branch
        %1344 = sbr.rel (%p1342) target = $region48
      $region47: #{discriminator_forward.8} parent=43 // pred_region
        %s1345 = smul.u32 64, %s19
        %p1346 = scmp.lt.s32.totalorder %s1345, 255
        %s1347 = scalar_select %p1346, %s1345, 255
        %s1348 = smul.addr %s1347, 4
        %s1349 = scalar_lea.vmem %s2, %s1348
      $region48: #{discriminator_forward.8} parent=43 // pred_fallthru
        _
    $region44: #{discriminator_forward.8} parent=5 // pred_fallthru
      _
  $region6: #{discriminator_forward.8} parent=0 // loop_footer
    %s12 = sadd.s32 1, %s8
  $region7: #{discriminator_forward.8} parent=0 // loop_footer_branch
    %7 = sbr.rel target = $region3
  $region8: #{discriminator_forward.8} parent=0 // loop_exit
    _

// kernel: discriminator_forward.9
$region0: #{discriminator_forward.9}
  #allocation0 [shape = 'u32[]', space=smem, size = 0x4, offset = 0x4, fixed_abs, tag = 'smem constant byte address 0x4 - core index']
  #allocation1 [shape = 'u32[72,128]{1,0:T(1,128)}', space=vmem, size = 0x9000, scoped, tag = 'internal scratch']
  #allocation2 [shape = 'f32[256,128]{1,0:T(8,128)}', space=vmem, size = 0x20000, scoped, tag = 'scratch operand']
  %s0 = inlined_call_operand.vmem [shape: bf16[512,128], index: 0, kind: input, shape index: {}]
  %s1 = inlined_call_operand.vmem [shape: bf16[128,128], index: 1, kind: input, shape index: {}]
  %s2 = inlined_call_operand.vmem [shape: bf16[512,128], index: 2, kind: output, shape index: {0}]
  %s3 = inlined_call_operand.vmem [shape: f32[2,2,128], index: 3, kind: output, shape index: {1}]
  %4 = xla_tuple %s2, %s3
  %s5 = sld [smem:[#allocation0]]
  $region57: #{discriminator_forward.9} parent=0
    _
  %s7 = ssub.s32 1, %s5
  %s8 = scalar_select 0, %s7, %s5
  loop: start=0, step=1, limit=4
  $region2: #{discriminator_forward.9} parent=0 // loop_pre_header
    _
  $region3: #{discriminator_forward.9} parent=0 // loop_header
    %s10 = sphi 0, %s14
    %p11 = scmp.ge.s32.totalorder %s10, 4
    %s17 = sphi 0, %s29
    %s18 = sphi 0, %s25
    %s19 = sphi 0, %s17
    %s20 = sphi 0, %s18
    %s21 = sphi 0, %s19
    %s22 = sphi 0, %s20
    %s34 = sphi 0, %s36
    %s37 = sphi 0, %s34
    %s38 = sphi 0, %s37
    %s54 = sphi 0, %s38
    %s60 = sphi 0, %s62
    %s63 = sphi 0, %s60
    %s64 = sphi 0, %s63
    %s80 = sphi 0, %s64
    %s86 = sphi 0, %s88
    %s89 = sphi 0, %s86
    %s90 = sphi 0, %s89
    %s106 = sphi 0, %s90
    %s112 = sphi 0, %s114
    %s115 = sphi 0, %s112
    %s116 = sphi 0, %s115
    %s132 = sphi 0, %s116
  $region4: #{discriminator_forward.9} parent=0 // loop_header_branch
    %13 = sbr.rel (%p11) target = $region8
  $region5: #{discriminator_forward.9} parent=0 // loop_body
    %s15 = ssub.s32 %s10, 1
    %s16 = ssub.s32 %s10, 2
    %s23 = sadd.s32 1, %s18
    %p24 = scmp.ge.s32.totalorder %s23, 1
    %s25 = scalar_select %p24, 0, %s23
    %s26 = sadd.s32 1, %s17
    %s27 = scalar_select %p24, %s26, %s17
    %p28 = scmp.ge.s32.totalorder %s27, 2
    %s29 = scalar_select %p28, 0, %s27
    %s30 = ssub.s32 %s17, %s29
    %s31 = ssub.s32 %s18, %s25
    %s32 = sor.u32 %s30, %s31
    %p33 = scmp.eq.s32.totalorder %s32, 0
    %s35 = sadd.s32 %s34, 1
    %s36 = scalar_select %p33, %s34, %s35
    %p39 = pneg %p33
    %p40 = scmp.eq.s32.totalorder %s10, 1
    %p41 = por %p39, %p40
    %p42 = scmp.ne.s32.totalorder %s34, %s37
    %p43 = scmp.eq.s32.totalorder %s10, 0
    %p44 = por %p42, %p43
    %p45 = scmp.ne.s32.totalorder %s34, %s37
    %p46 = scmp.eq.s32.totalorder %s15, 1
    %p47 = por %p45, %p46
    %p48 = scmp.ne.s32.totalorder %s37, %s38
    %p49 = scmp.eq.s32.totalorder %s15, 0
    %p50 = por %p48, %p49
    %p51 = scmp.ne.s32.totalorder %s37, %s38
    %p52 = scmp.eq.s32.totalorder %s16, 1
    %p53 = por %p51, %p52
    %p55 = scmp.ne.s32.totalorder %s38, %s54
    %p56 = scmp.eq.s32.totalorder %s16, 0
    %p57 = por %p55, %p56
    %s58 = ssub.s32 %s18, %s25
    %p59 = scmp.eq.s32.totalorder %s58, 0
    %s61 = sadd.s32 %s60, 1
    %s62 = scalar_select %p59, %s60, %s61
    %p65 = pneg %p59
    %p66 = scmp.eq.s32.totalorder %s10, 1
    %p67 = por %p65, %p66
    %p68 = scmp.ne.s32.totalorder %s60, %s63
    %p69 = scmp.eq.s32.totalorder %s10, 0
    %p70 = por %p68, %p69
    %p71 = scmp.ne.s32.totalorder %s60, %s63
    %p72 = scmp.eq.s32.totalorder %s15, 1
    %p73 = por %p71, %p72
    %p74 = scmp.ne.s32.totalorder %s63, %s64
    %p75 = scmp.eq.s32.totalorder %s15, 0
    %p76 = por %p74, %p75
    %p77 = scmp.ne.s32.totalorder %s63, %s64
    %p78 = scmp.eq.s32.totalorder %s16, 1
    %p79 = por %p77, %p78
    %p81 = scmp.ne.s32.totalorder %s64, %s80
    %p82 = scmp.eq.s32.totalorder %s16, 0
    %p83 = por %p81, %p82
    %s84 = ssub.s32 %s17, %s29
    %p85 = scmp.eq.s32.totalorder %s84, 0
    %s87 = sadd.s32 %s86, 1
    %s88 = scalar_select %p85, %s86, %s87
    %p91 = pneg %p85
    %p92 = scmp.eq.s32.totalorder %s10, 1
    %p93 = por %p91, %p92
    %p94 = scmp.ne.s32.totalorder %s86, %s89
    %p95 = scmp.eq.s32.totalorder %s10, 0
    %p96 = por %p94, %p95
    %p97 = scmp.ne.s32.totalorder %s86, %s89
    %p98 = scmp.eq.s32.totalorder %s15, 1
    %p99 = por %p97, %p98
    %p100 = scmp.ne.s32.totalorder %s89, %s90
    %p101 = scmp.eq.s32.totalorder %s15, 0
    %p102 = por %p100, %p101
    %p103 = scmp.ne.s32.totalorder %s89, %s90
    %p104 = scmp.eq.s32.totalorder %s16, 1
    %p105 = por %p103, %p104
    %p107 = scmp.ne.s32.totalorder %s90, %s106
    %p108 = scmp.eq.s32.totalorder %s16, 0
    %p109 = por %p107, %p108
    %s110 = ssub.s32 %s17, %s29
    %p111 = scmp.eq.s32.totalorder %s110, 0
    %s113 = sadd.s32 %s112, 1
    %s114 = scalar_select %p111, %s112, %s113
    %p117 = pneg %p111
    %p118 = scmp.eq.s32.totalorder %s10, 1
    %p119 = por %p117, %p118
    %p120 = scmp.ne.s32.totalorder %s112, %s115
    %p121 = scmp.eq.s32.totalorder %s10, 0
    %p122 = por %p120, %p121
    %p123 = scmp.ne.s32.totalorder %s112, %s115
    %p124 = scmp.eq.s32.totalorder %s15, 1
    %p125 = por %p123, %p124
    %p126 = scmp.ne.s32.totalorder %s115, %s116
    %p127 = scmp.eq.s32.totalorder %s15, 0
    %p128 = por %p126, %p127
    %p129 = scmp.ne.s32.totalorder %s115, %s116
    %p130 = scmp.eq.s32.totalorder %s16, 1
    %p131 = por %p129, %p130
    %p133 = scmp.ne.s32.totalorder %s116, %s132
    %p134 = scmp.eq.s32.totalorder %s16, 0
    %p135 = por %p133, %p134
    %p136 = scmp.le.s32.totalorder 1, %s10
    %p137 = scmp.lt.s32.totalorder %s10, 3
    %p138 = pnand %p136, %p137
    %p139 = pneg %p138
    // Predicated region
    $region9: #{discriminator_forward.9} parent=5 // pred_check
      _
    $region10: #{discriminator_forward.9} parent=5 // pred_check_branch
      %141 = sbr.rel (%p138) target = $region12
    $region11: #{discriminator_forward.9} parent=5 // pred_region
      %s142 = ssub.s32 %s10, 1
      // Predicated region
      $region13: #{discriminator_forward.9} parent=11 // pred_check
        %p143 = pneg %p76
      $region14: #{discriminator_forward.9} parent=11 // pred_check_branch
        %145 = sbr.rel (%p143) target = $region16
      $region15: #{discriminator_forward.9} parent=11 // pred_region
        %s146 = smul.u32 16, %s20
        %p147 = scmp.lt.s32.totalorder %s146, 15
        %s148 = scalar_select %p147, %s146, 15
        %s149 = smul.addr %s148, 4
        %s150 = scalar_lea.vmem %s1, %s149
        %s151 = smul.u32 16, %s20
      $region16: #{discriminator_forward.9} parent=11 // pred_fallthru
        _
    $region12: #{discriminator_forward.9} parent=5 // pred_fallthru
      _
    %p152 = scmp.lt.s32.totalorder %s10, 2
    // Predicated region
    $region17: #{discriminator_forward.9} parent=5 // pred_check
      %p153 = pneg %p152
    $region18: #{discriminator_forward.9} parent=5 // pred_check_branch
      %155 = sbr.rel (%p153) target = $region20
    $region19: #{discriminator_forward.9} parent=5 // pred_region
      // Predicated region
      $region21: #{discriminator_forward.9} parent=19 // pred_check
        %p156 = pneg %p44
      $region22: #{discriminator_forward.9} parent=19 // pred_check_branch
        %158 = sbr.rel (%p156) target = $region24
      $region23: #{discriminator_forward.9} parent=19 // pred_region
        %s159 = smul.u32 32, %s17
        %p160 = scmp.lt.s32.totalorder %s159, 63
        %s161 = scalar_select %p160, %s159, 63
        %p162 = scmp.lt.s32.totalorder %s18, 0
        %s163 = scalar_select %p162, %s18, 0
        %s164 = sadd.s32 %s163, %s161
        %s165 = smul.addr %s164, 4
        %s166 = scalar_lea.vmem %s0, %s165
        %s167 = smul.u32 32, %s17
      $region24: #{discriminator_forward.9} parent=19 // pred_fallthru
        _
    $region20: #{discriminator_forward.9} parent=5 // pred_fallthru
      _
    %p168 = scmp.le.s32.totalorder 1, %s10
    %p169 = scmp.lt.s32.totalorder %s10, 3
    %p170 = pnand %p168, %p169
    %p171 = pneg %p170
    // Predicated region
    $region25: #{discriminator_forward.9} parent=5 // pred_check
      _
    $region26: #{discriminator_forward.9} parent=5 // pred_check_branch
      %173 = sbr.rel (%p170) target = $region28
    $region27: #{discriminator_forward.9} parent=5 // pred_region
      %s174 = ssub.s32 %s10, 1
      %s175 = smul.u32 32, %s19
      %p176 = scmp.lt.s32.totalorder %s175, 63
      %s177 = scalar_select %p176, %s175, 63
      %p178 = scmp.lt.s32.totalorder %s20, 0
      %s179 = scalar_select %p178, %s20, 0
      %s180 = sadd.s32 %s179, %s177
      %s181 = smul.addr %s180, 4
      %s182 = scalar_lea.vmem %s0, %s181
      %p183 = pneg %p50
      %p184 = pneg %p47
      %s185 = smul.u32 16, %s20
      %p186 = scmp.lt.s32.totalorder %s185, 15
      %s187 = scalar_select %p186, %s185, 15
      %s188 = smul.addr %s187, 4
      %s189 = scalar_lea.vmem %s1, %s188
      %p190 = pneg %p76
      %p191 = pneg %p73
      %p192 = pneg %p102
      %p193 = pneg %p99
      %s194 = smul.u32 32, %s19
      %p195 = scmp.lt.s32.totalorder %s194, 63
      %s196 = scalar_select %p195, %s194, 63
      %s197 = smul.addr %s196, 4
      %s198 = scalar_lea.vmem %s2, %s197
      %p199 = pneg %p128
      %p200 = pneg %p125
      %p201 = scmp.lt.s32.totalorder %s19, 1
      %s202 = scalar_select %p201, %s19, 1
      %s203 = smul.addr %s202, 2
      %s204 = scalar_lea.vmem %s3, %s203
      %s205 = smul.u32 32, %s19
      %p206 = scmp.lt.s32.totalorder %s205, 63
      %s207 = scalar_select %p206, %s205, 63
      %p208 = scmp.lt.s32.totalorder %s20, 0
      %s209 = scalar_select %p208, %s20, 0
      %s210 = sadd.s32 %s209, %s207
      %s211 = smul.addr %s210, 4
      %s212 = scalar_lea.vmem %s0, %s211
      %s213 = smul.u32 32, %s19
      %s214 = smul.u32 16, %s20
      %p215 = scmp.lt.s32.totalorder %s214, 15
      %s216 = scalar_select %p215, %s214, 15
      %s217 = smul.addr %s216, 4
      %s218 = scalar_lea.vmem %s1, %s217
      %s219 = smul.u32 16, %s20
      %s220 = smul.u32 32, %s19
      %p221 = scmp.lt.s32.totalorder %s220, 63
      %s222 = scalar_select %p221, %s220, 63
      %s223 = smul.addr %s222, 4
      %s224 = scalar_lea.vmem %s2, %s223
      %s225 = smul.u32 32, %s19
      %p226 = scmp.lt.s32.totalorder %s19, 1
      %s227 = scalar_select %p226, %s19, 1
      %s228 = smul.addr %s227, 2
      %s229 = scalar_lea.vmem %s3, %s228
      %p230 = scmp.eq.s32.totalorder %s20, 0
      // Predicated region
      $region29: #{discriminator_forward.9} parent=27 // pred_check
        %p231 = pneg %p230
      $region30: #{discriminator_forward.9} parent=27 // pred_check_branch
        %233 = sbr.rel (%p231) target = $region32
      $region31: #{discriminator_forward.9} parent=27 // pred_region
        %234 = vst [vmem:[#allocation2] sm:$0xff] 0.0
        %235 = vst [vmem:[#allocation2 + $0x8] sm:$0xff] 0.0
        %236 = vst [vmem:[#allocation2 + $0x10] sm:$0xff] 0.0
        %237 = vst [vmem:[#allocation2 + $0x18] sm:$0xff] 0.0
        %238 = vst [vmem:[#allocation2 + $0x20] sm:$0xff] 0.0
        %239 = vst [vmem:[#allocation2 + $0x28] sm:$0xff] 0.0
        %240 = vst [vmem:[#allocation2 + $0x30] sm:$0xff] 0.0
        %241 = vst [vmem:[#allocation2 + $0x38] sm:$0xff] 0.0
        %242 = vst [vmem:[#allocation2 + $0x40] sm:$0xff] 0.0
        %243 = vst [vmem:[#allocation2 + $0x48] sm:$0xff] 0.0
        %244 = vst [vmem:[#allocation2 + $0x50] sm:$0xff] 0.0
        %245 = vst [vmem:[#allocation2 + $0x58] sm:$0xff] 0.0
        %246 = vst [vmem:[#allocation2 + $0x60] sm:$0xff] 0.0
        %247 = vst [vmem:[#allocation2 + $0x68] sm:$0xff] 0.0
        %248 = vst [vmem:[#allocation2 + $0x70] sm:$0xff] 0.0
        %249 = vst [vmem:[#allocation2 + $0x78] sm:$0xff] 0.0
        %250 = vst [vmem:[#allocation2 + $0x80] sm:$0xff] 0.0
        %251 = vst [vmem:[#allocation2 + $0x88] sm:$0xff] 0.0
        %252 = vst [vmem:[#allocation2 + $0x90] sm:$0xff] 0.0
        %253 = vst [vmem:[#allocation2 + $0x98] sm:$0xff] 0.0
        %254 = vst [vmem:[#allocation2 + $0xa0] sm:$0xff] 0.0
        %255 = vst [vmem:[#allocation2 + $0xa8] sm:$0xff] 0.0
        %256 = vst [vmem:[#allocation2 + $0xb0] sm:$0xff] 0.0
        %257 = vst [vmem:[#allocation2 + $0xb8] sm:$0xff] 0.0
        %258 = vst [vmem:[#allocation2 + $0xc0] sm:$0xff] 0.0
        %259 = vst [vmem:[#allocation2 + $0xc8] sm:$0xff] 0.0
        %260 = vst [vmem:[#allocation2 + $0xd0] sm:$0xff] 0.0
        %261 = vst [vmem:[#allocation2 + $0xd8] sm:$0xff] 0.0
        %262 = vst [vmem:[#allocation2 + $0xe0] sm:$0xff] 0.0
        %263 = vst [vmem:[#allocation2 + $0xe8] sm:$0xff] 0.0
        %264 = vst [vmem:[#allocation2 + $0xf0] sm:$0xff] 0.0
        %265 = vst [vmem:[#allocation2 + $0xf8] sm:$0xff] 0.0
      $region32: #{discriminator_forward.9} parent=27 // pred_fallthru
        _
      %v266 = vld [vmem:[#allocation2] sm:$0xff]
      %v267 = vld [vmem:[#allocation2 + $0x8] sm:$0xff]
      %v268 = vld [vmem:[#allocation2 + $0x10] sm:$0xff]
      %v269 = vld [vmem:[#allocation2 + $0x18] sm:$0xff]
      %v270 = vld [vmem:[#allocation2 + $0x20] sm:$0xff]
      %v271 = vld [vmem:[#allocation2 + $0x28] sm:$0xff]
      %v272 = vld [vmem:[#allocation2 + $0x30] sm:$0xff]
      %v273 = vld [vmem:[#allocation2 + $0x38] sm:$0xff]
      %v274 = vld [vmem:[#allocation2 + $0x40] sm:$0xff]
      %v275 = vld [vmem:[#allocation2 + $0x48] sm:$0xff]
      %v276 = vld [vmem:[#allocation2 + $0x50] sm:$0xff]
      %v277 = vld [vmem:[#allocation2 + $0x58] sm:$0xff]
      %v278 = vld [vmem:[#allocation2 + $0x60] sm:$0xff]
      %v279 = vld [vmem:[#allocation2 + $0x68] sm:$0xff]
      %v280 = vld [vmem:[#allocation2 + $0x70] sm:$0xff]
      %v281 = vld [vmem:[#allocation2 + $0x78] sm:$0xff]
      %v282 = vld [vmem:[#allocation2 + $0x80] sm:$0xff]
      %v283 = vld [vmem:[#allocation2 + $0x88] sm:$0xff]
      %v284 = vld [vmem:[#allocation2 + $0x90] sm:$0xff]
      %v285 = vld [vmem:[#allocation2 + $0x98] sm:$0xff]
      %v286 = vld [vmem:[#allocation2 + $0xa0] sm:$0xff]
      %v287 = vld [vmem:[#allocation2 + $0xa8] sm:$0xff]
      %v288 = vld [vmem:[#allocation2 + $0xb0] sm:$0xff]
      %v289 = vld [vmem:[#allocation2 + $0xb8] sm:$0xff]
      %v290 = vld [vmem:[#allocation2 + $0xc0] sm:$0xff]
      %v291 = vld [vmem:[#allocation2 + $0xc8] sm:$0xff]
      %v292 = vld [vmem:[#allocation2 + $0xd0] sm:$0xff]
      %v293 = vld [vmem:[#allocation2 + $0xd8] sm:$0xff]
      %v294 = vld [vmem:[#allocation2 + $0xe0] sm:$0xff]
      %v295 = vld [vmem:[#allocation2 + $0xe8] sm:$0xff]
      %v296 = vld [vmem:[#allocation2 + $0xf0] sm:$0xff]
      %v297 = vld [vmem:[#allocation2 + $0xf8] sm:$0xff]
      %v298 = vld [vmem:[%s212] sm:$0xf]
      %v299 = vld [vmem:[%s212 + $0x4] sm:$0xf]
      %v300 = vld [vmem:[%s212 + $0x8] sm:$0xf]
      %v301 = vld [vmem:[%s212 + $0xc] sm:$0xf]
      %v302 = vld [vmem:[%s212 + $0x10] sm:$0xf]
      %v303 = vld [vmem:[%s212 + $0x14] sm:$0xf]
      %v304 = vld [vmem:[%s212 + $0x18] sm:$0xf]
      %v305 = vld [vmem:[%s212 + $0x1c] sm:$0xf]
      %v306 = vld [vmem:[%s212 + $0x20] sm:$0xf]
      %v307 = vld [vmem:[%s212 + $0x24] sm:$0xf]
      %v308 = vld [vmem:[%s212 + $0x28] sm:$0xf]
      %v309 = vld [vmem:[%s212 + $0x2c] sm:$0xf]
      %v310 = vld [vmem:[%s212 + $0x30] sm:$0xf]
      %v311 = vld [vmem:[%s212 + $0x34] sm:$0xf]
      %v312 = vld [vmem:[%s212 + $0x38] sm:$0xf]
      %v313 = vld [vmem:[%s212 + $0x3c] sm:$0xf]
      %v314 = vld [vmem:[%s212 + $0x40] sm:$0xf]
      %v315 = vld [vmem:[%s212 + $0x44] sm:$0xf]
      %v316 = vld [vmem:[%s212 + $0x48] sm:$0xf]
      %v317 = vld [vmem:[%s212 + $0x4c] sm:$0xf]
      %v318 = vld [vmem:[%s212 + $0x50] sm:$0xf]
      %v319 = vld [vmem:[%s212 + $0x54] sm:$0xf]
      %v320 = vld [vmem:[%s212 + $0x58] sm:$0xf]
      %v321 = vld [vmem:[%s212 + $0x5c] sm:$0xf]
      %v322 = vld [vmem:[%s212 + $0x60] sm:$0xf]
      %v323 = vld [vmem:[%s212 + $0x64] sm:$0xf]
      %v324 = vld [vmem:[%s212 + $0x68] sm:$0xf]
      %v325 = vld [vmem:[%s212 + $0x6c] sm:$0xf]
      %v326 = vld [vmem:[%s212 + $0x70] sm:$0xf]
      %v327 = vld [vmem:[%s212 + $0x74] sm:$0xf]
      %v328 = vld [vmem:[%s212 + $0x78] sm:$0xf]
      %v329 = vld [vmem:[%s212 + $0x7c] sm:$0xf]
      %v330 = vld [vmem:[%s218] sm:$0xf]
      %v331 = vld [vmem:[%s218 + $0x4] sm:$0xf]
      %v332 = vld [vmem:[%s218 + $0x8] sm:$0xf]
      %v333 = vld [vmem:[%s218 + $0xc] sm:$0xf]
      %v334 = vld [vmem:[%s218 + $0x10] sm:$0xf]
      %v335 = vld [vmem:[%s218 + $0x14] sm:$0xf]
      %v336 = vld [vmem:[%s218 + $0x18] sm:$0xf]
      %v337 = vld [vmem:[%s218 + $0x1c] sm:$0xf]
      %v338 = vld [vmem:[%s218 + $0x20] sm:$0xf]
      %v339 = vld [vmem:[%s218 + $0x24] sm:$0xf]
      %v340 = vld [vmem:[%s218 + $0x28] sm:$0xf]
      %v341 = vld [vmem:[%s218 + $0x2c] sm:$0xf]
      %v342 = vld [vmem:[%s218 + $0x30] sm:$0xf]
      %v343 = vld [vmem:[%s218 + $0x34] sm:$0xf]
      %v344 = vld [vmem:[%s218 + $0x38] sm:$0xf]
      %v345 = vld [vmem:[%s218 + $0x3c] sm:$0xf]
      %v378 = vunpack.c.l.b16 %v298
      %v379 = vunpack.c.l.b16 %v299
      %v380 = vunpack.c.l.b16 %v300
      %v381 = vunpack.c.l.b16 %v301
      %v382 = vunpack.c.l.b16 %v302
      %v383 = vunpack.c.l.b16 %v303
      %v384 = vunpack.c.l.b16 %v304
      %v385 = vunpack.c.l.b16 %v305
      %v386 = vunpack.c.l.b16 %v306
      %v387 = vunpack.c.l.b16 %v307
      %v388 = vunpack.c.l.b16 %v308
      %v389 = vunpack.c.l.b16 %v309
      %v390 = vunpack.c.l.b16 %v310
      %v391 = vunpack.c.l.b16 %v311
      %v392 = vunpack.c.l.b16 %v312
      %v393 = vunpack.c.l.b16 %v313
      %v394 = vunpack.c.l.b16 %v314
      %v395 = vunpack.c.l.b16 %v315
      %v396 = vunpack.c.l.b16 %v316
      %v397 = vunpack.c.l.b16 %v317
      %v398 = vunpack.c.l.b16 %v318
      %v399 = vunpack.c.l.b16 %v319
      %v400 = vunpack.c.l.b16 %v320
      %v401 = vunpack.c.l.b16 %v321
      %v402 = vunpack.c.l.b16 %v322
      %v403 = vunpack.c.l.b16 %v323
      %v404 = vunpack.c.l.b16 %v324
      %v405 = vunpack.c.l.b16 %v325
      %v406 = vunpack.c.l.b16 %v326
      %v407 = vunpack.c.l.b16 %v327
      %v408 = vunpack.c.l.b16 %v328
      %v409 = vunpack.c.l.b16 %v329
      %v410 = vpack.c.b16 %v379, %v378
      %v411 = vpack.c.b16 %v381, %v380
      %v412 = vpack.c.b16 %v383, %v382
      %v413 = vpack.c.b16 %v385, %v384
      %v414 = vpack.c.b16 %v387, %v386
      %v415 = vpack.c.b16 %v389, %v388
      %v416 = vpack.c.b16 %v391, %v390
      %v417 = vpack.c.b16 %v393, %v392
      %v418 = vpack.c.b16 %v395, %v394
      %v419 = vpack.c.b16 %v397, %v396
      %v420 = vpack.c.b16 %v399, %v398
      %v421 = vpack.c.b16 %v401, %v400
      %v422 = vpack.c.b16 %v403, %v402
      %v423 = vpack.c.b16 %v405, %v404
      %v424 = vpack.c.b16 %v407, %v406
      %v425 = vpack.c.b16 %v409, %v408
      %v458 = vunpack.c.l.b16 %v330
      %v459 = vunpack.c.l.b16 %v331
      %v460 = vunpack.c.l.b16 %v332
      %v461 = vunpack.c.l.b16 %v333
      %v462 = vunpack.c.l.b16 %v334
      %v463 = vunpack.c.l.b16 %v335
      %v464 = vunpack.c.l.b16 %v336
      %v465 = vunpack.c.l.b16 %v337
      %v466 = vunpack.c.l.b16 %v338
      %v467 = vunpack.c.l.b16 %v339
      %v468 = vunpack.c.l.b16 %v340
      %v469 = vunpack.c.l.b16 %v341
      %v470 = vunpack.c.l.b16 %v342
      %v471 = vunpack.c.l.b16 %v343
      %v472 = vunpack.c.l.b16 %v344
      %v473 = vunpack.c.l.b16 %v345
      %v474 = vpack.c.b16 %v459, %v458
      %v475 = vpack.c.b16 %v461, %v460
      %v476 = vpack.c.b16 %v463, %v462
      %v477 = vpack.c.b16 %v465, %v464
      %v478 = vpack.c.b16 %v467, %v466
      %v479 = vpack.c.b16 %v469, %v468
      %v480 = vpack.c.b16 %v471, %v470
      %v481 = vpack.c.b16 %v473, %v472
      %490 = vmatpush.bf16.msra.mxu0 %v481
      %491 = vmatpush.bf16.msra.mxu0 %v480
      %492 = vmatpush.bf16.msra.mxu0 %v479
      %493 = vmatpush.bf16.msra.mxu0 %v478
      %494 = vmatpush.bf16.msra.mxu0 %v477
      %495 = vmatpush.bf16.msra.mxu0 %v476
      %496 = vmatpush.bf16.msra.mxu0 %v475
      %497 = vmatpush.bf16.msra.mxu0 %v474
      %498 = vmatmul.bf16.gmra.mxu0 %v410
      %v499 = vpop.f32.mrf.mxu0
      %v500 = vadd.f32 0.0, %v499
      %v501 = vpop.f32.mrf.mxu0
      %v502 = vadd.f32 0.0, %v501
      %503 = vmatmul.bf16.gmra.mxu0 %v411
      %v504 = vpop.f32.mrf.mxu0
      %v505 = vadd.f32 0.0, %v504
      %v506 = vpop.f32.mrf.mxu0
      %v507 = vadd.f32 0.0, %v506
      %508 = vmatmul.bf16.gmra.mxu0 %v412
      %v509 = vpop.f32.mrf.mxu0
      %v510 = vadd.f32 0.0, %v509
      %v511 = vpop.f32.mrf.mxu0
      %v512 = vadd.f32 0.0, %v511
      %513 = vmatmul.bf16.gmra.mxu0 %v413
      %v514 = vpop.f32.mrf.mxu0
      %v515 = vadd.f32 0.0, %v514
      %v516 = vpop.f32.mrf.mxu0
      %v517 = vadd.f32 0.0, %v516
      %518 = vmatmul.bf16.gmra.mxu0 %v414
      %v519 = vpop.f32.mrf.mxu0
      %v520 = vadd.f32 0.0, %v519
      %v521 = vpop.f32.mrf.mxu0
      %v522 = vadd.f32 0.0, %v521
      %523 = vmatmul.bf16.gmra.mxu0 %v415
      %v524 = vpop.f32.mrf.mxu0
      %v525 = vadd.f32 0.0, %v524
      %v526 = vpop.f32.mrf.mxu0
      %v527 = vadd.f32 0.0, %v526
      %528 = vmatmul.bf16.gmra.mxu0 %v416
      %v529 = vpop.f32.mrf.mxu0
      %v530 = vadd.f32 0.0, %v529
      %v531 = vpop.f32.mrf.mxu0
      %v532 = vadd.f32 0.0, %v531
      %533 = vmatmul.bf16.gmra.mxu0 %v417
      %v534 = vpop.f32.mrf.mxu0
      %v535 = vadd.f32 0.0, %v534
      %v536 = vpop.f32.mrf.mxu0
      %v537 = vadd.f32 0.0, %v536
      %538 = vmatmul.bf16.gmra.mxu0 %v418
      %v539 = vpop.f32.mrf.mxu0
      %v540 = vadd.f32 0.0, %v539
      %v541 = vpop.f32.mrf.mxu0
      %v542 = vadd.f32 0.0, %v541
      %543 = vmatmul.bf16.gmra.mxu0 %v419
      %v544 = vpop.f32.mrf.mxu0
      %v545 = vadd.f32 0.0, %v544
      %v546 = vpop.f32.mrf.mxu0
      %v547 = vadd.f32 0.0, %v546
      %548 = vmatmul.bf16.gmra.mxu0 %v420
      %v549 = vpop.f32.mrf.mxu0
      %v550 = vadd.f32 0.0, %v549
      %v551 = vpop.f32.mrf.mxu0
      %v552 = vadd.f32 0.0, %v551
      %553 = vmatmul.bf16.gmra.mxu0 %v421
      %v554 = vpop.f32.mrf.mxu0
      %v555 = vadd.f32 0.0, %v554
      %v556 = vpop.f32.mrf.mxu0
      %v557 = vadd.f32 0.0, %v556
      %558 = vmatmul.bf16.gmra.mxu0 %v422
      %v559 = vpop.f32.mrf.mxu0
      %v560 = vadd.f32 0.0, %v559
      %v561 = vpop.f32.mrf.mxu0
      %v562 = vadd.f32 0.0, %v561
      %563 = vmatmul.bf16.gmra.mxu0 %v423
      %v564 = vpop.f32.mrf.mxu0
      %v565 = vadd.f32 0.0, %v564
      %v566 = vpop.f32.mrf.mxu0
      %v567 = vadd.f32 0.0, %v566
      %568 = vmatmul.bf16.gmra.mxu0 %v424
      %v569 = vpop.f32.mrf.mxu0
      %v570 = vadd.f32 0.0, %v569
      %v571 = vpop.f32.mrf.mxu0
      %v572 = vadd.f32 0.0, %v571
      %573 = vmatmul.bf16.gmra.mxu0 %v425
      %v574 = vpop.f32.mrf.mxu0
      %v575 = vadd.f32 0.0, %v574
      %v576 = vpop.f32.mrf.mxu0
      %v577 = vadd.f32 0.0, %v576
      %578 = vdwg.mxu0
      %v579 = vadd.f32 %v266, %v500
      %v580 = vadd.f32 %v267, %v502
      %v581 = vadd.f32 %v268, %v505
      %v582 = vadd.f32 %v269, %v507
      %v583 = vadd.f32 %v270, %v510
      %v584 = vadd.f32 %v271, %v512
      %v585 = vadd.f32 %v272, %v515
      %v586 = vadd.f32 %v273, %v517
      %v587 = vadd.f32 %v274, %v520
      %v588 = vadd.f32 %v275, %v522
      %v589 = vadd.f32 %v276, %v525
      %v590 = vadd.f32 %v277, %v527
      %v591 = vadd.f32 %v278, %v530
      %v592 = vadd.f32 %v279, %v532
      %v593 = vadd.f32 %v280, %v535
      %v594 = vadd.f32 %v281, %v537
      %v595 = vadd.f32 %v282, %v540
      %v596 = vadd.f32 %v283, %v542
      %v597 = vadd.f32 %v284, %v545
      %v598 = vadd.f32 %v285, %v547
      %v599 = vadd.f32 %v286, %v550
      %v600 = vadd.f32 %v287, %v552
      %v601 = vadd.f32 %v288, %v555
      %v602 = vadd.f32 %v289, %v557
      %v603 = vadd.f32 %v290, %v560
      %v604 = vadd.f32 %v291, %v562
      %v605 = vadd.f32 %v292, %v565
      %v606 = vadd.f32 %v293, %v567
      %v607 = vadd.f32 %v294, %v570
      %v608 = vadd.f32 %v295, %v572
      %v609 = vadd.f32 %v296, %v575
      %v610 = vadd.f32 %v297, %v577
      %611 = vst [vmem:[#allocation2] sm:$0xff] %v579
      %612 = vst [vmem:[#allocation2 + $0x8] sm:$0xff] %v580
      %613 = vst [vmem:[#allocation2 + $0x10] sm:$0xff] %v581
      %614 = vst [vmem:[#allocation2 + $0x18] sm:$0xff] %v582
      %615 = vst [vmem:[#allocation2 + $0x20] sm:$0xff] %v583
      %616 = vst [vmem:[#allocation2 + $0x28] sm:$0xff] %v584
      %617 = vst [vmem:[#allocation2 + $0x30] sm:$0xff] %v585
      %618 = vst [vmem:[#allocation2 + $0x38] sm:$0xff] %v586
      %619 = vst [vmem:[#allocation2 + $0x40] sm:$0xff] %v587
      %620 = vst [vmem:[#allocation2 + $0x48] sm:$0xff] %v588
      %621 = vst [vmem:[#allocation2 + $0x50] sm:$0xff] %v589
      %622 = vst [vmem:[#allocation2 + $0x58] sm:$0xff] %v590
      %623 = vst [vmem:[#allocation2 + $0x60] sm:$0xff] %v591
      %624 = vst [vmem:[#allocation2 + $0x68] sm:$0xff] %v592
      %625 = vst [vmem:[#allocation2 + $0x70] sm:$0xff] %v593
      %626 = vst [vmem:[#allocation2 + $0x78] sm:$0xff] %v594
      %627 = vst [vmem:[#allocation2 + $0x80] sm:$0xff] %v595
      %628 = vst [vmem:[#allocation2 + $0x88] sm:$0xff] %v596
      %629 = vst [vmem:[#allocation2 + $0x90] sm:$0xff] %v597
      %630 = vst [vmem:[#allocation2 + $0x98] sm:$0xff] %v598
      %631 = vst [vmem:[#allocation2 + $0xa0] sm:$0xff] %v599
      %632 = vst [vmem:[#allocation2 + $0xa8] sm:$0xff] %v600
      %633 = vst [vmem:[#allocation2 + $0xb0] sm:$0xff] %v601
      %634 = vst [vmem:[#allocation2 + $0xb8] sm:$0xff] %v602
      %635 = vst [vmem:[#allocation2 + $0xc0] sm:$0xff] %v603
      %636 = vst [vmem:[#allocation2 + $0xc8] sm:$0xff] %v604
      %637 = vst [vmem:[#allocation2 + $0xd0] sm:$0xff] %v605
      %638 = vst [vmem:[#allocation2 + $0xd8] sm:$0xff] %v606
      %639 = vst [vmem:[#allocation2 + $0xe0] sm:$0xff] %v607
      %640 = vst [vmem:[#allocation2 + $0xe8] sm:$0xff] %v608
      %641 = vst [vmem:[#allocation2 + $0xf0] sm:$0xff] %v609
      %642 = vst [vmem:[#allocation2 + $0xf8] sm:$0xff] %v610
      // Predicated region
      $region33: #{discriminator_forward.9} parent=27 // pred_check
        %p643 = pneg %p230
      $region34: #{discriminator_forward.9} parent=27 // pred_check_branch
        %645 = sbr.rel (%p643) target = $region36
      $region35: #{discriminator_forward.9} parent=27 // pred_region
        %v646 = vld [vmem:[#allocation2] sm:$0xff]
        %v647 = vld [vmem:[#allocation2 + $0x8] sm:$0xff]
        %v648 = vld [vmem:[#allocation2 + $0x10] sm:$0xff]
        %v649 = vld [vmem:[#allocation2 + $0x18] sm:$0xff]
        %v650 = vld [vmem:[#allocation2 + $0x20] sm:$0xff]
        %v651 = vld [vmem:[#allocation2 + $0x28] sm:$0xff]
        %v652 = vld [vmem:[#allocation2 + $0x30] sm:$0xff]
        %v653 = vld [vmem:[#allocation2 + $0x38] sm:$0xff]
        %v654 = vld [vmem:[#allocation2 + $0x40] sm:$0xff]
        %v655 = vld [vmem:[#allocation2 + $0x48] sm:$0xff]
        %v656 = vld [vmem:[#allocation2 + $0x50] sm:$0xff]
        %v657 = vld [vmem:[#allocation2 + $0x58] sm:$0xff]
        %v658 = vld [vmem:[#allocation2 + $0x60] sm:$0xff]
        %v659 = vld [vmem:[#allocation2 + $0x68] sm:$0xff]
        %v660 = vld [vmem:[#allocation2 + $0x70] sm:$0xff]
        %v661 = vld [vmem:[#allocation2 + $0x78] sm:$0xff]
        %v662 = vld [vmem:[#allocation2 + $0x80] sm:$0xff]
        %v663 = vld [vmem:[#allocation2 + $0x88] sm:$0xff]
        %v664 = vld [vmem:[#allocation2 + $0x90] sm:$0xff]
        %v665 = vld [vmem:[#allocation2 + $0x98] sm:$0xff]
        %v666 = vld [vmem:[#allocation2 + $0xa0] sm:$0xff]
        %v667 = vld [vmem:[#allocation2 + $0xa8] sm:$0xff]
        %v668 = vld [vmem:[#allocation2 + $0xb0] sm:$0xff]
        %v669 = vld [vmem:[#allocation2 + $0xb8] sm:$0xff]
        %v670 = vld [vmem:[#allocation2 + $0xc0] sm:$0xff]
        %v671 = vld [vmem:[#allocation2 + $0xc8] sm:$0xff]
        %v672 = vld [vmem:[#allocation2 + $0xd0] sm:$0xff]
        %v673 = vld [vmem:[#allocation2 + $0xd8] sm:$0xff]
        %v674 = vld [vmem:[#allocation2 + $0xe0] sm:$0xff]
        %v675 = vld [vmem:[#allocation2 + $0xe8] sm:$0xff]
        %v676 = vld [vmem:[#allocation2 + $0xf0] sm:$0xff]
        %v677 = vld [vmem:[#allocation2 + $0xf8] sm:$0xff]
        %v678 = vpack.c.bf16 %v646, %v646
        %v679 = vpack.c.bf16 %v647, %v647
        %v680 = vpack.c.bf16 %v648, %v648
        %v681 = vpack.c.bf16 %v649, %v649
        %v682 = vpack.c.bf16 %v650, %v650
        %v683 = vpack.c.bf16 %v651, %v651
        %v684 = vpack.c.bf16 %v652, %v652
        %v685 = vpack.c.bf16 %v653, %v653
        %v686 = vpack.c.bf16 %v654, %v654
        %v687 = vpack.c.bf16 %v655, %v655
        %v688 = vpack.c.bf16 %v656, %v656
        %v689 = vpack.c.bf16 %v657, %v657
        %v690 = vpack.c.bf16 %v658, %v658
        %v691 = vpack.c.bf16 %v659, %v659
        %v692 = vpack.c.bf16 %v660, %v660
        %v693 = vpack.c.bf16 %v661, %v661
        %v694 = vpack.c.bf16 %v662, %v662
        %v695 = vpack.c.bf16 %v663, %v663
        %v696 = vpack.c.bf16 %v664, %v664
        %v697 = vpack.c.bf16 %v665, %v665
        %v698 = vpack.c.bf16 %v666, %v666
        %v699 = vpack.c.bf16 %v667, %v667
        %v700 = vpack.c.bf16 %v668, %v668
        %v701 = vpack.c.bf16 %v669, %v669
        %v702 = vpack.c.bf16 %v670, %v670
        %v703 = vpack.c.bf16 %v671, %v671
        %v704 = vpack.c.bf16 %v672, %v672
        %v705 = vpack.c.bf16 %v673, %v673
        %v706 = vpack.c.bf16 %v674, %v674
        %v707 = vpack.c.bf16 %v675, %v675
        %v708 = vpack.c.bf16 %v676, %v676
        %v709 = vpack.c.bf16 %v677, %v677
        %710 = vst [vmem:[%s224] sm:$0xf] %v678
        %711 = vst [vmem:[%s224 + $0x4] sm:$0xf] %v679
        %712 = vst [vmem:[%s224 + $0x8] sm:$0xf] %v680
        %713 = vst [vmem:[%s224 + $0xc] sm:$0xf] %v681
        %714 = vst [vmem:[%s224 + $0x10] sm:$0xf] %v682
        %715 = vst [vmem:[%s224 + $0x14] sm:$0xf] %v683
        %716 = vst [vmem:[%s224 + $0x18] sm:$0xf] %v684
        %717 = vst [vmem:[%s224 + $0x1c] sm:$0xf] %v685
        %718 = vst [vmem:[%s224 + $0x20] sm:$0xf] %v686
        %719 = vst [vmem:[%s224 + $0x24] sm:$0xf] %v687
        %720 = vst [vmem:[%s224 + $0x28] sm:$0xf] %v688
        %721 = vst [vmem:[%s224 + $0x2c] sm:$0xf] %v689
        %722 = vst [vmem:[%s224 + $0x30] sm:$0xf] %v690
        %723 = vst [vmem:[%s224 + $0x34] sm:$0xf] %v691
        %724 = vst [vmem:[%s224 + $0x38] sm:$0xf] %v692
        %725 = vst [vmem:[%s224 + $0x3c] sm:$0xf] %v693
        %726 = vst [vmem:[%s224 + $0x40] sm:$0xf] %v694
        %727 = vst [vmem:[%s224 + $0x44] sm:$0xf] %v695
        %728 = vst [vmem:[%s224 + $0x48] sm:$0xf] %v696
        %729 = vst [vmem:[%s224 + $0x4c] sm:$0xf] %v697
        %730 = vst [vmem:[%s224 + $0x50] sm:$0xf] %v698
        %731 = vst [vmem:[%s224 + $0x54] sm:$0xf] %v699
        %732 = vst [vmem:[%s224 + $0x58] sm:$0xf] %v700
        %733 = vst [vmem:[%s224 + $0x5c] sm:$0xf] %v701
        %734 = vst [vmem:[%s224 + $0x60] sm:$0xf] %v702
        %735 = vst [vmem:[%s224 + $0x64] sm:$0xf] %v703
        %736 = vst [vmem:[%s224 + $0x68] sm:$0xf] %v704
        %737 = vst [vmem:[%s224 + $0x6c] sm:$0xf] %v705
        %738 = vst [vmem:[%s224 + $0x70] sm:$0xf] %v706
        %739 = vst [vmem:[%s224 + $0x74] sm:$0xf] %v707
        %740 = vst [vmem:[%s224 + $0x78] sm:$0xf] %v708
        %741 = vst [vmem:[%s224 + $0x7c] sm:$0xf] %v709
        %v742 = vadd.f32 %v646, %v647
        %v743 = vadd.f32 %v742, %v648
        %v744 = vadd.f32 %v743, %v649
        %v745 = vadd.f32 %v744, %v650
        %v746 = vadd.f32 %v745, %v651
        %v747 = vadd.f32 %v746, %v652
        %v748 = vadd.f32 %v747, %v653
        %v749 = vadd.f32 %v748, %v654
        %v750 = vadd.f32 %v749, %v655
        %v751 = vadd.f32 %v750, %v656
        %v752 = vadd.f32 %v751, %v657
        %v753 = vadd.f32 %v752, %v658
        %v754 = vadd.f32 %v753, %v659
        %v755 = vadd.f32 %v754, %v660
        %v756 = vadd.f32 %v755, %v661
        %v757 = vadd.f32 %v756, %v662
        %v758 = vadd.f32 %v757, %v663
        %v759 = vadd.f32 %v758, %v664
        %v760 = vadd.f32 %v759, %v665
        %v761 = vadd.f32 %v760, %v666
        %v762 = vadd.f32 %v761, %v667
        %v763 = vadd.f32 %v762, %v668
        %v764 = vadd.f32 %v763, %v669
        %v765 = vadd.f32 %v764, %v670
        %v766 = vadd.f32 %v765, %v671
        %v767 = vadd.f32 %v766, %v672
        %v768 = vadd.f32 %v767, %v673
        %v769 = vadd.f32 %v768, %v674
        %v770 = vadd.f32 %v769, %v675
        %v771 = vadd.f32 %v770, %v676
        %v772 = vadd.f32 %v771, %v677
        %v773 = vrot.slane %v772, 4
        %v774 = vadd.f32 %v772, %v773
        %v775 = vrot.slane %v774, 2
        %v776 = vadd.f32 %v774, %v775
        %v777 = vrot.slane %v776, 1
        %v778 = vadd.f32 %v776, %v777
        %v779 = vmul.f32 %v646, %v646
        %v780 = vmul.f32 %v647, %v647
        %v781 = vmul.f32 %v648, %v648
        %v782 = vmul.f32 %v649, %v649
        %v783 = vmul.f32 %v650, %v650
        %v784 = vmul.f32 %v651, %v651
        %v785 = vmul.f32 %v652, %v652
        %v786 = vmul.f32 %v653, %v653
        %v787 = vmul.f32 %v654, %v654
        %v788 = vmul.f32 %v655, %v655
        %v789 = vmul.f32 %v656, %v656
        %v790 = vmul.f32 %v657, %v657
        %v791 = vmul.f32 %v658, %v658
        %v792 = vmul.f32 %v659, %v659
        %v793 = vmul.f32 %v660, %v660
        %v794 = vmul.f32 %v661, %v661
        %v795 = vmul.f32 %v662, %v662
        %v796 = vmul.f32 %v663, %v663
        %v797 = vmul.f32 %v664, %v664
        %v798 = vmul.f32 %v665, %v665
        %v799 = vmul.f32 %v666, %v666
        %v800 = vmul.f32 %v667, %v667
        %v801 = vmul.f32 %v668, %v668
        %v802 = vmul.f32 %v669, %v669
        %v803 = vmul.f32 %v670, %v670
        %v804 = vmul.f32 %v671, %v671
        %v805 = vmul.f32 %v672, %v672
        %v806 = vmul.f32 %v673, %v673
        %v807 = vmul.f32 %v674, %v674
        %v808 = vmul.f32 %v675, %v675
        %v809 = vmul.f32 %v676, %v676
        %v810 = vmul.f32 %v677, %v677
        %v811 = vadd.f32 %v779, %v780
        %v812 = vadd.f32 %v811, %v781
        %v813 = vadd.f32 %v812, %v782
        %v814 = vadd.f32 %v813, %v783
        %v815 = vadd.f32 %v814, %v784
        %v816 = vadd.f32 %v815, %v785
        %v817 = vadd.f32 %v816, %v786
        %v818 = vadd.f32 %v817, %v787
        %v819 = vadd.f32 %v818, %v788
        %v820 = vadd.f32 %v819, %v789
        %v821 = vadd.f32 %v820, %v790
        %v822 = vadd.f32 %v821, %v791
        %v823 = vadd.f32 %v822, %v792
        %v824 = vadd.f32 %v823, %v793
        %v825 = vadd.f32 %v824, %v794
        %v826 = vadd.f32 %v825, %v795
        %v827 = vadd.f32 %v826, %v796
        %v828 = vadd.f32 %v827, %v797
        %v829 = vadd.f32 %v828, %v798
        %v830 = vadd.f32 %v829, %v799
        %v831 = vadd.f32 %v830, %v800
        %v832 = vadd.f32 %v831, %v801
        %v833 = vadd.f32 %v832, %v802
        %v834 = vadd.f32 %v833, %v803
        %v835 = vadd.f32 %v834, %v804
        %v836 = vadd.f32 %v835, %v805
        %v837 = vadd.f32 %v836, %v806
        %v838 = vadd.f32 %v837, %v807
        %v839 = vadd.f32 %v838, %v808
        %v840 = vadd.f32 %v839, %v809
        %v841 = vadd.f32 %v840, %v810
        %v842 = vrot.slane %v841, 4
        %v843 = vadd.f32 %v841, %v842
        %v844 = vrot.slane %v843, 2
        %v845 = vadd.f32 %v843, %v844
        %v846 = vrot.slane %v845, 1
        %v847 = vadd.f32 %v845, %v846
        %vm848 = vcmask 1040384
        %v849 = vsel %vm848, %v778, %v847
        %850 = vst [vmem:[%s229] sm:$0x3] %v849
      $region36: #{discriminator_forward.9} parent=27 // pred_fallthru
        _
      %s851 = smul.u32 32, %s19
      %p852 = scmp.lt.s32.totalorder %s851, 63
      %s853 = scalar_select %p852, %s851, 63
      %s854 = smul.addr %s853, 4
      %s855 = scalar_lea.vmem %s2, %s854
      %p856 = scmp.lt.s32.totalorder %s19, 1
      %s857 = scalar_select %p856, %s19, 1
      %s858 = smul.addr %s857, 2
      %s859 = scalar_lea.vmem %s3, %s858
      // Predicated region
      $region37: #{discriminator_forward.9} parent=27 // pred_check
        %p860 = pneg %p99
      $region38: #{discriminator_forward.9} parent=27 // pred_check_branch
        %862 = sbr.rel (%p860) target = $region40
      $region39: #{discriminator_forward.9} parent=27 // pred_region
        %s863 = smul.u32 32, %s19
      $region40: #{discriminator_forward.9} parent=27 // pred_fallthru
        _
      // Predicated region
      $region41: #{discriminator_forward.9} parent=27 // pred_check
        %p864 = pneg %p125
      $region42: #{discriminator_forward.9} parent=27 // pred_check_branch
        %866 = sbr.rel (%p864) target = $region44
      $region43: #{discriminator_forward.9} parent=27 // pred_region
        _
      $region44: #{discriminator_forward.9} parent=27 // pred_fallthru
        _
    $region28: #{discriminator_forward.9} parent=5 // pred_fallthru
      _
    %p867 = scmp.le.s32.totalorder 2, %s10
    // Predicated region
    $region45: #{discriminator_forward.9} parent=5 // pred_check
      %p868 = pneg %p867
    $region46: #{discriminator_forward.9} parent=5 // pred_check_branch
      %870 = sbr.rel (%p868) target = $region48
    $region47: #{discriminator_forward.9} parent=5 // pred_region
      %s871 = ssub.s32 %s10, 2
      // Predicated region
      $region49: #{discriminator_forward.9} parent=47 // pred_check
        %p872 = pneg %p105
      $region50: #{discriminator_forward.9} parent=47 // pred_check_branch
        %874 = sbr.rel (%p872) target = $region52
      $region51: #{discriminator_forward.9} parent=47 // pred_region
        %s875 = smul.u32 32, %s21
        %p876 = scmp.lt.s32.totalorder %s875, 63
        %s877 = scalar_select %p876, %s875, 63
        %s878 = smul.addr %s877, 4
        %s879 = scalar_lea.vmem %s2, %s878
      $region52: #{discriminator_forward.9} parent=47 // pred_fallthru
        _
      // Predicated region
      $region53: #{discriminator_forward.9} parent=47 // pred_check
        %p880 = pneg %p131
      $region54: #{discriminator_forward.9} parent=47 // pred_check_branch
        %882 = sbr.rel (%p880) target = $region56
      $region55: #{discriminator_forward.9} parent=47 // pred_region
        %p883 = scmp.lt.s32.totalorder %s21, 1
        %s884 = scalar_select %p883, %s21, 1
        %s885 = smul.addr %s884, 2
        %s886 = scalar_lea.vmem %s3, %s885
      $region56: #{discriminator_forward.9} parent=47 // pred_fallthru
        _
    $region48: #{discriminator_forward.9} parent=5 // pred_fallthru
      _
  $region6: #{discriminator_forward.9} parent=0 // loop_footer
    %s14 = sadd.s32 1, %s10
  $region7: #{discriminator_forward.9} parent=0 // loop_footer_branch
    %9 = sbr.rel target = $region3
  $region8: #{discriminator_forward.9} parent=0 // loop_exit
    _

// kernel: discriminator_forward.10
$region0: #{discriminator_forward.10}
  #allocation0 [shape = 'u32[]', space=smem, size = 0x4, offset = 0x4, fixed_abs, tag = 'smem constant byte address 0x4 - core index']
  #allocation1 [shape = 'u32[72,128]{1,0:T(1,128)}', space=vmem, size = 0x9000, scoped, tag = 'internal scratch']
  %s0 = inlined_call_operand.vmem [shape: bf16[512,128], index: 0, kind: input, shape index: {}]
  %s1 = inlined_call_operand.vmem [shape: f32[1,128], index: 1, kind: input, shape index: {}]
  %s2 = inlined_call_operand.vmem [shape: f32[1,128], index: 2, kind: input, shape index: {}]
  %s3 = inlined_call_operand.vmem [shape: bf16[512,128], index: 3, kind: output, shape index: {}]
  %s4 = sld [smem:[#allocation0]]
  $region45: #{discriminator_forward.10} parent=0
    _
  %s6 = ssub.s32 1, %s4
  %s7 = scalar_select 0, %s6, %s4
  loop: start=0, step=1, limit=4
  $region2: #{discriminator_forward.10} parent=0 // loop_pre_header
    _
  $region3: #{discriminator_forward.10} parent=0 // loop_header
    %s9 = sphi 0, %s13
    %p10 = scmp.ge.s32.totalorder %s9, 4
    %s19 = sphi 0, %s21
    %s22 = sphi 0, %s19
    %s23 = sphi 0, %s22
    %s39 = sphi 0, %s23
    %s43 = sphi 0, %s43
    %s45 = sphi 0, %s43
    %s46 = sphi 0, %s45
    %s60 = sphi 0, %s46
    %s64 = sphi 0, %s64
    %s66 = sphi 0, %s64
    %s67 = sphi 0, %s66
    %s81 = sphi 0, %s67
    %s87 = sphi 0, %s89
    %s90 = sphi 0, %s87
    %s91 = sphi 0, %s90
    %s107 = sphi 0, %s91
  $region4: #{discriminator_forward.10} parent=0 // loop_header_branch
    %12 = sbr.rel (%p10) target = $region8
  $region5: #{discriminator_forward.10} parent=0 // loop_body
    %s14 = ssub.s32 %s9, 1
    %s15 = ssub.s32 %s9, 2
    %s16 = sadd.s32 %s9, 1
    %s17 = ssub.s32 %s9, %s16
    %p18 = scmp.eq.s32.totalorder %s17, 0
    %s20 = sadd.s32 %s19, 1
    %s21 = scalar_select %p18, %s19, %s20
    %p24 = pneg %p18
    %p25 = scmp.eq.s32.totalorder %s9, 1
    %p26 = por %p24, %p25
    %p27 = scmp.ne.s32.totalorder %s19, %s22
    %p28 = scmp.eq.s32.totalorder %s9, 0
    %p29 = por %p27, %p28
    %p30 = scmp.ne.s32.totalorder %s19, %s22
    %p31 = scmp.eq.s32.totalorder %s14, 1
    %p32 = por %p30, %p31
    %p33 = scmp.ne.s32.totalorder %s22, %s23
    %p34 = scmp.eq.s32.totalorder %s14, 0
    %p35 = por %p33, %p34
    %p36 = scmp.ne.s32.totalorder %s22, %s23
    %p37 = scmp.eq.s32.totalorder %s15, 1
    %p38 = por %p36, %p37
    %p40 = scmp.ne.s32.totalorder %s23, %s39
    %p41 = scmp.eq.s32.totalorder %s15, 0
    %p42 = por %p40, %p41
    %s44 = sadd.s32 %s43, 1
    %p47 = scmp.eq.s32.totalorder %s9, 1
    %p48 = scmp.ne.s32.totalorder %s43, %s45
    %p49 = scmp.eq.s32.totalorder %s9, 0
    %p50 = por %p48, %p49
    %p51 = scmp.ne.s32.totalorder %s43, %s45
    %p52 = scmp.eq.s32.totalorder %s14, 1
    %p53 = por %p51, %p52
    %p54 = scmp.ne.s32.totalorder %s45, %s46
    %p55 = scmp.eq.s32.totalorder %s14, 0
    %p56 = por %p54, %p55
    %p57 = scmp.ne.s32.totalorder %s45, %s46
    %p58 = scmp.eq.s32.totalorder %s15, 1
    %p59 = por %p57, %p58
    %p61 = scmp.ne.s32.totalorder %s46, %s60
    %p62 = scmp.eq.s32.totalorder %s15, 0
    %p63 = por %p61, %p62
    %s65 = sadd.s32 %s64, 1
    %p68 = scmp.eq.s32.totalorder %s9, 1
    %p69 = scmp.ne.s32.totalorder %s64, %s66
    %p70 = scmp.eq.s32.totalorder %s9, 0
    %p71 = por %p69, %p70
    %p72 = scmp.ne.s32.totalorder %s64, %s66
    %p73 = scmp.eq.s32.totalorder %s14, 1
    %p74 = por %p72, %p73
    %p75 = scmp.ne.s32.totalorder %s66, %s67
    %p76 = scmp.eq.s32.totalorder %s14, 0
    %p77 = por %p75, %p76
    %p78 = scmp.ne.s32.totalorder %s66, %s67
    %p79 = scmp.eq.s32.totalorder %s15, 1
    %p80 = por %p78, %p79
    %p82 = scmp.ne.s32.totalorder %s67, %s81
    %p83 = scmp.eq.s32.totalorder %s15, 0
    %p84 = por %p82, %p83
    %s85 = ssub.s32 %s9, %s16
    %p86 = scmp.eq.s32.totalorder %s85, 0
    %s88 = sadd.s32 %s87, 1
    %s89 = scalar_select %p86, %s87, %s88
    %p92 = pneg %p86
    %p93 = scmp.eq.s32.totalorder %s9, 1
    %p94 = por %p92, %p93
    %p95 = scmp.ne.s32.totalorder %s87, %s90
    %p96 = scmp.eq.s32.totalorder %s9, 0
    %p97 = por %p95, %p96
    %p98 = scmp.ne.s32.totalorder %s87, %s90
    %p99 = scmp.eq.s32.totalorder %s14, 1
    %p100 = por %p98, %p99
    %p101 = scmp.ne.s32.totalorder %s90, %s91
    %p102 = scmp.eq.s32.totalorder %s14, 0
    %p103 = por %p101, %p102
    %p104 = scmp.ne.s32.totalorder %s90, %s91
    %p105 = scmp.eq.s32.totalorder %s15, 1
    %p106 = por %p104, %p105
    %p108 = scmp.ne.s32.totalorder %s91, %s107
    %p109 = scmp.eq.s32.totalorder %s15, 0
    %p110 = por %p108, %p109
    %p111 = scmp.le.s32.totalorder 1, %s9
    %p112 = scmp.lt.s32.totalorder %s9, 3
    %p113 = pnand %p111, %p112
    %p114 = pneg %p113
    // Predicated region
    $region9: #{discriminator_forward.10} parent=5 // pred_check
      _
    $region10: #{discriminator_forward.10} parent=5 // pred_check_branch
      %116 = sbr.rel (%p113) target = $region12
    $region11: #{discriminator_forward.10} parent=5 // pred_region
      %s117 = ssub.s32 %s9, 1
      // Predicated region
      $region13: #{discriminator_forward.10} parent=11 // pred_check
        %p118 = pneg %p56
      $region14: #{discriminator_forward.10} parent=11 // pred_check_branch
        %120 = sbr.rel (%p118) target = $region16
      $region15: #{discriminator_forward.10} parent=11 // pred_region
        _
      $region16: #{discriminator_forward.10} parent=11 // pred_fallthru
        _
      // Predicated region
      $region17: #{discriminator_forward.10} parent=11 // pred_check
        %p121 = pneg %p77
      $region18: #{discriminator_forward.10} parent=11 // pred_check_branch
        %123 = sbr.rel (%p121) target = $region20
      $region19: #{discriminator_forward.10} parent=11 // pred_region
        _
      $region20: #{discriminator_forward.10} parent=11 // pred_fallthru
        _
    $region12: #{discriminator_forward.10} parent=5 // pred_fallthru
      _
    %p124 = scmp.lt.s32.totalorder %s9, 2
    // Predicated region
    $region21: #{discriminator_forward.10} parent=5 // pred_check
      %p125 = pneg %p124
    $region22: #{discriminator_forward.10} parent=5 // pred_check_branch
      %127 = sbr.rel (%p125) target = $region24
    $region23: #{discriminator_forward.10} parent=5 // pred_region
      // Predicated region
      $region25: #{discriminator_forward.10} parent=23 // pred_check
        %p128 = pneg %p29
      $region26: #{discriminator_forward.10} parent=23 // pred_check_branch
        %130 = sbr.rel (%p128) target = $region28
      $region27: #{discriminator_forward.10} parent=23 // pred_region
        %s131 = smul.u32 32, %s9
        %p132 = scmp.lt.s32.totalorder %s131, 63
        %s133 = scalar_select %p132, %s131, 63
        %s134 = smul.addr %s133, 4
        %s135 = scalar_lea.vmem %s0, %s134
        %s136 = smul.u32 32, %s9
      $region28: #{discriminator_forward.10} parent=23 // pred_fallthru
        _
    $region24: #{discriminator_forward.10} parent=5 // pred_fallthru
      _
    %p137 = scmp.le.s32.totalorder 1, %s9
    %p138 = scmp.lt.s32.totalorder %s9, 3
    %p139 = pnand %p137, %p138
    %p140 = pneg %p139
    // Predicated region
    $region29: #{discriminator_forward.10} parent=5 // pred_check
      _
    $region30: #{discriminator_forward.10} parent=5 // pred_check_branch
      %142 = sbr.rel (%p139) target = $region32
    $region31: #{discriminator_forward.10} parent=5 // pred_region
      %s143 = ssub.s32 %s9, 1
      %s144 = smul.u32 32, %s14
      %p145 = scmp.lt.s32.totalorder %s144, 63
      %s146 = scalar_select %p145, %s144, 63
      %s147 = smul.addr %s146, 4
      %s148 = scalar_lea.vmem %s0, %s147
      %p149 = pneg %p35
      %p150 = pneg %p32
      %p151 = pneg %p56
      %p152 = pneg %p53
      %p153 = pneg %p77
      %p154 = pneg %p74
      %p155 = pneg %p103
      %p156 = pneg %p100
      %s157 = smul.u32 32, %s14
      %p158 = scmp.lt.s32.totalorder %s157, 63
      %s159 = scalar_select %p158, %s157, 63
      %s160 = smul.addr %s159, 4
      %s161 = scalar_lea.vmem %s3, %s160
      %s162 = smul.u32 32, %s14
      %p163 = scmp.lt.s32.totalorder %s162, 63
      %s164 = scalar_select %p163, %s162, 63
      %s165 = smul.addr %s164, 4
      %s166 = scalar_lea.vmem %s0, %s165
      %s167 = smul.u32 32, %s14
      %s168 = smul.u32 32, %s14
      %p169 = scmp.lt.s32.totalorder %s168, 63
      %s170 = scalar_select %p169, %s168, 63
      %s171 = smul.addr %s170, 4
      %s172 = scalar_lea.vmem %s3, %s171
      %s173 = smul.u32 32, %s14
      %v174 = vld [vmem:[%s166] sm:$0xf]
      %v175 = vld [vmem:[%s166 + $0x4] sm:$0xf]
      %v176 = vld [vmem:[%s166 + $0x8] sm:$0xf]
      %v177 = vld [vmem:[%s166 + $0xc] sm:$0xf]
      %v178 = vld [vmem:[%s166 + $0x10] sm:$0xf]
      %v179 = vld [vmem:[%s166 + $0x14] sm:$0xf]
      %v180 = vld [vmem:[%s166 + $0x18] sm:$0xf]
      %v181 = vld [vmem:[%s166 + $0x1c] sm:$0xf]
      %v182 = vld [vmem:[%s166 + $0x20] sm:$0xf]
      %v183 = vld [vmem:[%s166 + $0x24] sm:$0xf]
      %v184 = vld [vmem:[%s166 + $0x28] sm:$0xf]
      %v185 = vld [vmem:[%s166 + $0x2c] sm:$0xf]
      %v186 = vld [vmem:[%s166 + $0x30] sm:$0xf]
      %v187 = vld [vmem:[%s166 + $0x34] sm:$0xf]
      %v188 = vld [vmem:[%s166 + $0x38] sm:$0xf]
      %v189 = vld [vmem:[%s166 + $0x3c] sm:$0xf]
      %v190 = vld [vmem:[%s166 + $0x40] sm:$0xf]
      %v191 = vld [vmem:[%s166 + $0x44] sm:$0xf]
      %v192 = vld [vmem:[%s166 + $0x48] sm:$0xf]
      %v193 = vld [vmem:[%s166 + $0x4c] sm:$0xf]
      %v194 = vld [vmem:[%s166 + $0x50] sm:$0xf]
      %v195 = vld [vmem:[%s166 + $0x54] sm:$0xf]
      %v196 = vld [vmem:[%s166 + $0x58] sm:$0xf]
      %v197 = vld [vmem:[%s166 + $0x5c] sm:$0xf]
      %v198 = vld [vmem:[%s166 + $0x60] sm:$0xf]
      %v199 = vld [vmem:[%s166 + $0x64] sm:$0xf]
      %v200 = vld [vmem:[%s166 + $0x68] sm:$0xf]
      %v201 = vld [vmem:[%s166 + $0x6c] sm:$0xf]
      %v202 = vld [vmem:[%s166 + $0x70] sm:$0xf]
      %v203 = vld [vmem:[%s166 + $0x74] sm:$0xf]
      %v204 = vld [vmem:[%s166 + $0x78] sm:$0xf]
      %v205 = vld [vmem:[%s166 + $0x7c] sm:$0xf]
      %v206 = vunpack.c.l.bf16 %v174
      %v207 = vunpack.c.l.bf16 %v175
      %v208 = vunpack.c.l.bf16 %v176
      %v209 = vunpack.c.l.bf16 %v177
      %v210 = vunpack.c.l.bf16 %v178
      %v211 = vunpack.c.l.bf16 %v179
      %v212 = vunpack.c.l.bf16 %v180
      %v213 = vunpack.c.l.bf16 %v181
      %v214 = vunpack.c.l.bf16 %v182
      %v215 = vunpack.c.l.bf16 %v183
      %v216 = vunpack.c.l.bf16 %v184
      %v217 = vunpack.c.l.bf16 %v185
      %v218 = vunpack.c.l.bf16 %v186
      %v219 = vunpack.c.l.bf16 %v187
      %v220 = vunpack.c.l.bf16 %v188
      %v221 = vunpack.c.l.bf16 %v189
      %v222 = vunpack.c.l.bf16 %v190
      %v223 = vunpack.c.l.bf16 %v191
      %v224 = vunpack.c.l.bf16 %v192
      %v225 = vunpack.c.l.bf16 %v193
      %v226 = vunpack.c.l.bf16 %v194
      %v227 = vunpack.c.l.bf16 %v195
      %v228 = vunpack.c.l.bf16 %v196
      %v229 = vunpack.c.l.bf16 %v197
      %v230 = vunpack.c.l.bf16 %v198
      %v231 = vunpack.c.l.bf16 %v199
      %v232 = vunpack.c.l.bf16 %v200
      %v233 = vunpack.c.l.bf16 %v201
      %v234 = vunpack.c.l.bf16 %v202
      %v235 = vunpack.c.l.bf16 %v203
      %v236 = vunpack.c.l.bf16 %v204
      %v237 = vunpack.c.l.bf16 %v205
      %v238 = vld [vmem:[%s1] sm:$0x1]
      %v240 = vperm.slane %v238, 0
      %v242 = vmul.f32 %v206, %v240
      %v243 = vmul.f32 %v207, %v240
      %v244 = vmul.f32 %v208, %v240
      %v245 = vmul.f32 %v209, %v240
      %v246 = vmul.f32 %v210, %v240
      %v247 = vmul.f32 %v211, %v240
      %v248 = vmul.f32 %v212, %v240
      %v249 = vmul.f32 %v213, %v240
      %v250 = vmul.f32 %v214, %v240
      %v251 = vmul.f32 %v215, %v240
      %v252 = vmul.f32 %v216, %v240
      %v253 = vmul.f32 %v217, %v240
      %v254 = vmul.f32 %v218, %v240
      %v255 = vmul.f32 %v219, %v240
      %v256 = vmul.f32 %v220, %v240
      %v257 = vmul.f32 %v221, %v240
      %v258 = vmul.f32 %v222, %v240
      %v259 = vmul.f32 %v223, %v240
      %v260 = vmul.f32 %v224, %v240
      %v261 = vmul.f32 %v225, %v240
      %v262 = vmul.f32 %v226, %v240
      %v263 = vmul.f32 %v227, %v240
      %v264 = vmul.f32 %v228, %v240
      %v265 = vmul.f32 %v229, %v240
      %v266 = vmul.f32 %v230, %v240
      %v267 = vmul.f32 %v231, %v240
      %v268 = vmul.f32 %v232, %v240
      %v269 = vmul.f32 %v233, %v240
      %v270 = vmul.f32 %v234, %v240
      %v271 = vmul.f32 %v235, %v240
      %v272 = vmul.f32 %v236, %v240
      %v273 = vmul.f32 %v237, %v240
      %v274 = vld [vmem:[%s2] sm:$0x1]
      %v276 = vperm.slane %v274, 0
      %v278 = vadd.f32 %v242, %v276
      %v279 = vadd.f32 %v243, %v276
      %v280 = vadd.f32 %v244, %v276
      %v281 = vadd.f32 %v245, %v276
      %v282 = vadd.f32 %v246, %v276
      %v283 = vadd.f32 %v247, %v276
      %v284 = vadd.f32 %v248, %v276
      %v285 = vadd.f32 %v249, %v276
      %v286 = vadd.f32 %v250, %v276
      %v287 = vadd.f32 %v251, %v276
      %v288 = vadd.f32 %v252, %v276
      %v289 = vadd.f32 %v253, %v276
      %v290 = vadd.f32 %v254, %v276
      %v291 = vadd.f32 %v255, %v276
      %v292 = vadd.f32 %v256, %v276
      %v293 = vadd.f32 %v257, %v276
      %v294 = vadd.f32 %v258, %v276
      %v295 = vadd.f32 %v259, %v276
      %v296 = vadd.f32 %v260, %v276
      %v297 = vadd.f32 %v261, %v276
      %v298 = vadd.f32 %v262, %v276
      %v299 = vadd.f32 %v263, %v276
      %v300 = vadd.f32 %v264, %v276
      %v301 = vadd.f32 %v265, %v276
      %v302 = vadd.f32 %v266, %v276
      %v303 = vadd.f32 %v267, %v276
      %v304 = vadd.f32 %v268, %v276
      %v305 = vadd.f32 %v269, %v276
      %v306 = vadd.f32 %v270, %v276
      %v307 = vadd.f32 %v271, %v276
      %v308 = vadd.f32 %v272, %v276
      %v309 = vadd.f32 %v273, %v276
      %vm310 = vcmp.ge.f32.partialorder %v278, 0.0
      %vm311 = vcmp.ge.f32.partialorder %v279, 0.0
      %vm312 = vcmp.ge.f32.partialorder %v280, 0.0
      %vm313 = vcmp.ge.f32.partialorder %v281, 0.0
      %vm314 = vcmp.ge.f32.partialorder %v282, 0.0
      %vm315 = vcmp.ge.f32.partialorder %v283, 0.0
      %vm316 = vcmp.ge.f32.partialorder %v284, 0.0
      %vm317 = vcmp.ge.f32.partialorder %v285, 0.0
      %vm318 = vcmp.ge.f32.partialorder %v286, 0.0
      %vm319 = vcmp.ge.f32.partialorder %v287, 0.0
      %vm320 = vcmp.ge.f32.partialorder %v288, 0.0
      %vm321 = vcmp.ge.f32.partialorder %v289, 0.0
      %vm322 = vcmp.ge.f32.partialorder %v290, 0.0
      %vm323 = vcmp.ge.f32.partialorder %v291, 0.0
      %vm324 = vcmp.ge.f32.partialorder %v292, 0.0
      %vm325 = vcmp.ge.f32.partialorder %v293, 0.0
      %vm326 = vcmp.ge.f32.partialorder %v294, 0.0
      %vm327 = vcmp.ge.f32.partialorder %v295, 0.0
      %vm328 = vcmp.ge.f32.partialorder %v296, 0.0
      %vm329 = vcmp.ge.f32.partialorder %v297, 0.0
      %vm330 = vcmp.ge.f32.partialorder %v298, 0.0
      %vm331 = vcmp.ge.f32.partialorder %v299, 0.0
      %vm332 = vcmp.ge.f32.partialorder %v300, 0.0
      %vm333 = vcmp.ge.f32.partialorder %v301, 0.0
      %vm334 = vcmp.ge.f32.partialorder %v302, 0.0
      %vm335 = vcmp.ge.f32.partialorder %v303, 0.0
      %vm336 = vcmp.ge.f32.partialorder %v304, 0.0
      %vm337 = vcmp.ge.f32.partialorder %v305, 0.0
      %vm338 = vcmp.ge.f32.partialorder %v306, 0.0
      %vm339 = vcmp.ge.f32.partialorder %v307, 0.0
      %vm340 = vcmp.ge.f32.partialorder %v308, 0.0
      %vm341 = vcmp.ge.f32.partialorder %v309, 0.0
      %v342 = vmul.f32 %v278, 0.2
      %v343 = vmul.f32 %v279, 0.2
      %v344 = vmul.f32 %v280, 0.2
      %v345 = vmul.f32 %v281, 0.2
      %v346 = vmul.f32 %v282, 0.2
      %v347 = vmul.f32 %v283, 0.2
      %v348 = vmul.f32 %v284, 0.2
      %v349 = vmul.f32 %v285, 0.2
      %v350 = vmul.f32 %v286, 0.2
      %v351 = vmul.f32 %v287, 0.2
      %v352 = vmul.f32 %v288, 0.2
      %v353 = vmul.f32 %v289, 0.2
      %v354 = vmul.f32 %v290, 0.2
      %v355 = vmul.f32 %v291, 0.2
      %v356 = vmul.f32 %v292, 0.2
      %v357 = vmul.f32 %v293, 0.2
      %v358 = vmul.f32 %v294, 0.2
      %v359 = vmul.f32 %v295, 0.2
      %v360 = vmul.f32 %v296, 0.2
      %v361 = vmul.f32 %v297, 0.2
      %v362 = vmul.f32 %v298, 0.2
      %v363 = vmul.f32 %v299, 0.2
      %v364 = vmul.f32 %v300, 0.2
      %v365 = vmul.f32 %v301, 0.2
      %v366 = vmul.f32 %v302, 0.2
      %v367 = vmul.f32 %v303, 0.2
      %v368 = vmul.f32 %v304, 0.2
      %v369 = vmul.f32 %v305, 0.2
      %v370 = vmul.f32 %v306, 0.2
      %v371 = vmul.f32 %v307, 0.2
      %v372 = vmul.f32 %v308, 0.2
      %v373 = vmul.f32 %v309, 0.2
      %v374 = vsel %vm310, %v278, %v342
      %v375 = vsel %vm311, %v279, %v343
      %v376 = vsel %vm312, %v280, %v344
      %v377 = vsel %vm313, %v281, %v345
      %v378 = vsel %vm314, %v282, %v346
      %v379 = vsel %vm315, %v283, %v347
      %v380 = vsel %vm316, %v284, %v348
      %v381 = vsel %vm317, %v285, %v349
      %v382 = vsel %vm318, %v286, %v350
      %v383 = vsel %vm319, %v287, %v351
      %v384 = vsel %vm320, %v288, %v352
      %v385 = vsel %vm321, %v289, %v353
      %v386 = vsel %vm322, %v290, %v354
      %v387 = vsel %vm323, %v291, %v355
      %v388 = vsel %vm324, %v292, %v356
      %v389 = vsel %vm325, %v293, %v357
      %v390 = vsel %vm326, %v294, %v358
      %v391 = vsel %vm327, %v295, %v359
      %v392 = vsel %vm328, %v296, %v360
      %v393 = vsel %vm329, %v297, %v361
      %v394 = vsel %vm330, %v298, %v362
      %v395 = vsel %vm331, %v299, %v363
      %v396 = vsel %vm332, %v300, %v364
      %v397 = vsel %vm333, %v301, %v365
      %v398 = vsel %vm334, %v302, %v366
      %v399 = vsel %vm335, %v303, %v367
      %v400 = vsel %vm336, %v304, %v368
      %v401 = vsel %vm337, %v305, %v369
      %v402 = vsel %vm338, %v306, %v370
      %v403 = vsel %vm339, %v307, %v371
      %v404 = vsel %vm340, %v308, %v372
      %v405 = vsel %vm341, %v309, %v373
      %v406 = vpack.c.bf16 %v374, %v374
      %v407 = vpack.c.bf16 %v375, %v375
      %v408 = vpack.c.bf16 %v376, %v376
      %v409 = vpack.c.bf16 %v377, %v377
      %v410 = vpack.c.bf16 %v378, %v378
      %v411 = vpack.c.bf16 %v379, %v379
      %v412 = vpack.c.bf16 %v380, %v380
      %v413 = vpack.c.bf16 %v381, %v381
      %v414 = vpack.c.bf16 %v382, %v382
      %v415 = vpack.c.bf16 %v383, %v383
      %v416 = vpack.c.bf16 %v384, %v384
      %v417 = vpack.c.bf16 %v385, %v385
      %v418 = vpack.c.bf16 %v386, %v386
      %v419 = vpack.c.bf16 %v387, %v387
      %v420 = vpack.c.bf16 %v388, %v388
      %v421 = vpack.c.bf16 %v389, %v389
      %v422 = vpack.c.bf16 %v390, %v390
      %v423 = vpack.c.bf16 %v391, %v391
      %v424 = vpack.c.bf16 %v392, %v392
      %v425 = vpack.c.bf16 %v393, %v393
      %v426 = vpack.c.bf16 %v394, %v394
      %v427 = vpack.c.bf16 %v395, %v395
      %v428 = vpack.c.bf16 %v396, %v396
      %v429 = vpack.c.bf16 %v397, %v397
      %v430 = vpack.c.bf16 %v398, %v398
      %v431 = vpack.c.bf16 %v399, %v399
      %v432 = vpack.c.bf16 %v400, %v400
      %v433 = vpack.c.bf16 %v401, %v401
      %v434 = vpack.c.bf16 %v402, %v402
      %v435 = vpack.c.bf16 %v403, %v403
      %v436 = vpack.c.bf16 %v404, %v404
      %v437 = vpack.c.bf16 %v405, %v405
      %438 = vst [vmem:[%s172] sm:$0xf] %v406
      %439 = vst [vmem:[%s172 + $0x4] sm:$0xf] %v407
      %440 = vst [vmem:[%s172 + $0x8] sm:$0xf] %v408
      %441 = vst [vmem:[%s172 + $0xc] sm:$0xf] %v409
      %442 = vst [vmem:[%s172 + $0x10] sm:$0xf] %v410
      %443 = vst [vmem:[%s172 + $0x14] sm:$0xf] %v411
      %444 = vst [vmem:[%s172 + $0x18] sm:$0xf] %v412
      %445 = vst [vmem:[%s172 + $0x1c] sm:$0xf] %v413
      %446 = vst [vmem:[%s172 + $0x20] sm:$0xf] %v414
      %447 = vst [vmem:[%s172 + $0x24] sm:$0xf] %v415
      %448 = vst [vmem:[%s172 + $0x28] sm:$0xf] %v416
      %449 = vst [vmem:[%s172 + $0x2c] sm:$0xf] %v417
      %450 = vst [vmem:[%s172 + $0x30] sm:$0xf] %v418
      %451 = vst [vmem:[%s172 + $0x34] sm:$0xf] %v419
      %452 = vst [vmem:[%s172 + $0x38] sm:$0xf] %v420
      %453 = vst [vmem:[%s172 + $0x3c] sm:$0xf] %v421
      %454 = vst [vmem:[%s172 + $0x40] sm:$0xf] %v422
      %455 = vst [vmem:[%s172 + $0x44] sm:$0xf] %v423
      %456 = vst [vmem:[%s172 + $0x48] sm:$0xf] %v424
      %457 = vst [vmem:[%s172 + $0x4c] sm:$0xf] %v425
      %458 = vst [vmem:[%s172 + $0x50] sm:$0xf] %v426
      %459 = vst [vmem:[%s172 + $0x54] sm:$0xf] %v427
      %460 = vst [vmem:[%s172 + $0x58] sm:$0xf] %v428
      %461 = vst [vmem:[%s172 + $0x5c] sm:$0xf] %v429
      %462 = vst [vmem:[%s172 + $0x60] sm:$0xf] %v430
      %463 = vst [vmem:[%s172 + $0x64] sm:$0xf] %v431
      %464 = vst [vmem:[%s172 + $0x68] sm:$0xf] %v432
      %465 = vst [vmem:[%s172 + $0x6c] sm:$0xf] %v433
      %466 = vst [vmem:[%s172 + $0x70] sm:$0xf] %v434
      %467 = vst [vmem:[%s172 + $0x74] sm:$0xf] %v435
      %468 = vst [vmem:[%s172 + $0x78] sm:$0xf] %v436
      %469 = vst [vmem:[%s172 + $0x7c] sm:$0xf] %v437
      %s470 = smul.u32 32, %s14
      %p471 = scmp.lt.s32.totalorder %s470, 63
      %s472 = scalar_select %p471, %s470, 63
      %s473 = smul.addr %s472, 4
      %s474 = scalar_lea.vmem %s3, %s473
      // Predicated region
      $region33: #{discriminator_forward.10} parent=31 // pred_check
        %p475 = pneg %p100
      $region34: #{discriminator_forward.10} parent=31 // pred_check_branch
        %477 = sbr.rel (%p475) target = $region36
      $region35: #{discriminator_forward.10} parent=31 // pred_region
        %s478 = smul.u32 32, %s14
      $region36: #{discriminator_forward.10} parent=31 // pred_fallthru
        _
    $region32: #{discriminator_forward.10} parent=5 // pred_fallthru
      _
    %p479 = scmp.le.s32.totalorder 2, %s9
    // Predicated region
    $region37: #{discriminator_forward.10} parent=5 // pred_check
      %p480 = pneg %p479
    $region38: #{discriminator_forward.10} parent=5 // pred_check_branch
      %482 = sbr.rel (%p480) target = $region40
    $region39: #{discriminator_forward.10} parent=5 // pred_region
      %s483 = ssub.s32 %s9, 2
      // Predicated region
      $region41: #{discriminator_forward.10} parent=39 // pred_check
        %p484 = pneg %p106
      $region42: #{discriminator_forward.10} parent=39 // pred_check_branch
        %486 = sbr.rel (%p484) target = $region44
      $region43: #{discriminator_forward.10} parent=39 // pred_region
        %s487 = smul.u32 32, %s15
        %p488 = scmp.lt.s32.totalorder %s487, 63
        %s489 = scalar_select %p488, %s487, 63
        %s490 = smul.addr %s489, 4
        %s491 = scalar_lea.vmem %s3, %s490
      $region44: #{discriminator_forward.10} parent=39 // pred_fallthru
        _
    $region40: #{discriminator_forward.10} parent=5 // pred_fallthru
      _
  $region6: #{discriminator_forward.10} parent=0 // loop_footer
    %s13 = sadd.s32 1, %s9
  $region7: #{discriminator_forward.10} parent=0 // loop_footer_branch
    %8 = sbr.rel target = $region3
  $region8: #{discriminator_forward.10} parent=0 // loop_exit
    _

// kernel: discriminator_forward.11
$region0: #{discriminator_forward.11}
  #allocation0 [shape = 'u32[]', space=smem, size = 0x4, offset = 0x4, fixed_abs, tag = 'smem constant byte address 0x4 - core index']
  #allocation1 [shape = 'u32[72,128]{1,0:T(1,128)}', space=vmem, size = 0x9000, scoped, tag = 'internal scratch']
  #allocation2 [shape = 'f32[128,128]{1,0:T(8,128)}', space=vmem, size = 0x10000, scoped, tag = 'scratch operand']
  %s0 = inlined_call_operand.vmem [shape: bf16[128,256], index: 0, kind: input, shape index: {}]
  %s1 = inlined_call_operand.vmem [shape: bf16[256,128], index: 1, kind: input, shape index: {}]
  %s2 = inlined_call_operand.vmem [shape: bf16[128,128], index: 2, kind: output, shape index: {0}]
  %s3 = inlined_call_operand.vmem [shape: f32[1,2,128], index: 3, kind: output, shape index: {1}]
  %4 = xla_tuple %s2, %s3
  %s5 = sld [smem:[#allocation0]]
  $region34: #{discriminator_forward.11} parent=0
    _
  %s7 = ssub.s32 1, %s5
  %s8 = scalar_select 0, %s7, %s5
  // Predicated region
  $region2: #{discriminator_forward.11} parent=0 // pred_check
    _
  $region3: #{discriminator_forward.11} parent=0 // pred_check_branch
    %10 = sbr.rel (0) target = $region5
  $region4: #{discriminator_forward.11} parent=0 // pred_region
    _
  $region5: #{discriminator_forward.11} parent=0 // pred_fallthru
    _
  // Predicated region
  $region6: #{discriminator_forward.11} parent=0 // pred_check
    _
  $region7: #{discriminator_forward.11} parent=0 // pred_check_branch
    %12 = sbr.rel (0) target = $region9
  $region8: #{discriminator_forward.11} parent=0 // pred_region
    _
  $region9: #{discriminator_forward.11} parent=0 // pred_fallthru
    _
  %p13 = scmp.eq.s32.totalorder 0, 0
  // Predicated region
  $region10: #{discriminator_forward.11} parent=0 // pred_check
    %p14 = pneg %p13
  $region11: #{discriminator_forward.11} parent=0 // pred_check_branch
    %16 = sbr.rel (%p14) target = $region13
  $region12: #{discriminator_forward.11} parent=0 // pred_region
    %17 = vst [vmem:[#allocation2] sm:$0xff] 0.0
    %18 = vst [vmem:[#allocation2 + $0x8] sm:$0xff] 0.0
    %19 = vst [vmem:[#allocation2 + $0x10] sm:$0xff] 0.0
    %20 = vst [vmem:[#allocation2 + $0x18] sm:$0xff] 0.0
    %21 = vst [vmem:[#allocation2 + $0x20] sm:$0xff] 0.0
    %22 = vst [vmem:[#allocation2 + $0x28] sm:$0xff] 0.0
    %23 = vst [vmem:[#allocation2 + $0x30] sm:$0xff] 0.0
    %24 = vst [vmem:[#allocation2 + $0x38] sm:$0xff] 0.0
    %25 = vst [vmem:[#allocation2 + $0x40] sm:$0xff] 0.0
    %26 = vst [vmem:[#allocation2 + $0x48] sm:$0xff] 0.0
    %27 = vst [vmem:[#allocation2 + $0x50] sm:$0xff] 0.0
    %28 = vst [vmem:[#allocation2 + $0x58] sm:$0xff] 0.0
    %29 = vst [vmem:[#allocation2 + $0x60] sm:$0xff] 0.0
    %30 = vst [vmem:[#allocation2 + $0x68] sm:$0xff] 0.0
    %31 = vst [vmem:[#allocation2 + $0x70] sm:$0xff] 0.0
    %32 = vst [vmem:[#allocation2 + $0x78] sm:$0xff] 0.0
  $region13: #{discriminator_forward.11} parent=0 // pred_fallthru
    _
  %v33 = vld [vmem:[#allocation2] sm:$0xff]
  %v34 = vld [vmem:[#allocation2 + $0x8] sm:$0xff]
  %v35 = vld [vmem:[#allocation2 + $0x10] sm:$0xff]
  %v36 = vld [vmem:[#allocation2 + $0x18] sm:$0xff]
  %v37 = vld [vmem:[#allocation2 + $0x20] sm:$0xff]
  %v38 = vld [vmem:[#allocation2 + $0x28] sm:$0xff]
  %v39 = vld [vmem:[#allocation2 + $0x30] sm:$0xff]
  %v40 = vld [vmem:[#allocation2 + $0x38] sm:$0xff]
  %v41 = vld [vmem:[#allocation2 + $0x40] sm:$0xff]
  %v42 = vld [vmem:[#allocation2 + $0x48] sm:$0xff]
  %v43 = vld [vmem:[#allocation2 + $0x50] sm:$0xff]
  %v44 = vld [vmem:[#allocation2 + $0x58] sm:$0xff]
  %v45 = vld [vmem:[#allocation2 + $0x60] sm:$0xff]
  %v46 = vld [vmem:[#allocation2 + $0x68] sm:$0xff]
  %v47 = vld [vmem:[#allocation2 + $0x70] sm:$0xff]
  %v48 = vld [vmem:[#allocation2 + $0x78] sm:$0xff]
  %v49 = vld [vmem:[%s0] sm:$0xff]
  %v50 = vld [vmem:[%s0 + $0x8] sm:$0xff]
  %v51 = vld [vmem:[%s0 + $0x10] sm:$0xff]
  %v52 = vld [vmem:[%s0 + $0x18] sm:$0xff]
  %v53 = vld [vmem:[%s0 + $0x20] sm:$0xff]
  %v54 = vld [vmem:[%s0 + $0x28] sm:$0xff]
  %v55 = vld [vmem:[%s0 + $0x30] sm:$0xff]
  %v56 = vld [vmem:[%s0 + $0x38] sm:$0xff]
  %v57 = vld [vmem:[%s0 + $0x40] sm:$0xff]
  %v58 = vld [vmem:[%s0 + $0x48] sm:$0xff]
  %v59 = vld [vmem:[%s0 + $0x50] sm:$0xff]
  %v60 = vld [vmem:[%s0 + $0x58] sm:$0xff]
  %v61 = vld [vmem:[%s0 + $0x60] sm:$0xff]
  %v62 = vld [vmem:[%s0 + $0x68] sm:$0xff]
  %v63 = vld [vmem:[%s0 + $0x70] sm:$0xff]
  %v64 = vld [vmem:[%s0 + $0x78] sm:$0xff]
  %v65 = vld [vmem:[%s1] sm:$0xf]
  %v66 = vld [vmem:[%s1 + $0x4] sm:$0xf]
  %v67 = vld [vmem:[%s1 + $0x8] sm:$0xf]
  %v68 = vld [vmem:[%s1 + $0xc] sm:$0xf]
  %v69 = vld [vmem:[%s1 + $0x10] sm:$0xf]
  %v70 = vld [vmem:[%s1 + $0x14] sm:$0xf]
  %v71 = vld [vmem:[%s1 + $0x18] sm:$0xf]
  %v72 = vld [vmem:[%s1 + $0x1c] sm:$0xf]
  %v73 = vld [vmem:[%s1 + $0x20] sm:$0xf]
  %v74 = vld [vmem:[%s1 + $0x24] sm:$0xf]
  %v75 = vld [vmem:[%s1 + $0x28] sm:$0xf]
  %v76 = vld [vmem:[%s1 + $0x2c] sm:$0xf]
  %v77 = vld [vmem:[%s1 + $0x30] sm:$0xf]
  %v78 = vld [vmem:[%s1 + $0x34] sm:$0xf]
  %v79 = vld [vmem:[%s1 + $0x38] sm:$0xf]
  %v80 = vld [vmem:[%s1 + $0x3c] sm:$0xf]
  %v81 = vld [vmem:[%s1 + $0x40] sm:$0xf]
  %v82 = vld [vmem:[%s1 + $0x44] sm:$0xf]
  %v83 = vld [vmem:[%s1 + $0x48] sm:$0xf]
  %v84 = vld [vmem:[%s1 + $0x4c] sm:$0xf]
  %v85 = vld [vmem:[%s1 + $0x50] sm:$0xf]
  %v86 = vld [vmem:[%s1 + $0x54] sm:$0xf]
  %v87 = vld [vmem:[%s1 + $0x58] sm:$0xf]
  %v88 = vld [vmem:[%s1 + $0x5c] sm:$0xf]
  %v89 = vld [vmem:[%s1 + $0x60] sm:$0xf]
  %v90 = vld [vmem:[%s1 + $0x64] sm:$0xf]
  %v91 = vld [vmem:[%s1 + $0x68] sm:$0xf]
  %v92 = vld [vmem:[%s1 + $0x6c] sm:$0xf]
  %v93 = vld [vmem:[%s1 + $0x70] sm:$0xf]
  %v94 = vld [vmem:[%s1 + $0x74] sm:$0xf]
  %v95 = vld [vmem:[%s1 + $0x78] sm:$0xf]
  %v96 = vld [vmem:[%s1 + $0x7c] sm:$0xf]
  %v113 = vunpack.c.l.b16 %v49
  %v114 = vunpack.c.h.b16 %v49
  %v115 = vunpack.c.l.b16 %v50
  %v116 = vunpack.c.h.b16 %v50
  %v117 = vunpack.c.l.b16 %v51
  %v118 = vunpack.c.h.b16 %v51
  %v119 = vunpack.c.l.b16 %v52
  %v120 = vunpack.c.h.b16 %v52
  %v121 = vunpack.c.l.b16 %v53
  %v122 = vunpack.c.h.b16 %v53
  %v123 = vunpack.c.l.b16 %v54
  %v124 = vunpack.c.h.b16 %v54
  %v125 = vunpack.c.l.b16 %v55
  %v126 = vunpack.c.h.b16 %v55
  %v127 = vunpack.c.l.b16 %v56
  %v128 = vunpack.c.h.b16 %v56
  %v129 = vunpack.c.l.b16 %v57
  %v130 = vunpack.c.h.b16 %v57
  %v131 = vunpack.c.l.b16 %v58
  %v132 = vunpack.c.h.b16 %v58
  %v133 = vunpack.c.l.b16 %v59
  %v134 = vunpack.c.h.b16 %v59
  %v135 = vunpack.c.l.b16 %v60
  %v136 = vunpack.c.h.b16 %v60
  %v137 = vunpack.c.l.b16 %v61
  %v138 = vunpack.c.h.b16 %v61
  %v139 = vunpack.c.l.b16 %v62
  %v140 = vunpack.c.h.b16 %v62
  %v141 = vunpack.c.l.b16 %v63
  %v142 = vunpack.c.h.b16 %v63
  %v143 = vunpack.c.l.b16 %v64
  %v144 = vunpack.c.h.b16 %v64
  %v145 = vpack.c.b16 %v115, %v113
  %v146 = vpack.c.b16 %v116, %v114
  %v147 = vpack.c.b16 %v119, %v117
  %v148 = vpack.c.b16 %v120, %v118
  %v149 = vpack.c.b16 %v123, %v121
  %v150 = vpack.c.b16 %v124, %v122
  %v151 = vpack.c.b16 %v127, %v125
  %v152 = vpack.c.b16 %v128, %v126
  %v153 = vpack.c.b16 %v131, %v129
  %v154 = vpack.c.b16 %v132, %v130
  %v155 = vpack.c.b16 %v135, %v133
  %v156 = vpack.c.b16 %v136, %v134
  %v157 = vpack.c.b16 %v139, %v137
  %v158 = vpack.c.b16 %v140, %v138
  %v159 = vpack.c.b16 %v143, %v141
  %v160 = vpack.c.b16 %v144, %v142
  %v209 = vunpack.c.l.b16 %v65
  %v210 = vunpack.c.l.b16 %v66
  %v211 = vunpack.c.l.b16 %v67
  %v212 = vunpack.c.l.b16 %v68
  %v213 = vunpack.c.l.b16 %v69
  %v214 = vunpack.c.l.b16 %v70
  %v215 = vunpack.c.l.b16 %v71
  %v216 = vunpack.c.l.b16 %v72
  %v217 = vunpack.c.l.b16 %v73
  %v218 = vunpack.c.l.b16 %v74
  %v219 = vunpack.c.l.b16 %v75
  %v220 = vunpack.c.l.b16 %v76
  %v221 = vunpack.c.l.b16 %v77
  %v222 = vunpack.c.l.b16 %v78
  %v223 = vunpack.c.l.b16 %v79
  %v224 = vunpack.c.l.b16 %v80
  %v225 = vunpack.c.l.b16 %v81
  %v226 = vunpack.c.l.b16 %v82
  %v227 = vunpack.c.l.b16 %v83
  %v228 = vunpack.c.l.b16 %v84
  %v229 = vunpack.c.l.b16 %v85
  %v230 = vunpack.c.l.b16 %v86
  %v231 = vunpack.c.l.b16 %v87
  %v232 = vunpack.c.l.b16 %v88
  %v233 = vunpack.c.l.b16 %v89
  %v234 = vunpack.c.l.b16 %v90
  %v235 = vunpack.c.l.b16 %v91
  %v236 = vunpack.c.l.b16 %v92
  %v237 = vunpack.c.l.b16 %v93
  %v238 = vunpack.c.l.b16 %v94
  %v239 = vunpack.c.l.b16 %v95
  %v240 = vunpack.c.l.b16 %v96
  %v241 = vpack.c.b16 %v210, %v209
  %v242 = vpack.c.b16 %v212, %v211
  %v243 = vpack.c.b16 %v214, %v213
  %v244 = vpack.c.b16 %v216, %v215
  %v245 = vpack.c.b16 %v218, %v217
  %v246 = vpack.c.b16 %v220, %v219
  %v247 = vpack.c.b16 %v222, %v221
  %v248 = vpack.c.b16 %v224, %v223
  %v249 = vpack.c.b16 %v226, %v225
  %v250 = vpack.c.b16 %v228, %v227
  %v251 = vpack.c.b16 %v230, %v229
  %v252 = vpack.c.b16 %v232, %v231
  %v253 = vpack.c.b16 %v234, %v233
  %v254 = vpack.c.b16 %v236, %v235
  %v255 = vpack.c.b16 %v238, %v237
  %v256 = vpack.c.b16 %v240, %v239
  %273 = vmatpush.bf16.msra.mxu0 %v248
  %274 = vmatpush.bf16.msra.mxu0 %v247
  %275 = vmatpush.bf16.msra.mxu0 %v246
  %276 = vmatpush.bf16.msra.mxu0 %v245
  %277 = vmatpush.bf16.msra.mxu0 %v244
  %278 = vmatpush.bf16.msra.mxu0 %v243
  %279 = vmatpush.bf16.msra.mxu0 %v242
  %280 = vmatpush.bf16.msra.mxu0 %v241
  %281 = vmatmul.bf16.gmra.mxu0 %v145
  %v282 = vpop.f32.mrf.mxu0
  %v283 = vadd.f32 0.0, %v282
  %v284 = vpop.f32.mrf.mxu0
  %v285 = vadd.f32 0.0, %v284
  %286 = vmatmul.bf16.gmra.mxu0 %v147
  %v287 = vpop.f32.mrf.mxu0
  %v288 = vadd.f32 0.0, %v287
  %v289 = vpop.f32.mrf.mxu0
  %v290 = vadd.f32 0.0, %v289
  %291 = vmatmul.bf16.gmra.mxu0 %v149
  %v292 = vpop.f32.mrf.mxu0
  %v293 = vadd.f32 0.0, %v292
  %v294 = vpop.f32.mrf.mxu0
  %v295 = vadd.f32 0.0, %v294
  %296 = vmatmul.bf16.gmra.mxu0 %v151
  %v297 = vpop.f32.mrf.mxu0
  %v298 = vadd.f32 0.0, %v297
  %v299 = vpop.f32.mrf.mxu0
  %v300 = vadd.f32 0.0, %v299
  %301 = vmatmul.bf16.gmra.mxu0 %v153
  %v302 = vpop.f32.mrf.mxu0
  %v303 = vadd.f32 0.0, %v302
  %v304 = vpop.f32.mrf.mxu0
  %v305 = vadd.f32 0.0, %v304
  %306 = vmatmul.bf16.gmra.mxu0 %v155
  %v307 = vpop.f32.mrf.mxu0
  %v308 = vadd.f32 0.0, %v307
  %v309 = vpop.f32.mrf.mxu0
  %v310 = vadd.f32 0.0, %v309
  %311 = vmatmul.bf16.gmra.mxu0 %v157
  %v312 = vpop.f32.mrf.mxu0
  %v313 = vadd.f32 0.0, %v312
  %v314 = vpop.f32.mrf.mxu0
  %v315 = vadd.f32 0.0, %v314
  %316 = vmatmul.bf16.gmra.mxu0 %v159
  %v317 = vpop.f32.mrf.mxu0
  %v318 = vadd.f32 0.0, %v317
  %v319 = vpop.f32.mrf.mxu0
  %v320 = vadd.f32 0.0, %v319
  %321 = vdwg.mxu0
  %322 = vmatpush.bf16.msra.mxu0 %v256
  %323 = vmatpush.bf16.msra.mxu0 %v255
  %324 = vmatpush.bf16.msra.mxu0 %v254
  %325 = vmatpush.bf16.msra.mxu0 %v253
  %326 = vmatpush.bf16.msra.mxu0 %v252
  %327 = vmatpush.bf16.msra.mxu0 %v251
  %328 = vmatpush.bf16.msra.mxu0 %v250
  %329 = vmatpush.bf16.msra.mxu0 %v249
  %330 = vmatmul.bf16.gmra.mxu0 %v146
  %v331 = vpop.f32.mrf.mxu0
  %v332 = vadd.f32 %v283, %v331
  %v333 = vpop.f32.mrf.mxu0
  %v334 = vadd.f32 %v285, %v333
  %335 = vmatmul.bf16.gmra.mxu0 %v148
  %v336 = vpop.f32.mrf.mxu0
  %v337 = vadd.f32 %v288, %v336
  %v338 = vpop.f32.mrf.mxu0
  %v339 = vadd.f32 %v290, %v338
  %340 = vmatmul.bf16.gmra.mxu0 %v150
  %v341 = vpop.f32.mrf.mxu0
  %v342 = vadd.f32 %v293, %v341
  %v343 = vpop.f32.mrf.mxu0
  %v344 = vadd.f32 %v295, %v343
  %345 = vmatmul.bf16.gmra.mxu0 %v152
  %v346 = vpop.f32.mrf.mxu0
  %v347 = vadd.f32 %v298, %v346
  %v348 = vpop.f32.mrf.mxu0
  %v349 = vadd.f32 %v300, %v348
  %350 = vmatmul.bf16.gmra.mxu0 %v154
  %v351 = vpop.f32.mrf.mxu0
  %v352 = vadd.f32 %v303, %v351
  %v353 = vpop.f32.mrf.mxu0
  %v354 = vadd.f32 %v305, %v353
  %355 = vmatmul.bf16.gmra.mxu0 %v156
  %v356 = vpop.f32.mrf.mxu0
  %v357 = vadd.f32 %v308, %v356
  %v358 = vpop.f32.mrf.mxu0
  %v359 = vadd.f32 %v310, %v358
  %360 = vmatmul.bf16.gmra.mxu0 %v158
  %v361 = vpop.f32.mrf.mxu0
  %v362 = vadd.f32 %v313, %v361
  %v363 = vpop.f32.mrf.mxu0
  %v364 = vadd.f32 %v315, %v363
  %365 = vmatmul.bf16.gmra.mxu0 %v160
  %v366 = vpop.f32.mrf.mxu0
  %v367 = vadd.f32 %v318, %v366
  %v368 = vpop.f32.mrf.mxu0
  %v369 = vadd.f32 %v320, %v368
  %370 = vdwg.mxu0
  %v371 = vadd.f32 %v33, %v332
  %v372 = vadd.f32 %v34, %v334
  %v373 = vadd.f32 %v35, %v337
  %v374 = vadd.f32 %v36, %v339
  %v375 = vadd.f32 %v37, %v342
  %v376 = vadd.f32 %v38, %v344
  %v377 = vadd.f32 %v39, %v347
  %v378 = vadd.f32 %v40, %v349
  %v379 = vadd.f32 %v41, %v352
  %v380 = vadd.f32 %v42, %v354
  %v381 = vadd.f32 %v43, %v357
  %v382 = vadd.f32 %v44, %v359
  %v383 = vadd.f32 %v45, %v362
  %v384 = vadd.f32 %v46, %v364
  %v385 = vadd.f32 %v47, %v367
  %v386 = vadd.f32 %v48, %v369
  %387 = vst [vmem:[#allocation2] sm:$0xff] %v371
  %388 = vst [vmem:[#allocation2 + $0x8] sm:$0xff] %v372
  %389 = vst [vmem:[#allocation2 + $0x10] sm:$0xff] %v373
  %390 = vst [vmem:[#allocation2 + $0x18] sm:$0xff] %v374
  %391 = vst [vmem:[#allocation2 + $0x20] sm:$0xff] %v375
  %392 = vst [vmem:[#allocation2 + $0x28] sm:$0xff] %v376
  %393 = vst [vmem:[#allocation2 + $0x30] sm:$0xff] %v377
  %394 = vst [vmem:[#allocation2 + $0x38] sm:$0xff] %v378
  %395 = vst [vmem:[#allocation2 + $0x40] sm:$0xff] %v379
  %396 = vst [vmem:[#allocation2 + $0x48] sm:$0xff] %v380
  %397 = vst [vmem:[#allocation2 + $0x50] sm:$0xff] %v381
  %398 = vst [vmem:[#allocation2 + $0x58] sm:$0xff] %v382
  %399 = vst [vmem:[#allocation2 + $0x60] sm:$0xff] %v383
  %400 = vst [vmem:[#allocation2 + $0x68] sm:$0xff] %v384
  %401 = vst [vmem:[#allocation2 + $0x70] sm:$0xff] %v385
  %402 = vst [vmem:[#allocation2 + $0x78] sm:$0xff] %v386
  // Predicated region
  $region14: #{discriminator_forward.11} parent=0 // pred_check
    %p403 = pneg %p13
  $region15: #{discriminator_forward.11} parent=0 // pred_check_branch
    %405 = sbr.rel (%p403) target = $region17
  $region16: #{discriminator_forward.11} parent=0 // pred_region
    %v406 = vld [vmem:[#allocation2] sm:$0xff]
    %v407 = vld [vmem:[#allocation2 + $0x8] sm:$0xff]
    %v408 = vld [vmem:[#allocation2 + $0x10] sm:$0xff]
    %v409 = vld [vmem:[#allocation2 + $0x18] sm:$0xff]
    %v410 = vld [vmem:[#allocation2 + $0x20] sm:$0xff]
    %v411 = vld [vmem:[#allocation2 + $0x28] sm:$0xff]
    %v412 = vld [vmem:[#allocation2 + $0x30] sm:$0xff]
    %v413 = vld [vmem:[#allocation2 + $0x38] sm:$0xff]
    %v414 = vld [vmem:[#allocation2 + $0x40] sm:$0xff]
    %v415 = vld [vmem:[#allocation2 + $0x48] sm:$0xff]
    %v416 = vld [vmem:[#allocation2 + $0x50] sm:$0xff]
    %v417 = vld [vmem:[#allocation2 + $0x58] sm:$0xff]
    %v418 = vld [vmem:[#allocation2 + $0x60] sm:$0xff]
    %v419 = vld [vmem:[#allocation2 + $0x68] sm:$0xff]
    %v420 = vld [vmem:[#allocation2 + $0x70] sm:$0xff]
    %v421 = vld [vmem:[#allocation2 + $0x78] sm:$0xff]
    %v422 = vpack.c.bf16 %v406, %v406
    %v423 = vpack.c.bf16 %v407, %v407
    %v424 = vpack.c.bf16 %v408, %v408
    %v425 = vpack.c.bf16 %v409, %v409
    %v426 = vpack.c.bf16 %v410, %v410
    %v427 = vpack.c.bf16 %v411, %v411
    %v428 = vpack.c.bf16 %v412, %v412
    %v429 = vpack.c.bf16 %v413, %v413
    %v430 = vpack.c.bf16 %v414, %v414
    %v431 = vpack.c.bf16 %v415, %v415
    %v432 = vpack.c.bf16 %v416, %v416
    %v433 = vpack.c.bf16 %v417, %v417
    %v434 = vpack.c.bf16 %v418, %v418
    %v435 = vpack.c.bf16 %v419, %v419
    %v436 = vpack.c.bf16 %v420, %v420
    %v437 = vpack.c.bf16 %v421, %v421
    %438 = vst [vmem:[%s2] sm:$0xf] %v422
    %439 = vst [vmem:[%s2 + $0x4] sm:$0xf] %v423
    %440 = vst [vmem:[%s2 + $0x8] sm:$0xf] %v424
    %441 = vst [vmem:[%s2 + $0xc] sm:$0xf] %v425
    %442 = vst [vmem:[%s2 + $0x10] sm:$0xf] %v426
    %443 = vst [vmem:[%s2 + $0x14] sm:$0xf] %v427
    %444 = vst [vmem:[%s2 + $0x18] sm:$0xf] %v428
    %445 = vst [vmem:[%s2 + $0x1c] sm:$0xf] %v429
    %446 = vst [vmem:[%s2 + $0x20] sm:$0xf] %v430
    %447 = vst [vmem:[%s2 + $0x24] sm:$0xf] %v431
    %448 = vst [vmem:[%s2 + $0x28] sm:$0xf] %v432
    %449 = vst [vmem:[%s2 + $0x2c] sm:$0xf] %v433
    %450 = vst [vmem:[%s2 + $0x30] sm:$0xf] %v434
    %451 = vst [vmem:[%s2 + $0x34] sm:$0xf] %v435
    %452 = vst [vmem:[%s2 + $0x38] sm:$0xf] %v436
    %453 = vst [vmem:[%s2 + $0x3c] sm:$0xf] %v437
    %v454 = vadd.f32 %v406, %v407
    %v455 = vadd.f32 %v454, %v408
    %v456 = vadd.f32 %v455, %v409
    %v457 = vadd.f32 %v456, %v410
    %v458 = vadd.f32 %v457, %v411
    %v459 = vadd.f32 %v458, %v412
    %v460 = vadd.f32 %v459, %v413
    %v461 = vadd.f32 %v460, %v414
    %v462 = vadd.f32 %v461, %v415
    %v463 = vadd.f32 %v462, %v416
    %v464 = vadd.f32 %v463, %v417
    %v465 = vadd.f32 %v464, %v418
    %v466 = vadd.f32 %v465, %v419
    %v467 = vadd.f32 %v466, %v420
    %v468 = vadd.f32 %v467, %v421
    %v469 = vrot.slane %v468, 4
    %v470 = vadd.f32 %v468, %v469
    %v471 = vrot.slane %v470, 2
    %v472 = vadd.f32 %v470, %v471
    %v473 = vrot.slane %v472, 1
    %v474 = vadd.f32 %v472, %v473
    %v475 = vmul.f32 %v406, %v406
    %v476 = vmul.f32 %v407, %v407
    %v477 = vmul.f32 %v408, %v408
    %v478 = vmul.f32 %v409, %v409
    %v479 = vmul.f32 %v410, %v410
    %v480 = vmul.f32 %v411, %v411
    %v481 = vmul.f32 %v412, %v412
    %v482 = vmul.f32 %v413, %v413
    %v483 = vmul.f32 %v414, %v414
    %v484 = vmul.f32 %v415, %v415
    %v485 = vmul.f32 %v416, %v416
    %v486 = vmul.f32 %v417, %v417
    %v487 = vmul.f32 %v418, %v418
    %v488 = vmul.f32 %v419, %v419
    %v489 = vmul.f32 %v420, %v420
    %v490 = vmul.f32 %v421, %v421
    %v491 = vadd.f32 %v475, %v476
    %v492 = vadd.f32 %v491, %v477
    %v493 = vadd.f32 %v492, %v478
    %v494 = vadd.f32 %v493, %v479
    %v495 = vadd.f32 %v494, %v480
    %v496 = vadd.f32 %v495, %v481
    %v497 = vadd.f32 %v496, %v482
    %v498 = vadd.f32 %v497, %v483
    %v499 = vadd.f32 %v498, %v484
    %v500 = vadd.f32 %v499, %v485
    %v501 = vadd.f32 %v500, %v486
    %v502 = vadd.f32 %v501, %v487
    %v503 = vadd.f32 %v502, %v488
    %v504 = vadd.f32 %v503, %v489
    %v505 = vadd.f32 %v504, %v490
    %v506 = vrot.slane %v505, 4
    %v507 = vadd.f32 %v505, %v506
    %v508 = vrot.slane %v507, 2
    %v509 = vadd.f32 %v507, %v508
    %v510 = vrot.slane %v509, 1
    %v511 = vadd.f32 %v509, %v510
    %vm512 = vcmask 1040384
    %v513 = vsel %vm512, %v474, %v511
    %514 = vst [vmem:[%s3] sm:$0x3] %v513
  $region17: #{discriminator_forward.11} parent=0 // pred_fallthru
    _
  // Predicated region
  $region18: #{discriminator_forward.11} parent=0 // pred_check
    _
  $region19: #{discriminator_forward.11} parent=0 // pred_check_branch
    %516 = sbr.rel (0) target = $region21
  $region20: #{discriminator_forward.11} parent=0 // pred_region
    _
  $region21: #{discriminator_forward.11} parent=0 // pred_fallthru
    _
  // Predicated region
  $region22: #{discriminator_forward.11} parent=0 // pred_check
    _
  $region23: #{discriminator_forward.11} parent=0 // pred_check_branch
    %518 = sbr.rel (0) target = $region25
  $region24: #{discriminator_forward.11} parent=0 // pred_region
    _
  $region25: #{discriminator_forward.11} parent=0 // pred_fallthru
    _
  // Predicated region
  $region26: #{discriminator_forward.11} parent=0 // pred_check
    _
  $region27: #{discriminator_forward.11} parent=0 // pred_check_branch
    %520 = sbr.rel (0) target = $region29
  $region28: #{discriminator_forward.11} parent=0 // pred_region
    _
  $region29: #{discriminator_forward.11} parent=0 // pred_fallthru
    _
  // Predicated region
  $region30: #{discriminator_forward.11} parent=0 // pred_check
    _
  $region31: #{discriminator_forward.11} parent=0 // pred_check_branch
    %522 = sbr.rel (0) target = $region33
  $region32: #{discriminator_forward.11} parent=0 // pred_region
    _
  $region33: #{discriminator_forward.11} parent=0 // pred_fallthru
    _

// kernel: discriminator_forward.12
$region0: #{discriminator_forward.12}
  #allocation0 [shape = 'u32[]', space=smem, size = 0x4, offset = 0x4, fixed_abs, tag = 'smem constant byte address 0x4 - core index']
  #allocation1 [shape = 'u32[72,128]{1,0:T(1,128)}', space=vmem, size = 0x9000, scoped, tag = 'internal scratch']
  %s0 = inlined_call_operand.vmem [shape: bf16[128,128], index: 0, kind: input, shape index: {}]
  %s1 = inlined_call_operand.vmem [shape: f32[1,128], index: 1, kind: input, shape index: {}]
  %s2 = inlined_call_operand.vmem [shape: f32[1,128], index: 2, kind: input, shape index: {}]
  %s3 = inlined_call_operand.vmem [shape: bf16[128,128], index: 3, kind: output, shape index: {}]
  %s4 = sld [smem:[#allocation0]]
  $region22: #{discriminator_forward.12} parent=0
    _
  %s6 = ssub.s32 1, %s4
  %s7 = scalar_select 0, %s6, %s4
  // Predicated region
  $region2: #{discriminator_forward.12} parent=0 // pred_check
    _
  $region3: #{discriminator_forward.12} parent=0 // pred_check_branch
    %9 = sbr.rel (0) target = $region5
  $region4: #{discriminator_forward.12} parent=0 // pred_region
    _
  $region5: #{discriminator_forward.12} parent=0 // pred_fallthru
    _
  // Predicated region
  $region6: #{discriminator_forward.12} parent=0 // pred_check
    _
  $region7: #{discriminator_forward.12} parent=0 // pred_check_branch
    %11 = sbr.rel (0) target = $region9
  $region8: #{discriminator_forward.12} parent=0 // pred_region
    _
  $region9: #{discriminator_forward.12} parent=0 // pred_fallthru
    _
  // Predicated region
  $region10: #{discriminator_forward.12} parent=0 // pred_check
    _
  $region11: #{discriminator_forward.12} parent=0 // pred_check_branch
    %13 = sbr.rel (0) target = $region13
  $region12: #{discriminator_forward.12} parent=0 // pred_region
    _
  $region13: #{discriminator_forward.12} parent=0 // pred_fallthru
    _
  %v14 = vld [vmem:[%s0] sm:$0xf]
  %v15 = vld [vmem:[%s0 + $0x4] sm:$0xf]
  %v16 = vld [vmem:[%s0 + $0x8] sm:$0xf]
  %v17 = vld [vmem:[%s0 + $0xc] sm:$0xf]
  %v18 = vld [vmem:[%s0 + $0x10] sm:$0xf]
  %v19 = vld [vmem:[%s0 + $0x14] sm:$0xf]
  %v20 = vld [vmem:[%s0 + $0x18] sm:$0xf]
  %v21 = vld [vmem:[%s0 + $0x1c] sm:$0xf]
  %v22 = vld [vmem:[%s0 + $0x20] sm:$0xf]
  %v23 = vld [vmem:[%s0 + $0x24] sm:$0xf]
  %v24 = vld [vmem:[%s0 + $0x28] sm:$0xf]
  %v25 = vld [vmem:[%s0 + $0x2c] sm:$0xf]
  %v26 = vld [vmem:[%s0 + $0x30] sm:$0xf]
  %v27 = vld [vmem:[%s0 + $0x34] sm:$0xf]
  %v28 = vld [vmem:[%s0 + $0x38] sm:$0xf]
  %v29 = vld [vmem:[%s0 + $0x3c] sm:$0xf]
  %v30 = vunpack.c.l.bf16 %v14
  %v31 = vunpack.c.l.bf16 %v15
  %v32 = vunpack.c.l.bf16 %v16
  %v33 = vunpack.c.l.bf16 %v17
  %v34 = vunpack.c.l.bf16 %v18
  %v35 = vunpack.c.l.bf16 %v19
  %v36 = vunpack.c.l.bf16 %v20
  %v37 = vunpack.c.l.bf16 %v21
  %v38 = vunpack.c.l.bf16 %v22
  %v39 = vunpack.c.l.bf16 %v23
  %v40 = vunpack.c.l.bf16 %v24
  %v41 = vunpack.c.l.bf16 %v25
  %v42 = vunpack.c.l.bf16 %v26
  %v43 = vunpack.c.l.bf16 %v27
  %v44 = vunpack.c.l.bf16 %v28
  %v45 = vunpack.c.l.bf16 %v29
  %v46 = vld [vmem:[%s1] sm:$0x1]
  %v48 = vperm.slane %v46, 0
  %v50 = vmul.f32 %v30, %v48
  %v51 = vmul.f32 %v31, %v48
  %v52 = vmul.f32 %v32, %v48
  %v53 = vmul.f32 %v33, %v48
  %v54 = vmul.f32 %v34, %v48
  %v55 = vmul.f32 %v35, %v48
  %v56 = vmul.f32 %v36, %v48
  %v57 = vmul.f32 %v37, %v48
  %v58 = vmul.f32 %v38, %v48
  %v59 = vmul.f32 %v39, %v48
  %v60 = vmul.f32 %v40, %v48
  %v61 = vmul.f32 %v41, %v48
  %v62 = vmul.f32 %v42, %v48
  %v63 = vmul.f32 %v43, %v48
  %v64 = vmul.f32 %v44, %v48
  %v65 = vmul.f32 %v45, %v48
  %v66 = vld [vmem:[%s2] sm:$0x1]
  %v68 = vperm.slane %v66, 0
  %v70 = vadd.f32 %v50, %v68
  %v71 = vadd.f32 %v51, %v68
  %v72 = vadd.f32 %v52, %v68
  %v73 = vadd.f32 %v53, %v68
  %v74 = vadd.f32 %v54, %v68
  %v75 = vadd.f32 %v55, %v68
  %v76 = vadd.f32 %v56, %v68
  %v77 = vadd.f32 %v57, %v68
  %v78 = vadd.f32 %v58, %v68
  %v79 = vadd.f32 %v59, %v68
  %v80 = vadd.f32 %v60, %v68
  %v81 = vadd.f32 %v61, %v68
  %v82 = vadd.f32 %v62, %v68
  %v83 = vadd.f32 %v63, %v68
  %v84 = vadd.f32 %v64, %v68
  %v85 = vadd.f32 %v65, %v68
  %vm86 = vcmp.ge.f32.partialorder %v70, 0.0
  %vm87 = vcmp.ge.f32.partialorder %v71, 0.0
  %vm88 = vcmp.ge.f32.partialorder %v72, 0.0
  %vm89 = vcmp.ge.f32.partialorder %v73, 0.0
  %vm90 = vcmp.ge.f32.partialorder %v74, 0.0
  %vm91 = vcmp.ge.f32.partialorder %v75, 0.0
  %vm92 = vcmp.ge.f32.partialorder %v76, 0.0
  %vm93 = vcmp.ge.f32.partialorder %v77, 0.0
  %vm94 = vcmp.ge.f32.partialorder %v78, 0.0
  %vm95 = vcmp.ge.f32.partialorder %v79, 0.0
  %vm96 = vcmp.ge.f32.partialorder %v80, 0.0
  %vm97 = vcmp.ge.f32.partialorder %v81, 0.0
  %vm98 = vcmp.ge.f32.partialorder %v82, 0.0
  %vm99 = vcmp.ge.f32.partialorder %v83, 0.0
  %vm100 = vcmp.ge.f32.partialorder %v84, 0.0
  %vm101 = vcmp.ge.f32.partialorder %v85, 0.0
  %v102 = vmul.f32 %v70, 0.2
  %v103 = vmul.f32 %v71, 0.2
  %v104 = vmul.f32 %v72, 0.2
  %v105 = vmul.f32 %v73, 0.2
  %v106 = vmul.f32 %v74, 0.2
  %v107 = vmul.f32 %v75, 0.2
  %v108 = vmul.f32 %v76, 0.2
  %v109 = vmul.f32 %v77, 0.2
  %v110 = vmul.f32 %v78, 0.2
  %v111 = vmul.f32 %v79, 0.2
  %v112 = vmul.f32 %v80, 0.2
  %v113 = vmul.f32 %v81, 0.2
  %v114 = vmul.f32 %v82, 0.2
  %v115 = vmul.f32 %v83, 0.2
  %v116 = vmul.f32 %v84, 0.2
  %v117 = vmul.f32 %v85, 0.2
  %v118 = vsel %vm86, %v70, %v102
  %v119 = vsel %vm87, %v71, %v103
  %v120 = vsel %vm88, %v72, %v104
  %v121 = vsel %vm89, %v73, %v105
  %v122 = vsel %vm90, %v74, %v106
  %v123 = vsel %vm91, %v75, %v107
  %v124 = vsel %vm92, %v76, %v108
  %v125 = vsel %vm93, %v77, %v109
  %v126 = vsel %vm94, %v78, %v110
  %v127 = vsel %vm95, %v79, %v111
  %v128 = vsel %vm96, %v80, %v112
  %v129 = vsel %vm97, %v81, %v113
  %v130 = vsel %vm98, %v82, %v114
  %v131 = vsel %vm99, %v83, %v115
  %v132 = vsel %vm100, %v84, %v116
  %v133 = vsel %vm101, %v85, %v117
  %v134 = vpack.c.bf16 %v118, %v118
  %v135 = vpack.c.bf16 %v119, %v119
  %v136 = vpack.c.bf16 %v120, %v120
  %v137 = vpack.c.bf16 %v121, %v121
  %v138 = vpack.c.bf16 %v122, %v122
  %v139 = vpack.c.bf16 %v123, %v123
  %v140 = vpack.c.bf16 %v124, %v124
  %v141 = vpack.c.bf16 %v125, %v125
  %v142 = vpack.c.bf16 %v126, %v126
  %v143 = vpack.c.bf16 %v127, %v127
  %v144 = vpack.c.bf16 %v128, %v128
  %v145 = vpack.c.bf16 %v129, %v129
  %v146 = vpack.c.bf16 %v130, %v130
  %v147 = vpack.c.bf16 %v131, %v131
  %v148 = vpack.c.bf16 %v132, %v132
  %v149 = vpack.c.bf16 %v133, %v133
  %150 = vst [vmem:[%s3] sm:$0xf] %v134
  %151 = vst [vmem:[%s3 + $0x4] sm:$0xf] %v135
  %152 = vst [vmem:[%s3 + $0x8] sm:$0xf] %v136
  %153 = vst [vmem:[%s3 + $0xc] sm:$0xf] %v137
  %154 = vst [vmem:[%s3 + $0x10] sm:$0xf] %v138
  %155 = vst [vmem:[%s3 + $0x14] sm:$0xf] %v139
  %156 = vst [vmem:[%s3 + $0x18] sm:$0xf] %v140
  %157 = vst [vmem:[%s3 + $0x1c] sm:$0xf] %v141
  %158 = vst [vmem:[%s3 + $0x20] sm:$0xf] %v142
  %159 = vst [vmem:[%s3 + $0x24] sm:$0xf] %v143
  %160 = vst [vmem:[%s3 + $0x28] sm:$0xf] %v144
  %161 = vst [vmem:[%s3 + $0x2c] sm:$0xf] %v145
  %162 = vst [vmem:[%s3 + $0x30] sm:$0xf] %v146
  %163 = vst [vmem:[%s3 + $0x34] sm:$0xf] %v147
  %164 = vst [vmem:[%s3 + $0x38] sm:$0xf] %v148
  %165 = vst [vmem:[%s3 + $0x3c] sm:$0xf] %v149
  // Predicated region
  $region14: #{discriminator_forward.12} parent=0 // pred_check
    _
  $region15: #{discriminator_forward.12} parent=0 // pred_check_branch
    %167 = sbr.rel (0) target = $region17
  $region16: #{discriminator_forward.12} parent=0 // pred_region
    _
  $region17: #{discriminator_forward.12} parent=0 // pred_fallthru
    _
  // Predicated region
  $region18: #{discriminator_forward.12} parent=0 // pred_check
    _
  $region19: #{discriminator_forward.12} parent=0 // pred_check_branch
    %169 = sbr.rel (0) target = $region21
  $region20: #{discriminator_forward.12} parent=0 // pred_region
    _
  $region21: #{discriminator_forward.12} parent=0 // pred_fallthru
    _

// kernel: discriminator_forward.13
$region0: #{discriminator_forward.13}
  #allocation0 [shape = 'u32[]', space=smem, size = 0x4, offset = 0x4, fixed_abs, tag = 'smem constant byte address 0x4 - core index']
  #allocation1 [shape = 'u32[72,128]{1,0:T(1,128)}', space=vmem, size = 0x9000, scoped, tag = 'internal scratch']
  #allocation2 [shape = 'f32[32,128]{1,0:T(8,128)}', space=vmem, size = 0x4000, scoped, tag = 'scratch operand']
  %s0 = inlined_call_operand.vmem [shape: bf16[32,512], index: 0, kind: input, shape index: {}]
  %s1 = inlined_call_operand.vmem [shape: bf16[512,128], index: 1, kind: input, shape index: {}]
  %s2 = inlined_call_operand.vmem [shape: bf16[32,128], index: 2, kind: output, shape index: {0}]
  %s3 = inlined_call_operand.vmem [shape: f32[1,2,128], index: 3, kind: output, shape index: {1}]
  %4 = xla_tuple %s2, %s3
  %s5 = sld [smem:[#allocation0]]
  $region34: #{discriminator_forward.13} parent=0
    _
  %s7 = ssub.s32 1, %s5
  %s8 = scalar_select 0, %s7, %s5
  // Predicated region
  $region2: #{discriminator_forward.13} parent=0 // pred_check
    _
  $region3: #{discriminator_forward.13} parent=0 // pred_check_branch
    %10 = sbr.rel (0) target = $region5
  $region4: #{discriminator_forward.13} parent=0 // pred_region
    _
  $region5: #{discriminator_forward.13} parent=0 // pred_fallthru
    _
  // Predicated region
  $region6: #{discriminator_forward.13} parent=0 // pred_check
    _
  $region7: #{discriminator_forward.13} parent=0 // pred_check_branch
    %12 = sbr.rel (0) target = $region9
  $region8: #{discriminator_forward.13} parent=0 // pred_region
    _
  $region9: #{discriminator_forward.13} parent=0 // pred_fallthru
    _
  %p13 = scmp.eq.s32.totalorder 0, 0
  // Predicated region
  $region10: #{discriminator_forward.13} parent=0 // pred_check
    %p14 = pneg %p13
  $region11: #{discriminator_forward.13} parent=0 // pred_check_branch
    %16 = sbr.rel (%p14) target = $region13
  $region12: #{discriminator_forward.13} parent=0 // pred_region
    %17 = vst [vmem:[#allocation2] sm:$0xff] 0.0
    %18 = vst [vmem:[#allocation2 + $0x8] sm:$0xff] 0.0
    %19 = vst [vmem:[#allocation2 + $0x10] sm:$0xff] 0.0
    %20 = vst [vmem:[#allocation2 + $0x18] sm:$0xff] 0.0
  $region13: #{discriminator_forward.13} parent=0 // pred_fallthru
    _
  %v21 = vld [vmem:[#allocation2] sm:$0xff]
  %v22 = vld [vmem:[#allocation2 + $0x8] sm:$0xff]
  %v23 = vld [vmem:[#allocation2 + $0x10] sm:$0xff]
  %v24 = vld [vmem:[#allocation2 + $0x18] sm:$0xff]
  %v25 = vld [vmem:[%s0] sm:$0xff]
  %v26 = vld [vmem:[%s0 + $0x8] sm:$0xff]
  %v27 = vld [vmem:[%s0 + $0x10] sm:$0xff]
  %v28 = vld [vmem:[%s0 + $0x18] sm:$0xff]
  %v29 = vld [vmem:[%s0 + $0x20] sm:$0xff]
  %v30 = vld [vmem:[%s0 + $0x28] sm:$0xff]
  %v31 = vld [vmem:[%s0 + $0x30] sm:$0xff]
  %v32 = vld [vmem:[%s0 + $0x38] sm:$0xff]
  %v33 = vld [vmem:[%s1] sm:$0xf]
  %v34 = vld [vmem:[%s1 + $0x4] sm:$0xf]
  %v35 = vld [vmem:[%s1 + $0x8] sm:$0xf]
  %v36 = vld [vmem:[%s1 + $0xc] sm:$0xf]
  %v37 = vld [vmem:[%s1 + $0x10] sm:$0xf]
  %v38 = vld [vmem:[%s1 + $0x14] sm:$0xf]
  %v39 = vld [vmem:[%s1 + $0x18] sm:$0xf]
  %v40 = vld [vmem:[%s1 + $0x1c] sm:$0xf]
  %v41 = vld [vmem:[%s1 + $0x20] sm:$0xf]
  %v42 = vld [vmem:[%s1 + $0x24] sm:$0xf]
  %v43 = vld [vmem:[%s1 + $0x28] sm:$0xf]
  %v44 = vld [vmem:[%s1 + $0x2c] sm:$0xf]
  %v45 = vld [vmem:[%s1 + $0x30] sm:$0xf]
  %v46 = vld [vmem:[%s1 + $0x34] sm:$0xf]
  %v47 = vld [vmem:[%s1 + $0x38] sm:$0xf]
  %v48 = vld [vmem:[%s1 + $0x3c] sm:$0xf]
  %v49 = vld [vmem:[%s1 + $0x40] sm:$0xf]
  %v50 = vld [vmem:[%s1 + $0x44] sm:$0xf]
  %v51 = vld [vmem:[%s1 + $0x48] sm:$0xf]
  %v52 = vld [vmem:[%s1 + $0x4c] sm:$0xf]
  %v53 = vld [vmem:[%s1 + $0x50] sm:$0xf]
  %v54 = vld [vmem:[%s1 + $0x54] sm:$0xf]
  %v55 = vld [vmem:[%s1 + $0x58] sm:$0xf]
  %v56 = vld [vmem:[%s1 + $0x5c] sm:$0xf]
  %v57 = vld [vmem:[%s1 + $0x60] sm:$0xf]
  %v58 = vld [vmem:[%s1 + $0x64] sm:$0xf]
  %v59 = vld [vmem:[%s1 + $0x68] sm:$0xf]
  %v60 = vld [vmem:[%s1 + $0x6c] sm:$0xf]
  %v61 = vld [vmem:[%s1 + $0x70] sm:$0xf]
  %v62 = vld [vmem:[%s1 + $0x74] sm:$0xf]
  %v63 = vld [vmem:[%s1 + $0x78] sm:$0xf]
  %v64 = vld [vmem:[%s1 + $0x7c] sm:$0xf]
  %v65 = vld [vmem:[%s1 + $0x80] sm:$0xf]
  %v66 = vld [vmem:[%s1 + $0x84] sm:$0xf]
  %v67 = vld [vmem:[%s1 + $0x88] sm:$0xf]
  %v68 = vld [vmem:[%s1 + $0x8c] sm:$0xf]
  %v69 = vld [vmem:[%s1 + $0x90] sm:$0xf]
  %v70 = vld [vmem:[%s1 + $0x94] sm:$0xf]
  %v71 = vld [vmem:[%s1 + $0x98] sm:$0xf]
  %v72 = vld [vmem:[%s1 + $0x9c] sm:$0xf]
  %v73 = vld [vmem:[%s1 + $0xa0] sm:$0xf]
  %v74 = vld [vmem:[%s1 + $0xa4] sm:$0xf]
  %v75 = vld [vmem:[%s1 + $0xa8] sm:$0xf]
  %v76 = vld [vmem:[%s1 + $0xac] sm:$0xf]
  %v77 = vld [vmem:[%s1 + $0xb0] sm:$0xf]
  %v78 = vld [vmem:[%s1 + $0xb4] sm:$0xf]
  %v79 = vld [vmem:[%s1 + $0xb8] sm:$0xf]
  %v80 = vld [vmem:[%s1 + $0xbc] sm:$0xf]
  %v81 = vld [vmem:[%s1 + $0xc0] sm:$0xf]
  %v82 = vld [vmem:[%s1 + $0xc4] sm:$0xf]
  %v83 = vld [vmem:[%s1 + $0xc8] sm:$0xf]
  %v84 = vld [vmem:[%s1 + $0xcc] sm:$0xf]
  %v85 = vld [vmem:[%s1 + $0xd0] sm:$0xf]
  %v86 = vld [vmem:[%s1 + $0xd4] sm:$0xf]
  %v87 = vld [vmem:[%s1 + $0xd8] sm:$0xf]
  %v88 = vld [vmem:[%s1 + $0xdc] sm:$0xf]
  %v89 = vld [vmem:[%s1 + $0xe0] sm:$0xf]
  %v90 = vld [vmem:[%s1 + $0xe4] sm:$0xf]
  %v91 = vld [vmem:[%s1 + $0xe8] sm:$0xf]
  %v92 = vld [vmem:[%s1 + $0xec] sm:$0xf]
  %v93 = vld [vmem:[%s1 + $0xf0] sm:$0xf]
  %v94 = vld [vmem:[%s1 + $0xf4] sm:$0xf]
  %v95 = vld [vmem:[%s1 + $0xf8] sm:$0xf]
  %v96 = vld [vmem:[%s1 + $0xfc] sm:$0xf]
  %v105 = vunpack.c.l.b16 %v25
  %v106 = vunpack.c.h.b16 %v25
  %v107 = vunpack.c.l.b16 %v26
  %v108 = vunpack.c.h.b16 %v26
  %v109 = vunpack.c.l.b16 %v27
  %v110 = vunpack.c.h.b16 %v27
  %v111 = vunpack.c.l.b16 %v28
  %v112 = vunpack.c.h.b16 %v28
  %v113 = vunpack.c.l.b16 %v29
  %v114 = vunpack.c.h.b16 %v29
  %v115 = vunpack.c.l.b16 %v30
  %v116 = vunpack.c.h.b16 %v30
  %v117 = vunpack.c.l.b16 %v31
  %v118 = vunpack.c.h.b16 %v31
  %v119 = vunpack.c.l.b16 %v32
  %v120 = vunpack.c.h.b16 %v32
  %v121 = vpack.c.b16 %v109, %v105
  %v122 = vpack.c.b16 %v110, %v106
  %v123 = vpack.c.b16 %v111, %v107
  %v124 = vpack.c.b16 %v112, %v108
  %v125 = vpack.c.b16 %v117, %v113
  %v126 = vpack.c.b16 %v118, %v114
  %v127 = vpack.c.b16 %v119, %v115
  %v128 = vpack.c.b16 %v120, %v116
  %v201 = vunpack.c.l.b16 %v33
  %v202 = vunpack.c.l.b16 %v34
  %v203 = vunpack.c.l.b16 %v35
  %v204 = vunpack.c.l.b16 %v36
  %v205 = vunpack.c.l.b16 %v37
  %v206 = vunpack.c.l.b16 %v38
  %v207 = vunpack.c.l.b16 %v39
  %v208 = vunpack.c.l.b16 %v40
  %v209 = vunpack.c.l.b16 %v41
  %v210 = vunpack.c.l.b16 %v42
  %v211 = vunpack.c.l.b16 %v43
  %v212 = vunpack.c.l.b16 %v44
  %v213 = vunpack.c.l.b16 %v45
  %v214 = vunpack.c.l.b16 %v46
  %v215 = vunpack.c.l.b16 %v47
  %v216 = vunpack.c.l.b16 %v48
  %v217 = vunpack.c.l.b16 %v49
  %v218 = vunpack.c.l.b16 %v50
  %v219 = vunpack.c.l.b16 %v51
  %v220 = vunpack.c.l.b16 %v52
  %v221 = vunpack.c.l.b16 %v53
  %v222 = vunpack.c.l.b16 %v54
  %v223 = vunpack.c.l.b16 %v55
  %v224 = vunpack.c.l.b16 %v56
  %v225 = vunpack.c.l.b16 %v57
  %v226 = vunpack.c.l.b16 %v58
  %v227 = vunpack.c.l.b16 %v59
  %v228 = vunpack.c.l.b16 %v60
  %v229 = vunpack.c.l.b16 %v61
  %v230 = vunpack.c.l.b16 %v62
  %v231 = vunpack.c.l.b16 %v63
  %v232 = vunpack.c.l.b16 %v64
  %v233 = vunpack.c.l.b16 %v65
  %v234 = vunpack.c.l.b16 %v66
  %v235 = vunpack.c.l.b16 %v67
  %v236 = vunpack.c.l.b16 %v68
  %v237 = vunpack.c.l.b16 %v69
  %v238 = vunpack.c.l.b16 %v70
  %v239 = vunpack.c.l.b16 %v71
  %v240 = vunpack.c.l.b16 %v72
  %v241 = vunpack.c.l.b16 %v73
  %v242 = vunpack.c.l.b16 %v74
  %v243 = vunpack.c.l.b16 %v75
  %v244 = vunpack.c.l.b16 %v76
  %v245 = vunpack.c.l.b16 %v77
  %v246 = vunpack.c.l.b16 %v78
  %v247 = vunpack.c.l.b16 %v79
  %v248 = vunpack.c.l.b16 %v80
  %v249 = vunpack.c.l.b16 %v81
  %v250 = vunpack.c.l.b16 %v82
  %v251 = vunpack.c.l.b16 %v83
  %v252 = vunpack.c.l.b16 %v84
  %v253 = vunpack.c.l.b16 %v85
  %v254 = vunpack.c.l.b16 %v86
  %v255 = vunpack.c.l.b16 %v87
  %v256 = vunpack.c.l.b16 %v88
  %v257 = vunpack.c.l.b16 %v89
  %v258 = vunpack.c.l.b16 %v90
  %v259 = vunpack.c.l.b16 %v91
  %v260 = vunpack.c.l.b16 %v92
  %v261 = vunpack.c.l.b16 %v93
  %v262 = vunpack.c.l.b16 %v94
  %v263 = vunpack.c.l.b16 %v95
  %v264 = vunpack.c.l.b16 %v96
  %v265 = vpack.c.b16 %v202, %v201
  %v266 = vpack.c.b16 %v204, %v203
  %v267 = vpack.c.b16 %v206, %v205
  %v268 = vpack.c.b16 %v208, %v207
  %v269 = vpack.c.b16 %v210, %v209
  %v270 = vpack.c.b16 %v212, %v211
  %v271 = vpack.c.b16 %v214, %v213
  %v272 = vpack.c.b16 %v216, %v215
  %v273 = vpack.c.b16 %v218, %v217
  %v274 = vpack.c.b16 %v220, %v219
  %v275 = vpack.c.b16 %v222, %v221
  %v276 = vpack.c.b16 %v224, %v223
  %v277 = vpack.c.b16 %v226, %v225
  %v278 = vpack.c.b16 %v228, %v227
  %v279 = vpack.c.b16 %v230, %v229
  %v280 = vpack.c.b16 %v232, %v231
  %v281 = vpack.c.b16 %v234, %v233
  %v282 = vpack.c.b16 %v236, %v235
  %v283 = vpack.c.b16 %v238, %v237
  %v284 = vpack.c.b16 %v240, %v239
  %v285 = vpack.c.b16 %v242, %v241
  %v286 = vpack.c.b16 %v244, %v243
  %v287 = vpack.c.b16 %v246, %v245
  %v288 = vpack.c.b16 %v248, %v247
  %v289 = vpack.c.b16 %v250, %v249
  %v290 = vpack.c.b16 %v252, %v251
  %v291 = vpack.c.b16 %v254, %v253
  %v292 = vpack.c.b16 %v256, %v255
  %v293 = vpack.c.b16 %v258, %v257
  %v294 = vpack.c.b16 %v260, %v259
  %v295 = vpack.c.b16 %v262, %v261
  %v296 = vpack.c.b16 %v264, %v263
  %329 = vmatpush.bf16.msra.mxu0 %v272
  %330 = vmatpush.bf16.msra.mxu0 %v271
  %331 = vmatpush.bf16.msra.mxu0 %v270
  %332 = vmatpush.bf16.msra.mxu0 %v269
  %333 = vmatpush.bf16.msra.mxu0 %v268
  %334 = vmatpush.bf16.msra.mxu0 %v267
  %335 = vmatpush.bf16.msra.mxu0 %v266
  %336 = vmatpush.bf16.msra.mxu0 %v265
  %337 = vmatmul.bf16.gmra.mxu0 %v121
  %v338 = vpop.f32.mrf.mxu0
  %v339 = vadd.f32 0.0, %v338
  %v340 = vpop.f32.mrf.mxu0
  %v341 = vadd.f32 0.0, %v340
  %342 = vmatmul.bf16.gmra.mxu0 %v125
  %v343 = vpop.f32.mrf.mxu0
  %v344 = vadd.f32 0.0, %v343
  %v345 = vpop.f32.mrf.mxu0
  %v346 = vadd.f32 0.0, %v345
  %347 = vdwg.mxu0
  %348 = vmatpush.bf16.msra.mxu0 %v280
  %349 = vmatpush.bf16.msra.mxu0 %v279
  %350 = vmatpush.bf16.msra.mxu0 %v278
  %351 = vmatpush.bf16.msra.mxu0 %v277
  %352 = vmatpush.bf16.msra.mxu0 %v276
  %353 = vmatpush.bf16.msra.mxu0 %v275
  %354 = vmatpush.bf16.msra.mxu0 %v274
  %355 = vmatpush.bf16.msra.mxu0 %v273
  %356 = vmatmul.bf16.gmra.mxu0 %v122
  %v357 = vpop.f32.mrf.mxu0
  %v358 = vadd.f32 %v339, %v357
  %v359 = vpop.f32.mrf.mxu0
  %v360 = vadd.f32 %v341, %v359
  %361 = vmatmul.bf16.gmra.mxu0 %v126
  %v362 = vpop.f32.mrf.mxu0
  %v363 = vadd.f32 %v344, %v362
  %v364 = vpop.f32.mrf.mxu0
  %v365 = vadd.f32 %v346, %v364
  %366 = vdwg.mxu0
  %367 = vmatpush.bf16.msra.mxu0 %v288
  %368 = vmatpush.bf16.msra.mxu0 %v287
  %369 = vmatpush.bf16.msra.mxu0 %v286
  %370 = vmatpush.bf16.msra.mxu0 %v285
  %371 = vmatpush.bf16.msra.mxu0 %v284
  %372 = vmatpush.bf16.msra.mxu0 %v283
  %373 = vmatpush.bf16.msra.mxu0 %v282
  %374 = vmatpush.bf16.msra.mxu0 %v281
  %375 = vmatmul.bf16.gmra.mxu0 %v123
  %v376 = vpop.f32.mrf.mxu0
  %v377 = vadd.f32 %v358, %v376
  %v378 = vpop.f32.mrf.mxu0
  %v379 = vadd.f32 %v360, %v378
  %380 = vmatmul.bf16.gmra.mxu0 %v127
  %v381 = vpop.f32.mrf.mxu0
  %v382 = vadd.f32 %v363, %v381
  %v383 = vpop.f32.mrf.mxu0
  %v384 = vadd.f32 %v365, %v383
  %385 = vdwg.mxu0
  %386 = vmatpush.bf16.msra.mxu0 %v296
  %387 = vmatpush.bf16.msra.mxu0 %v295
  %388 = vmatpush.bf16.msra.mxu0 %v294
  %389 = vmatpush.bf16.msra.mxu0 %v293
  %390 = vmatpush.bf16.msra.mxu0 %v292
  %391 = vmatpush.bf16.msra.mxu0 %v291
  %392 = vmatpush.bf16.msra.mxu0 %v290
  %393 = vmatpush.bf16.msra.mxu0 %v289
  %394 = vmatmul.bf16.gmra.mxu0 %v124
  %v395 = vpop.f32.mrf.mxu0
  %v396 = vadd.f32 %v377, %v395
  %v397 = vpop.f32.mrf.mxu0
  %v398 = vadd.f32 %v379, %v397
  %399 = vmatmul.bf16.gmra.mxu0 %v128
  %v400 = vpop.f32.mrf.mxu0
  %v401 = vadd.f32 %v382, %v400
  %v402 = vpop.f32.mrf.mxu0
  %v403 = vadd.f32 %v384, %v402
  %404 = vdwg.mxu0
  %v405 = vadd.f32 %v21, %v396
  %v406 = vadd.f32 %v22, %v398
  %v407 = vadd.f32 %v23, %v401
  %v408 = vadd.f32 %v24, %v403
  %409 = vst [vmem:[#allocation2] sm:$0xff] %v405
  %410 = vst [vmem:[#allocation2 + $0x8] sm:$0xff] %v406
  %411 = vst [vmem:[#allocation2 + $0x10] sm:$0xff] %v407
  %412 = vst [vmem:[#allocation2 + $0x18] sm:$0xff] %v408
  // Predicated region
  $region14: #{discriminator_forward.13} parent=0 // pred_check
    %p413 = pneg %p13
  $region15: #{discriminator_forward.13} parent=0 // pred_check_branch
    %415 = sbr.rel (%p413) target = $region17
  $region16: #{discriminator_forward.13} parent=0 // pred_region
    %v416 = vld [vmem:[#allocation2] sm:$0xff]
    %v417 = vld [vmem:[#allocation2 + $0x8] sm:$0xff]
    %v418 = vld [vmem:[#allocation2 + $0x10] sm:$0xff]
    %v419 = vld [vmem:[#allocation2 + $0x18] sm:$0xff]
    %v420 = vpack.c.bf16 %v416, %v416
    %v421 = vpack.c.bf16 %v417, %v417
    %v422 = vpack.c.bf16 %v418, %v418
    %v423 = vpack.c.bf16 %v419, %v419
    %424 = vst [vmem:[%s2] sm:$0xf] %v420
    %425 = vst [vmem:[%s2 + $0x4] sm:$0xf] %v421
    %426 = vst [vmem:[%s2 + $0x8] sm:$0xf] %v422
    %427 = vst [vmem:[%s2 + $0xc] sm:$0xf] %v423
    %v428 = vadd.f32 %v416, %v417
    %v429 = vadd.f32 %v428, %v418
    %v430 = vadd.f32 %v429, %v419
    %v431 = vrot.slane %v430, 4
    %v432 = vadd.f32 %v430, %v431
    %v433 = vrot.slane %v432, 2
    %v434 = vadd.f32 %v432, %v433
    %v435 = vrot.slane %v434, 1
    %v436 = vadd.f32 %v434, %v435
    %v437 = vmul.f32 %v416, %v416
    %v438 = vmul.f32 %v417, %v417
    %v439 = vmul.f32 %v418, %v418
    %v440 = vmul.f32 %v419, %v419
    %v441 = vadd.f32 %v437, %v438
    %v442 = vadd.f32 %v441, %v439
    %v443 = vadd.f32 %v442, %v440
    %v444 = vrot.slane %v443, 4
    %v445 = vadd.f32 %v443, %v444
    %v446 = vrot.slane %v445, 2
    %v447 = vadd.f32 %v445, %v446
    %v448 = vrot.slane %v447, 1
    %v449 = vadd.f32 %v447, %v448
    %vm450 = vcmask 1040384
    %v451 = vsel %vm450, %v436, %v449
    %452 = vst [vmem:[%s3] sm:$0x3] %v451
  $region17: #{discriminator_forward.13} parent=0 // pred_fallthru
    _
  // Predicated region
  $region18: #{discriminator_forward.13} parent=0 // pred_check
    _
  $region19: #{discriminator_forward.13} parent=0 // pred_check_branch
    %454 = sbr.rel (0) target = $region21
  $region20: #{discriminator_forward.13} parent=0 // pred_region
    _
  $region21: #{discriminator_forward.13} parent=0 // pred_fallthru
    _
  // Predicated region
  $region22: #{discriminator_forward.13} parent=0 // pred_check
    _
  $region23: #{discriminator_forward.13} parent=0 // pred_check_branch
    %456 = sbr.rel (0) target = $region25
  $region24: #{discriminator_forward.13} parent=0 // pred_region
    _
  $region25: #{discriminator_forward.13} parent=0 // pred_fallthru
    _
  // Predicated region
  $region26: #{discriminator_forward.13} parent=0 // pred_check
    _
  $region27: #{discriminator_forward.13} parent=0 // pred_check_branch
    %458 = sbr.rel (0) target = $region29
  $region28: #{discriminator_forward.13} parent=0 // pred_region
    _
  $region29: #{discriminator_forward.13} parent=0 // pred_fallthru
    _
  // Predicated region
  $region30: #{discriminator_forward.13} parent=0 // pred_check
    _
  $region31: #{discriminator_forward.13} parent=0 // pred_check_branch
    %460 = sbr.rel (0) target = $region33
  $region32: #{discriminator_forward.13} parent=0 // pred_region
    _
  $region33: #{discriminator_forward.13} parent=0 // pred_fallthru
    _

// kernel: discriminator_forward.14
$region0: #{discriminator_forward.14}
  #allocation0 [shape = 'u32[]', space=smem, size = 0x4, offset = 0x4, fixed_abs, tag = 'smem constant byte address 0x4 - core index']
  #allocation1 [shape = 'u32[72,128]{1,0:T(1,128)}', space=vmem, size = 0x9000, scoped, tag = 'internal scratch']
  %s0 = inlined_call_operand.vmem [shape: bf16[32,128], index: 0, kind: input, shape index: {}]
  %s1 = inlined_call_operand.vmem [shape: f32[1,128], index: 1, kind: input, shape index: {}]
  %s2 = inlined_call_operand.vmem [shape: f32[1,128], index: 2, kind: input, shape index: {}]
  %s3 = inlined_call_operand.vmem [shape: bf16[32,128], index: 3, kind: output, shape index: {}]
  %s4 = sld [smem:[#allocation0]]
  $region22: #{discriminator_forward.14} parent=0
    _
  %s6 = ssub.s32 1, %s4
  %s7 = scalar_select 0, %s6, %s4
  // Predicated region
  $region2: #{discriminator_forward.14} parent=0 // pred_check
    _
  $region3: #{discriminator_forward.14} parent=0 // pred_check_branch
    %9 = sbr.rel (0) target = $region5
  $region4: #{discriminator_forward.14} parent=0 // pred_region
    _
  $region5: #{discriminator_forward.14} parent=0 // pred_fallthru
    _
  // Predicated region
  $region6: #{discriminator_forward.14} parent=0 // pred_check
    _
  $region7: #{discriminator_forward.14} parent=0 // pred_check_branch
    %11 = sbr.rel (0) target = $region9
  $region8: #{discriminator_forward.14} parent=0 // pred_region
    _
  $region9: #{discriminator_forward.14} parent=0 // pred_fallthru
    _
  // Predicated region
  $region10: #{discriminator_forward.14} parent=0 // pred_check
    _
  $region11: #{discriminator_forward.14} parent=0 // pred_check_branch
    %13 = sbr.rel (0) target = $region13
  $region12: #{discriminator_forward.14} parent=0 // pred_region
    _
  $region13: #{discriminator_forward.14} parent=0 // pred_fallthru
    _
  %v14 = vld [vmem:[%s0] sm:$0xf]
  %v15 = vld [vmem:[%s0 + $0x4] sm:$0xf]
  %v16 = vld [vmem:[%s0 + $0x8] sm:$0xf]
  %v17 = vld [vmem:[%s0 + $0xc] sm:$0xf]
  %v18 = vunpack.c.l.bf16 %v14
  %v19 = vunpack.c.l.bf16 %v15
  %v20 = vunpack.c.l.bf16 %v16
  %v21 = vunpack.c.l.bf16 %v17
  %v22 = vld [vmem:[%s1] sm:$0x1]
  %v24 = vperm.slane %v22, 0
  %v26 = vmul.f32 %v18, %v24
  %v27 = vmul.f32 %v19, %v24
  %v28 = vmul.f32 %v20, %v24
  %v29 = vmul.f32 %v21, %v24
  %v30 = vld [vmem:[%s2] sm:$0x1]
  %v32 = vperm.slane %v30, 0
  %v34 = vadd.f32 %v26, %v32
  %v35 = vadd.f32 %v27, %v32
  %v36 = vadd.f32 %v28, %v32
  %v37 = vadd.f32 %v29, %v32
  %vm38 = vcmp.ge.f32.partialorder %v34, 0.0
  %vm39 = vcmp.ge.f32.partialorder %v35, 0.0
  %vm40 = vcmp.ge.f32.partialorder %v36, 0.0
  %vm41 = vcmp.ge.f32.partialorder %v37, 0.0
  %v42 = vmul.f32 %v34, 0.2
  %v43 = vmul.f32 %v35, 0.2
  %v44 = vmul.f32 %v36, 0.2
  %v45 = vmul.f32 %v37, 0.2
  %v46 = vsel %vm38, %v34, %v42
  %v47 = vsel %vm39, %v35, %v43
  %v48 = vsel %vm40, %v36, %v44
  %v49 = vsel %vm41, %v37, %v45
  %v50 = vpack.c.bf16 %v46, %v46
  %v51 = vpack.c.bf16 %v47, %v47
  %v52 = vpack.c.bf16 %v48, %v48
  %v53 = vpack.c.bf16 %v49, %v49
  %54 = vst [vmem:[%s3] sm:$0xf] %v50
  %55 = vst [vmem:[%s3 + $0x4] sm:$0xf] %v51
  %56 = vst [vmem:[%s3 + $0x8] sm:$0xf] %v52
  %57 = vst [vmem:[%s3 + $0xc] sm:$0xf] %v53
  // Predicated region
  $region14: #{discriminator_forward.14} parent=0 // pred_check
    _
  $region15: #{discriminator_forward.14} parent=0 // pred_check_branch
    %59 = sbr.rel (0) target = $region17
  $region16: #{discriminator_forward.14} parent=0 // pred_region
    _
  $region17: #{discriminator_forward.14} parent=0 // pred_fallthru
    _
  // Predicated region
  $region18: #{discriminator_forward.14} parent=0 // pred_check
    _
  $region19: #{discriminator_forward.14} parent=0 // pred_check_branch
    %61 = sbr.rel (0) target = $region21
  $region20: #{discriminator_forward.14} parent=0 // pred_region
    _
  $region21: #{discriminator_forward.14} parent=0 // pred_fallthru
    _

// kernel: discriminator_forward.15
$region0: #{discriminator_forward.15}
  #allocation0 [shape = 'u32[]', space=smem, size = 0x4, offset = 0x4, fixed_abs, tag = 'smem constant byte address 0x4 - core index']
  #allocation1 [shape = 'u32[72,128]{1,0:T(1,128)}', space=vmem, size = 0x9000, scoped, tag = 'internal scratch']
  #allocation2 [shape = 'f32[1,1]{1,0:T(1,128)S(1)}', space=vmem, size = 0x200, scoped, tag = 'scoped memory for discriminator_forward.15']
  %s0 = inlined_call_operand.vmem [shape: bf16[2,1024], index: 0, kind: input, shape index: {}]
  %s1 = inlined_call_operand.vmem [shape: f32[1,1024], index: 1, kind: input, shape index: {}]
  %s2 = inlined_call_operand.<no memory space> [shape: f32[1,1], index: 2, kind: input, shape index: {}]
  %s3 = inlined_call_operand.vmem [shape: f32[2,1], index: 3, kind: output, shape index: {}]
  %s4 = sld [smem:[#allocation0]]
  $region22: #{discriminator_forward.15} parent=0
    _
  %s6 = ssub.s32 1, %s4
  %s7 = scalar_select 0, %s6, %s4
  %v8 = vstv %s2
  %9 = vst [vmem:[#allocation2] sm:$0x1] %v8
  // Predicated region
  $region2: #{discriminator_forward.15} parent=0 // pred_check
    _
  $region3: #{discriminator_forward.15} parent=0 // pred_check_branch
    %11 = sbr.rel (0) target = $region5
  $region4: #{discriminator_forward.15} parent=0 // pred_region
    _
  $region5: #{discriminator_forward.15} parent=0 // pred_fallthru
    _
  // Predicated region
  $region6: #{discriminator_forward.15} parent=0 // pred_check
    _
  $region7: #{discriminator_forward.15} parent=0 // pred_check_branch
    %13 = sbr.rel (0) target = $region9
  $region8: #{discriminator_forward.15} parent=0 // pred_region
    _
  $region9: #{discriminator_forward.15} parent=0 // pred_fallthru
    _
  // Predicated region
  $region10: #{discriminator_forward.15} parent=0 // pred_check
    _
  $region11: #{discriminator_forward.15} parent=0 // pred_check_branch
    %15 = sbr.rel (0) target = $region13
  $region12: #{discriminator_forward.15} parent=0 // pred_region
    _
  $region13: #{discriminator_forward.15} parent=0 // pred_fallthru
    _
  %v16 = vld [vmem:[%s0] sm:$0xff]
  %v17 = vunpack.c.l.bf16 %v16
  %v18 = vunpack.c.h.bf16 %v16
  %v19 = vld [vmem:[%s1] sm:$0xff]
  %v21 = vperm.slane %v19, 0
  %v22 = vperm.slane %v19, 1
  %v23 = vperm.slane %v19, 2
  %v24 = vperm.slane %v19, 3
  %v25 = vperm.slane %v19, 4
  %v26 = vperm.slane %v19, 5
  %v27 = vperm.slane %v19, 6
  %v28 = vperm.slane %v19, 7
  %v29 = vrot.slane %v22, 6
  %v30 = vrot.slane %v23, 4
  %v31 = vrot.slane %v24, 2
  %v32 = vrot.slane %v26, 6
  %v33 = vrot.slane %v27, 4
  %v34 = vrot.slane %v28, 2
  %vm35 = vcmask 1041408
  %v36 = vsel %vm35, %v21, %v29
  %vm37 = vcmask 1045508
  %v38 = vsel %vm37, %v30, %v31
  %vm39 = vcmask 1043456
  %v40 = vsel %vm39, %v36, %v38
  %v41 = vsel %vm35, %v25, %v32
  %v42 = vsel %vm37, %v33, %v34
  %v43 = vsel %vm39, %v41, %v42
  %v46 = vmul.f32 %v17, %v40
  %v47 = vmul.f32 %v18, %v43
  %50 = vst [vmem:[#allocation1] ss:$4 sm:$0xff] %v46
  %s51 = scalar_lea.vmem [#allocation1], 32
  %52 = vst [vmem:[%s51] ss:$4 sm:$0xff] %v47
  %v53 = vld.sshfl [vmem:[#allocation1] sm:$0xff pattern:$0x73625140]
  %v54 = vld.sshfl [vmem:[#allocation1 + $0x8] sm:$0xff pattern:$0x73625140]
  %v55 = vld.sshfl [vmem:[#allocation1 + $0x10] sm:$0xff pattern:$0x73625140]
  %v56 = vld.sshfl [vmem:[#allocation1 + $0x18] sm:$0xff pattern:$0x73625140]
  %v57 = vld.sshfl [vmem:[#allocation1 + $0x20] sm:$0xff pattern:$0x73625140]
  %v58 = vld.sshfl [vmem:[#allocation1 + $0x28] sm:$0xff pattern:$0x73625140]
  %v59 = vld.sshfl [vmem:[#allocation1 + $0x30] sm:$0xff pattern:$0x73625140]
  %v60 = vld.sshfl [vmem:[#allocation1 + $0x38] sm:$0xff pattern:$0x73625140]
  %v69 = vsel %vm35, %v53, 0.0
  %v70 = vsel %vm35, %v54, 0.0
  %v71 = vadd.f32 %v69, %v70
  %v72 = vsel %vm35, %v55, 0.0
  %v73 = vadd.f32 %v71, %v72
  %v74 = vsel %vm35, %v56, 0.0
  %v75 = vadd.f32 %v73, %v74
  %v76 = vsel %vm35, %v57, 0.0
  %v77 = vadd.f32 %v75, %v76
  %v78 = vsel %vm35, %v58, 0.0
  %v79 = vadd.f32 %v77, %v78
  %v80 = vsel %vm35, %v59, 0.0
  %v81 = vadd.f32 %v79, %v80
  %v82 = vsel %vm35, %v60, 0.0
  %v83 = vadd.f32 %v81, %v82
  %84 = vadd.xlane.f32.xlu0 %v83
  %v85 = vpop.xlane.xlu0 %84
  %v86 = vld [vmem:[#allocation2] sm:$0x1]
  %v88 = vperm.slane %v86, 0
  %v90 = vadd.f32 %v85, %v88
  %vm91 = vcmask 1024
  %92 = vst.msk [vmem:[%s3] sm:$0x3] %vm91, %v90
  // Predicated region
  $region14: #{discriminator_forward.15} parent=0 // pred_check
    _
  $region15: #{discriminator_forward.15} parent=0 // pred_check_branch
    %94 = sbr.rel (0) target = $region17
  $region16: #{discriminator_forward.15} parent=0 // pred_region
    _
  $region17: #{discriminator_forward.15} parent=0 // pred_fallthru
    _
  // Predicated region
  $region18: #{discriminator_forward.15} parent=0 // pred_check
    _
  $region19: #{discriminator_forward.15} parent=0 // pred_check_branch
    %96 = sbr.rel (0) target = $region21
  $region20: #{discriminator_forward.15} parent=0 // pred_region
    _
  $region21: #{discriminator_forward.15} parent=0 // pred_fallthru
    _

</llo_original>
